<compile_context>
chip_gen: v6e
topology: v6e:2x2x1
jax: 0.10.0
libtpu: 0.0.40
codegen_flags: <defaults>
</compile_context>

<pallas_src>
import jax
import jax.numpy as jnp
from jax.experimental import pallas as pl
from jax.experimental.pallas import tpu as pltpu


def _round_up(x, m):
    return (x + m - 1) // m * m


def attn_decoder_kernel(
    # inputs (all whole-array resident in VMEM)
    emb_ref,    # (T, Hp)        bf16  pre-gathered embedding rows
    h0_ref,     # (1, Hp)        f32   initial hidden
    enc_ref,    # (Lp, Hp)       bf16  encoder outputs (zero-padded)
    we_ref,     # (Hp, Lp+Hp)    bf16  [attn_w emb-half | combine_w emb-half]
    wh_ref,     # (Hp, Lp+3Hp)   bf16  [attn_w hid-half | W_hh r | z | n]
    cwa_ref,    # (Hp, Hp)       bf16  combine_w, attn_applied half
    wih_ref,    # (Hp, 3Hp)      bf16  GRU W_ih, gates 128-lane aligned (r|z|n)
    ow_ref,     # (Hp, Vp)       bf16  output projection
    ab_ref,     # (1, Lp)        f32   attn bias, pad lanes = -1e30 (mask folded)
    cb_ref,     # (1, Hp)        f32
    bih_ref,    # (1, 3Hp)       f32   gate-aligned, pad lanes 0
    bhh_ref,    # (1, 3Hp)       f32
    ob_ref,     # (1, Vp)        f32   out bias, pad lanes = -1e30 (mask folded)
    # output
    out_ref,    # (T, Vp+Hp+Lp)  f32   [log_probs | hidden | attn_weights] per row
):
    t_steps = emb_ref.shape[0]
    hp = h0_ref.shape[1]
    lp = ab_ref.shape[1]
    vp = ob_ref.shape[1]
    bf16 = jnp.bfloat16
    f32 = jnp.float32

    enc = enc_ref[...]
    we = we_ref[...]
    wh = wh_ref[...]
    cwa = cwa_ref[...]
    wih = wih_ref[...]
    ow = ow_ref[...]
    ab = ab_ref[...]
    cb = cb_ref[...]
    bih = bih_ref[...]
    bhh = bhh_ref[...]
    ob = ob_ref[...]

    h = h0_ref[...]                                     # f32, carried across steps

    for t in range(t_steps):                            # fully unrolled (small T)
        emb = emb_ref[t:t + 1, :]                       # (1, Hp) bf16; dropout = identity (eval)
        h16 = h.astype(bf16)

        # Two fused shared-operand matmuls (bf16 operands, f32 accumulation).
        eW = jnp.dot(emb, we, preferred_element_type=f32)    # (1, Lp+Hp)
        hW = jnp.dot(h16, wh, preferred_element_type=f32)    # (1, Lp+3Hp)

        # attn_weights = softmax(attn(cat(embedded, hidden)));
        # pad-lane mask (-1e30) is pre-folded into ab -> padded weights are exactly 0.
        attn_logits = eW[:, :lp] + hW[:, :lp] + ab
        m1 = jnp.max(attn_logits, axis=1, keepdims=True)
        e1 = jnp.exp(attn_logits - m1)
        attn_w = e1 / jnp.sum(e1, axis=1, keepdims=True)     # exact divide

        # attn_applied = bmm(attn_weights, encoder_outputs)
        attn_applied = jnp.dot(attn_w.astype(bf16), enc, preferred_element_type=f32)

        # output = relu(attn_combine(cat(embedded, attn_applied)))  (concat-free)
        x = jnp.maximum(
            eW[:, lp:]
            + jnp.dot(attn_applied.astype(bf16), cwa, preferred_element_type=f32)
            + cb,
            0.0,
        )

        # GRU cell, PyTorch gate order (r, z, n); gate slices 128-lane aligned.
        gi = jnp.dot(x.astype(bf16), wih, preferred_element_type=f32) + bih
        gh = hW[:, lp:] + bhh
        r = jax.nn.sigmoid(gi[:, :hp] + gh[:, :hp])
        z = jax.nn.sigmoid(gi[:, hp:2 * hp] + gh[:, hp:2 * hp])
        n = jnp.tanh(gi[:, 2 * hp:] + r * gh[:, 2 * hp:])
        h = (1.0 - z) * n + z * h                       # pad lanes stay 0 (zero bias pads)

        # output = log_softmax(out(gru_output)); pad mask pre-folded into ob.
        logits = jnp.dot(h.astype(bf16), ow, preferred_element_type=f32) + ob
        m2 = jnp.max(logits, axis=1, keepdims=True)
        lse = m2 + jnp.log(jnp.sum(jnp.exp(logits - m2), axis=1, keepdims=True))

        # One coalesced, lane-dense output row per step: [logp | hidden | attn_w].
        out_ref[t:t + 1, 0:vp] = logits - lse
        out_ref[t:t + 1, vp:vp + hp] = h
        out_ref[t:t + 1, vp + hp:] = attn_w


def _prepare_inputs(params, hidden, encoder_outputs, tokens, H, L, V, Hp, Lp, Vp):
    """Gather / transpose / split / fuse / zero-pad torch-layout params."""
    f32, bf16 = jnp.float32, jnp.bfloat16

    def pad(x, rows, cols):
        out = jnp.zeros((rows, cols), f32)
        return out.at[:x.shape[0], :x.shape[1]].set(x.astype(f32))

    aw, cw = params["attn_w"], params["comb_w"]          # torch (out, in) layout
    awe = pad(aw[:, :H].T, Hp, Lp)                       # embedded-half, transposed
    awh = pad(aw[:, H:].T, Hp, Lp)                       # hidden-half
    cwe = pad(cw[:, :H].T, Hp, Hp)
    cwa = pad(cw[:, H:].T, Hp, Hp)

    def gru_w(w):                                        # (3H, H) -> (Hp, 3Hp), gate-aligned
        out = jnp.zeros((Hp, 3 * Hp), f32)
        for g in range(3):
            out = out.at[:H, g * Hp:g * Hp + H].set(w[g * H:(g + 1) * H, :].T.astype(f32))
        return out

    def gru_b(b):                                        # (3H,) -> (1, 3Hp)
        out = jnp.zeros((1, 3 * Hp), f32)
        for g in range(3):
            out = out.at[0, g * Hp:g * Hp + H].set(b[g * H:(g + 1) * H].astype(f32))
        return out

    # Fold the lane padding masks into the biases (hoisted out of the kernel).
    ab = pad(params["attn_b"][None, :], 1, Lp)
    ab = jnp.where(jnp.arange(Lp)[None, :] < L, ab, -1e30)
    ob = pad(params["out_b"][None, :], 1, Vp)
    ob = jnp.where(jnp.arange(Vp)[None, :] < V, ob, -1e30)

    emb_rows = pad(params["emb"][tokens], tokens.shape[0], Hp)   # host-side gather

    return dict(
        emb=emb_rows.astype(bf16),
        h0=pad(hidden.reshape(1, H), 1, Hp),
        enc=pad(encoder_outputs, Lp, Hp).astype(bf16),
        we=jnp.concatenate([awe, cwe], axis=1).astype(bf16),          # (Hp, Lp+Hp)
        wh=jnp.concatenate([awh, gru_w(params["gru_whh"])], axis=1).astype(bf16),
        cwa=cwa.astype(bf16),
        wih=gru_w(params["gru_wih"]).astype(bf16),
        ow=pad(params["out_w"].T, Hp, Vp).astype(bf16),
        ab=ab,
        cb=pad(params["comb_b"][None, :], 1, Hp),
        bih=gru_b(params["gru_bih"]),
        bhh=gru_b(params["gru_bhh"]),
        ob=ob,
    )


def attn_decoder_decode(tokens, hidden, encoder_outputs, params):
    """Runs T decoder steps (teacher-forced tokens) inside one pallas_call.

    tokens: int32[T]; hidden: (1, 1, H); encoder_outputs: (L, H).
    Returns (log_probs (T, V), hiddens (T, H), attn_weights (T, L)); step t uses
    hiddens[t-1] (or `hidden` for t=0) — same per-step semantics as calling the
    PyTorch module's forward T times in eval mode.
    """
    H = hidden.shape[-1]
    L = encoder_outputs.shape[0]
    V = params["emb"].shape[0]
    T = tokens.shape[0]
    Hp, Lp, Vp = (_round_up(d, 128) for d in (H, L, V))

    p = _prepare_inputs(params, hidden, encoder_outputs, tokens.astype(jnp.int32),
                        H, L, V, Hp, Lp, Vp)

    args = (p["emb"], p["h0"], p["enc"], p["we"], p["wh"], p["cwa"], p["wih"],
            p["ow"], p["ab"], p["cb"], p["bih"], p["bhh"], p["ob"])

    # Everything (weights ~0.3 MiB bf16 at toy size) is whole-array resident in
    # VMEM; for production sizes tile the Vp output projection with a grid axis
    # and set pltpu.CompilerParams(vmem_limit_bytes=...).
    vmem = pl.BlockSpec(memory_space=pltpu.MemorySpace.VMEM)
    out = pl.pallas_call(
        attn_decoder_kernel,
        out_shape=jax.ShapeDtypeStruct((T, Vp + Hp + Lp), jnp.float32),
        in_specs=[vmem] * len(args),
        out_specs=vmem,
    )(*args)

    return out[:, :V], out[:, Vp:Vp + H], out[:, Vp + Hp:Vp + Hp + L]


def reference_decode(tokens, hidden, encoder_outputs, params):
    """Pure-JAX f32 reference: T sequential evaluations of the PyTorch forward (eval)."""
    H = hidden.shape[-1]
    h = hidden.reshape(1, H)
    logps, hids, attns = [], [], []
    for i in range(tokens.shape[0]):
        embedded = params["emb"][tokens[i]][None, :]
        cat1 = jnp.concatenate([embedded, h], axis=1)
        attn_w = jax.nn.softmax(cat1 @ params["attn_w"].T + params["attn_b"], axis=1)
        attn_applied = attn_w @ encoder_outputs
        cat2 = jnp.concatenate([embedded, attn_applied], axis=1)
        x = jax.nn.relu(cat2 @ params["comb_w"].T + params["comb_b"])
        gi = x @ params["gru_wih"].T + params["gru_bih"]
        gh = h @ params["gru_whh"].T + params["gru_bhh"]
        r = jax.nn.sigmoid(gi[:, :H] + gh[:, :H])
        z = jax.nn.sigmoid(gi[:, H:2 * H] + gh[:, H:2 * H])
        n = jnp.tanh(gi[:, 2 * H:] + r * gh[:, 2 * H:])
        h = (1.0 - z) * n + z * h
        logp = jax.nn.log_softmax(h @ params["out_w"].T + params["out_b"], axis=1)
        logps.append(logp); hids.append(h); attns.append(attn_w)
    return (jnp.concatenate(logps, 0), jnp.concatenate(hids, 0),
            jnp.concatenate(attns, 0))


def make_params(key, hidden_size, output_size, max_length):
    """Parameters in PyTorch layout: Linear (out, in), GRU (3H, H) [r; z; n]."""
    H, V, L = hidden_size, output_size, max_length
    ks = jax.random.split(key, 11)
    s = 0.1
    return {
        "emb":     jax.random.normal(ks[0], (V, H), jnp.float32) * s,
        "attn_w":  jax.random.normal(ks[1], (L, 2 * H), jnp.float32) * s,
        "attn_b":  jax.random.normal(ks[2], (L,), jnp.float32) * s,
        "comb_w":  jax.random.normal(ks[3], (H, 2 * H), jnp.float32) * s,
        "comb_b":  jax.random.normal(ks[4], (H,), jnp.float32) * s,
        "gru_wih": jax.random.normal(ks[5], (3 * H, H), jnp.float32) * s,
        "gru_whh": jax.random.normal(ks[6], (3 * H, H), jnp.float32) * s,
        "gru_bih": jax.random.normal(ks[7], (3 * H,), jnp.float32) * s,
        "gru_bhh": jax.random.normal(ks[8], (3 * H,), jnp.float32) * s,
        "out_w":   jax.random.normal(ks[9], (V, H), jnp.float32) * s,
        "out_b":   jax.random.normal(ks[10], (V,), jnp.float32) * s,
    }


if __name__ == "__main__":
    hidden_size = 32
    output_size = 64
    max_length = 100    # MAX_LENGTH default in the module
    num_steps = 6       # decode steps folded into one kernel launch

    key = jax.random.PRNGKey(0)
    kp, kh, ke, kt = jax.random.split(key, 4)
    params = make_params(kp, hidden_size, output_size, max_length)
    tokens = jax.random.randint(kt, (num_steps,), 0, output_size, dtype=jnp.int32)
    hidden = jax.random.normal(kh, (1, 1, hidden_size), jnp.float32)
    encoder_outputs = jax.random.normal(ke, (max_length, hidden_size), jnp.float32)

    # TODO(synk): training-mode dropout (random mask via pltpu.prng_*) omitted; eval mode only.
    logp, hid, attnw = attn_decoder_decode(tokens, hidden, encoder_outputs, params)
    jax.block_until_ready((logp, hid, attnw))

    rlogp, rhid, rattn = reference_decode(tokens, hidden, encoder_outputs, params)
    # Tolerances account for bf16 MXU operands (per perf review); elementwise math is f32.
    assert jnp.allclose(attnw, rattn, atol=5e-3), "attn weights mismatch"
    assert jnp.allclose(hid, rhid, atol=2e-2), "hidden mismatch"
    assert jnp.allclose(logp, rlogp, atol=2e-2), "log-probs mismatch"

    print("KERNEL_OK")
</pallas_src>

<mosaic_0001>
module attributes {stable_mosaic.version = 11 : i64} {
  func.func @attn_decoder_kernel(%arg0: memref<6x128xbf16, #tpu.memory_space<vmem>>, %arg1: memref<1x128xf32, #tpu.memory_space<vmem>>, %arg2: memref<128x128xbf16, #tpu.memory_space<vmem>>, %arg3: memref<128x256xbf16, #tpu.memory_space<vmem>>, %arg4: memref<128x512xbf16, #tpu.memory_space<vmem>>, %arg5: memref<128x128xbf16, #tpu.memory_space<vmem>>, %arg6: memref<128x384xbf16, #tpu.memory_space<vmem>>, %arg7: memref<128x128xbf16, #tpu.memory_space<vmem>>, %arg8: memref<1x128xf32, #tpu.memory_space<vmem>>, %arg9: memref<1x128xf32, #tpu.memory_space<vmem>>, %arg10: memref<1x384xf32, #tpu.memory_space<vmem>>, %arg11: memref<1x384xf32, #tpu.memory_space<vmem>>, %arg12: memref<1x128xf32, #tpu.memory_space<vmem>>, %arg13: memref<6x384xf32, #tpu.memory_space<vmem>>) attributes {dimension_semantics = [], scalar_prefetch = 0 : i64, scratch_operands = 0 : i64, tpu.core_type = #tpu.core_type<tc>} {
    %c0 = arith.constant 0 : index
    %c0_0 = arith.constant 0 : index
    %0 = vector.load %arg2[%c0, %c0_0] : memref<128x128xbf16, #tpu.memory_space<vmem>>, vector<128x128xbf16>
    %c0_1 = arith.constant 0 : index
    %c0_2 = arith.constant 0 : index
    %1 = vector.load %arg3[%c0_1, %c0_2] : memref<128x256xbf16, #tpu.memory_space<vmem>>, vector<128x256xbf16>
    %c0_3 = arith.constant 0 : index
    %c0_4 = arith.constant 0 : index
    %2 = vector.load %arg4[%c0_3, %c0_4] : memref<128x512xbf16, #tpu.memory_space<vmem>>, vector<128x512xbf16>
    %c0_5 = arith.constant 0 : index
    %c0_6 = arith.constant 0 : index
    %3 = vector.load %arg5[%c0_5, %c0_6] : memref<128x128xbf16, #tpu.memory_space<vmem>>, vector<128x128xbf16>
    %c0_7 = arith.constant 0 : index
    %c0_8 = arith.constant 0 : index
    %4 = vector.load %arg6[%c0_7, %c0_8] : memref<128x384xbf16, #tpu.memory_space<vmem>>, vector<128x384xbf16>
    %c0_9 = arith.constant 0 : index
    %c0_10 = arith.constant 0 : index
    %5 = vector.load %arg7[%c0_9, %c0_10] : memref<128x128xbf16, #tpu.memory_space<vmem>>, vector<128x128xbf16>
    %c0_11 = arith.constant 0 : index
    %c0_12 = arith.constant 0 : index
    %6 = vector.load %arg8[%c0_11, %c0_12] : memref<1x128xf32, #tpu.memory_space<vmem>>, vector<1x128xf32>
    %c0_13 = arith.constant 0 : index
    %c0_14 = arith.constant 0 : index
    %7 = vector.load %arg9[%c0_13, %c0_14] : memref<1x128xf32, #tpu.memory_space<vmem>>, vector<1x128xf32>
    %c0_15 = arith.constant 0 : index
    %c0_16 = arith.constant 0 : index
    %8 = vector.load %arg10[%c0_15, %c0_16] : memref<1x384xf32, #tpu.memory_space<vmem>>, vector<1x384xf32>
    %c0_17 = arith.constant 0 : index
    %c0_18 = arith.constant 0 : index
    %9 = vector.load %arg11[%c0_17, %c0_18] : memref<1x384xf32, #tpu.memory_space<vmem>>, vector<1x384xf32>
    %c0_19 = arith.constant 0 : index
    %c0_20 = arith.constant 0 : index
    %10 = vector.load %arg12[%c0_19, %c0_20] : memref<1x128xf32, #tpu.memory_space<vmem>>, vector<1x128xf32>
    %c0_21 = arith.constant 0 : index
    %c0_22 = arith.constant 0 : index
    %11 = vector.load %arg1[%c0_21, %c0_22] : memref<1x128xf32, #tpu.memory_space<vmem>>, vector<1x128xf32>
    %c0_23 = arith.constant 0 : index
    %c0_24 = arith.constant 0 : index
    %12 = vector.load %arg0[%c0_23, %c0_24] : memref<6x128xbf16, #tpu.memory_space<vmem>>, vector<1x128xbf16>
    %13 = arith.truncf %11 : vector<1x128xf32> to vector<1x128xbf16>
    %cst = arith.constant dense<0.000000e+00> : vector<1x256xf32>
    %14 = tpu.matmul %12, %1, %cst {dimension_numbers = #tpu.dot_dimension_numbers<[1], [0], [0], [1], [0, 0, 1, 1], [], []>} : vector<1x128xbf16>, vector<128x256xbf16>, vector<1x256xf32> -> vector<1x256xf32>
    %cst_25 = arith.constant dense<0.000000e+00> : vector<1x512xf32>
    %15 = tpu.matmul %13, %2, %cst_25 {dimension_numbers = #tpu.dot_dimension_numbers<[1], [0], [0], [1], [0, 0, 1, 1], [], []>} : vector<1x128xbf16>, vector<128x512xbf16>, vector<1x512xf32> -> vector<1x512xf32>
    %16 = vector.extract_strided_slice %14 {offsets = [0, 0], sizes = [1, 128], strides = [1, 1]} : vector<1x256xf32> to vector<1x128xf32>
    %17 = vector.extract_strided_slice %15 {offsets = [0, 0], sizes = [1, 128], strides = [1, 1]} : vector<1x512xf32> to vector<1x128xf32>
    %18 = arith.addf %16, %17 : vector<1x128xf32>
    %19 = arith.addf %18, %6 : vector<1x128xf32>
    %cst_26 = arith.constant dense<0xFF800000> : vector<1xf32>
    %20 = vector.multi_reduction <maximumf>, %19, %cst_26 [1] : vector<1x128xf32> to vector<1xf32>
    %21 = vector.shape_cast %20 : vector<1xf32> to vector<1x1xf32>
    %22 = vector.broadcast %21 : vector<1x1xf32> to vector<1x128xf32>
    %23 = arith.subf %19, %22 : vector<1x128xf32>
    %24 = math.exp %23 : vector<1x128xf32>
    %cst_27 = arith.constant dense<0.000000e+00> : vector<1xf32>
    %25 = vector.multi_reduction <add>, %24, %cst_27 [1] : vector<1x128xf32> to vector<1xf32>
    %26 = vector.shape_cast %25 : vector<1xf32> to vector<1x1xf32>
    %27 = vector.broadcast %26 : vector<1x1xf32> to vector<1x128xf32>
    %28 = arith.divf %24, %27 : vector<1x128xf32>
    %29 = arith.truncf %28 : vector<1x128xf32> to vector<1x128xbf16>
    %cst_28 = arith.constant dense<0.000000e+00> : vector<1x128xf32>
    %30 = tpu.matmul %29, %0, %cst_28 {dimension_numbers = #tpu.dot_dimension_numbers<[1], [0], [0], [1], [0, 0, 1, 1], [], []>} : vector<1x128xbf16>, vector<128x128xbf16>, vector<1x128xf32> -> vector<1x128xf32>
    %31 = vector.extract_strided_slice %14 {offsets = [0, 128], sizes = [1, 128], strides = [1, 1]} : vector<1x256xf32> to vector<1x128xf32>
    %32 = arith.truncf %30 : vector<1x128xf32> to vector<1x128xbf16>
    %cst_29 = arith.constant dense<0.000000e+00> : vector<1x128xf32>
    %33 = tpu.matmul %32, %3, %cst_29 {dimension_numbers = #tpu.dot_dimension_numbers<[1], [0], [0], [1], [0, 0, 1, 1], [], []>} : vector<1x128xbf16>, vector<128x128xbf16>, vector<1x128xf32> -> vector<1x128xf32>
    %34 = arith.addf %31, %33 : vector<1x128xf32>
    %35 = arith.addf %34, %7 : vector<1x128xf32>
    %cst_30 = arith.constant 0.000000e+00 : f32
    %36 = vector.broadcast %cst_30 : f32 to vector<1x128xf32>
    %37 = arith.maximumf %35, %36 : vector<1x128xf32>
    %38 = arith.truncf %37 : vector<1x128xf32> to vector<1x128xbf16>
    %cst_31 = arith.constant dense<0.000000e+00> : vector<1x384xf32>
    %39 = tpu.matmul %38, %4, %cst_31 {dimension_numbers = #tpu.dot_dimension_numbers<[1], [0], [0], [1], [0, 0, 1, 1], [], []>} : vector<1x128xbf16>, vector<128x384xbf16>, vector<1x384xf32> -> vector<1x384xf32>
    %40 = arith.addf %39, %8 : vector<1x384xf32>
    %41 = vector.extract_strided_slice %15 {offsets = [0, 128], sizes = [1, 384], strides = [1, 1]} : vector<1x512xf32> to vector<1x384xf32>
    %42 = arith.addf %41, %9 : vector<1x384xf32>
    %43 = vector.extract_strided_slice %40 {offsets = [0, 0], sizes = [1, 128], strides = [1, 1]} : vector<1x384xf32> to vector<1x128xf32>
    %44 = vector.extract_strided_slice %42 {offsets = [0, 0], sizes = [1, 128], strides = [1, 1]} : vector<1x384xf32> to vector<1x128xf32>
    %45 = arith.addf %43, %44 : vector<1x128xf32>
    %46 = arith.negf %45 : vector<1x128xf32>
    %47 = math.exp %46 : vector<1x128xf32>
    %cst_32 = arith.constant 1.000000e+00 : f32
    %48 = vector.broadcast %cst_32 : f32 to vector<1x128xf32>
    %49 = arith.addf %48, %47 : vector<1x128xf32>
    %50 = arith.divf %48, %49 : vector<1x128xf32>
    %51 = vector.extract_strided_slice %40 {offsets = [0, 128], sizes = [1, 128], strides = [1, 1]} : vector<1x384xf32> to vector<1x128xf32>
    %52 = vector.extract_strided_slice %42 {offsets = [0, 128], sizes = [1, 128], strides = [1, 1]} : vector<1x384xf32> to vector<1x128xf32>
    %53 = arith.addf %51, %52 : vector<1x128xf32>
    %54 = arith.negf %53 : vector<1x128xf32>
    %55 = math.exp %54 : vector<1x128xf32>
    %cst_33 = arith.constant 1.000000e+00 : f32
    %56 = vector.broadcast %cst_33 : f32 to vector<1x128xf32>
    %57 = arith.addf %56, %55 : vector<1x128xf32>
    %58 = arith.divf %56, %57 : vector<1x128xf32>
    %59 = vector.extract_strided_slice %40 {offsets = [0, 256], sizes = [1, 128], strides = [1, 1]} : vector<1x384xf32> to vector<1x128xf32>
    %60 = vector.extract_strided_slice %42 {offsets = [0, 256], sizes = [1, 128], strides = [1, 1]} : vector<1x384xf32> to vector<1x128xf32>
    %61 = arith.mulf %50, %60 : vector<1x128xf32>
    %62 = arith.addf %59, %61 : vector<1x128xf32>
    %63 = math.tanh %62 : vector<1x128xf32>
    %cst_34 = arith.constant 1.000000e+00 : f32
    %64 = vector.broadcast %cst_34 : f32 to vector<1x128xf32>
    %65 = arith.subf %64, %58 : vector<1x128xf32>
    %66 = arith.mulf %65, %63 : vector<1x128xf32>
    %67 = arith.mulf %58, %11 : vector<1x128xf32>
    %68 = arith.addf %66, %67 : vector<1x128xf32>
    %69 = arith.truncf %68 : vector<1x128xf32> to vector<1x128xbf16>
    %cst_35 = arith.constant dense<0.000000e+00> : vector<1x128xf32>
    %70 = tpu.matmul %69, %5, %cst_35 {dimension_numbers = #tpu.dot_dimension_numbers<[1], [0], [0], [1], [0, 0, 1, 1], [], []>} : vector<1x128xbf16>, vector<128x128xbf16>, vector<1x128xf32> -> vector<1x128xf32>
    %71 = arith.addf %70, %10 : vector<1x128xf32>
    %cst_36 = arith.constant dense<0xFF800000> : vector<1xf32>
    %72 = vector.multi_reduction <maximumf>, %71, %cst_36 [1] : vector<1x128xf32> to vector<1xf32>
    %73 = vector.shape_cast %72 : vector<1xf32> to vector<1x1xf32>
    %74 = vector.broadcast %73 : vector<1x1xf32> to vector<1x128xf32>
    %75 = arith.subf %71, %74 : vector<1x128xf32>
    %76 = math.exp %75 : vector<1x128xf32>
    %cst_37 = arith.constant dense<0.000000e+00> : vector<1xf32>
    %77 = vector.multi_reduction <add>, %76, %cst_37 [1] : vector<1x128xf32> to vector<1xf32>
    %78 = vector.shape_cast %77 : vector<1xf32> to vector<1x1xf32>
    %79 = math.log %78 : vector<1x1xf32>
    %80 = arith.addf %73, %79 : vector<1x1xf32>
    %81 = vector.broadcast %80 : vector<1x1xf32> to vector<1x128xf32>
    %82 = arith.subf %71, %81 : vector<1x128xf32>
    %c0_38 = arith.constant 0 : index
    %c0_39 = arith.constant 0 : index
    %83 = vector.load %arg13[%c0_38, %c0_39] : memref<6x384xf32, #tpu.memory_space<vmem>>, vector<1x128xf32>
    tpu.vector_store %arg13[%c0_38, %c0_39], %82 {strides = array<i32>} : memref<6x384xf32, #tpu.memory_space<vmem>>, vector<1x128xf32>,
    %c0_40 = arith.constant 0 : index
    %c128 = arith.constant 128 : index
    %84 = vector.load %arg13[%c0_40, %c128] : memref<6x384xf32, #tpu.memory_space<vmem>>, vector<1x128xf32>
    tpu.vector_store %arg13[%c0_40, %c128], %68 {strides = array<i32>} : memref<6x384xf32, #tpu.memory_space<vmem>>, vector<1x128xf32>,
    %c0_41 = arith.constant 0 : index
    %c256 = arith.constant 256 : index
    %85 = vector.load %arg13[%c0_41, %c256] : memref<6x384xf32, #tpu.memory_space<vmem>>, vector<1x128xf32>
    tpu.vector_store %arg13[%c0_41, %c256], %28 {strides = array<i32>} : memref<6x384xf32, #tpu.memory_space<vmem>>, vector<1x128xf32>,
    %c1 = arith.constant 1 : index
    %c0_42 = arith.constant 0 : index
    %86 = vector.load %arg0[%c1, %c0_42] : memref<6x128xbf16, #tpu.memory_space<vmem>>, vector<1x128xbf16>
    %87 = arith.truncf %68 : vector<1x128xf32> to vector<1x128xbf16>
    %cst_43 = arith.constant dense<0.000000e+00> : vector<1x256xf32>
    %88 = tpu.matmul %86, %1, %cst_43 {dimension_numbers = #tpu.dot_dimension_numbers<[1], [0], [0], [1], [0, 0, 1, 1], [], []>} : vector<1x128xbf16>, vector<128x256xbf16>, vector<1x256xf32> -> vector<1x256xf32>
    %cst_44 = arith.constant dense<0.000000e+00> : vector<1x512xf32>
    %89 = tpu.matmul %87, %2, %cst_44 {dimension_numbers = #tpu.dot_dimension_numbers<[1], [0], [0], [1], [0, 0, 1, 1], [], []>} : vector<1x128xbf16>, vector<128x512xbf16>, vector<1x512xf32> -> vector<1x512xf32>
    %90 = vector.extract_strided_slice %88 {offsets = [0, 0], sizes = [1, 128], strides = [1, 1]} : vector<1x256xf32> to vector<1x128xf32>
    %91 = vector.extract_strided_slice %89 {offsets = [0, 0], sizes = [1, 128], strides = [1, 1]} : vector<1x512xf32> to vector<1x128xf32>
    %92 = arith.addf %90, %91 : vector<1x128xf32>
    %93 = arith.addf %92, %6 : vector<1x128xf32>
    %cst_45 = arith.constant dense<0xFF800000> : vector<1xf32>
    %94 = vector.multi_reduction <maximumf>, %93, %cst_45 [1] : vector<1x128xf32> to vector<1xf32>
    %95 = vector.shape_cast %94 : vector<1xf32> to vector<1x1xf32>
    %96 = vector.broadcast %95 : vector<1x1xf32> to vector<1x128xf32>
    %97 = arith.subf %93, %96 : vector<1x128xf32>
    %98 = math.exp %97 : vector<1x128xf32>
    %cst_46 = arith.constant dense<0.000000e+00> : vector<1xf32>
    %99 = vector.multi_reduction <add>, %98, %cst_46 [1] : vector<1x128xf32> to vector<1xf32>
    %100 = vector.shape_cast %99 : vector<1xf32> to vector<1x1xf32>
    %101 = vector.broadcast %100 : vector<1x1xf32> to vector<1x128xf32>
    %102 = arith.divf %98, %101 : vector<1x128xf32>
    %103 = arith.truncf %102 : vector<1x128xf32> to vector<1x128xbf16>
    %cst_47 = arith.constant dense<0.000000e+00> : vector<1x128xf32>
    %104 = tpu.matmul %103, %0, %cst_47 {dimension_numbers = #tpu.dot_dimension_numbers<[1], [0], [0], [1], [0, 0, 1, 1], [], []>} : vector<1x128xbf16>, vector<128x128xbf16>, vector<1x128xf32> -> vector<1x128xf32>
    %105 = vector.extract_strided_slice %88 {offsets = [0, 128], sizes = [1, 128], strides = [1, 1]} : vector<1x256xf32> to vector<1x128xf32>
    %106 = arith.truncf %104 : vector<1x128xf32> to vector<1x128xbf16>
    %cst_48 = arith.constant dense<0.000000e+00> : vector<1x128xf32>
    %107 = tpu.matmul %106, %3, %cst_48 {dimension_numbers = #tpu.dot_dimension_numbers<[1], [0], [0], [1], [0, 0, 1, 1], [], []>} : vector<1x128xbf16>, vector<128x128xbf16>, vector<1x128xf32> -> vector<1x128xf32>
    %108 = arith.addf %105, %107 : vector<1x128xf32>
    %109 = arith.addf %108, %7 : vector<1x128xf32>
    %cst_49 = arith.constant 0.000000e+00 : f32
    %110 = vector.broadcast %cst_49 : f32 to vector<1x128xf32>
    %111 = arith.maximumf %109, %110 : vector<1x128xf32>
    %112 = arith.truncf %111 : vector<1x128xf32> to vector<1x128xbf16>
    %cst_50 = arith.constant dense<0.000000e+00> : vector<1x384xf32>
    %113 = tpu.matmul %112, %4, %cst_50 {dimension_numbers = #tpu.dot_dimension_numbers<[1], [0], [0], [1], [0, 0, 1, 1], [], []>} : vector<1x128xbf16>, vector<128x384xbf16>, vector<1x384xf32> -> vector<1x384xf32>
    %114 = arith.addf %113, %8 : vector<1x384xf32>
    %115 = vector.extract_strided_slice %89 {offsets = [0, 128], sizes = [1, 384], strides = [1, 1]} : vector<1x512xf32> to vector<1x384xf32>
    %116 = arith.addf %115, %9 : vector<1x384xf32>
    %117 = vector.extract_strided_slice %114 {offsets = [0, 0], sizes = [1, 128], strides = [1, 1]} : vector<1x384xf32> to vector<1x128xf32>
    %118 = vector.extract_strided_slice %116 {offsets = [0, 0], sizes = [1, 128], strides = [1, 1]} : vector<1x384xf32> to vector<1x128xf32>
    %119 = arith.addf %117, %118 : vector<1x128xf32>
    %120 = arith.negf %119 : vector<1x128xf32>
    %121 = math.exp %120 : vector<1x128xf32>
    %cst_51 = arith.constant 1.000000e+00 : f32
    %122 = vector.broadcast %cst_51 : f32 to vector<1x128xf32>
    %123 = arith.addf %122, %121 : vector<1x128xf32>
    %124 = arith.divf %122, %123 : vector<1x128xf32>
    %125 = vector.extract_strided_slice %114 {offsets = [0, 128], sizes = [1, 128], strides = [1, 1]} : vector<1x384xf32> to vector<1x128xf32>
    %126 = vector.extract_strided_slice %116 {offsets = [0, 128], sizes = [1, 128], strides = [1, 1]} : vector<1x384xf32> to vector<1x128xf32>
    %127 = arith.addf %125, %126 : vector<1x128xf32>
    %128 = arith.negf %127 : vector<1x128xf32>
    %129 = math.exp %128 : vector<1x128xf32>
    %cst_52 = arith.constant 1.000000e+00 : f32
    %130 = vector.broadcast %cst_52 : f32 to vector<1x128xf32>
    %131 = arith.addf %130, %129 : vector<1x128xf32>
    %132 = arith.divf %130, %131 : vector<1x128xf32>
    %133 = vector.extract_strided_slice %114 {offsets = [0, 256], sizes = [1, 128], strides = [1, 1]} : vector<1x384xf32> to vector<1x128xf32>
    %134 = vector.extract_strided_slice %116 {offsets = [0, 256], sizes = [1, 128], strides = [1, 1]} : vector<1x384xf32> to vector<1x128xf32>
    %135 = arith.mulf %124, %134 : vector<1x128xf32>
    %136 = arith.addf %133, %135 : vector<1x128xf32>
    %137 = math.tanh %136 : vector<1x128xf32>
    %cst_53 = arith.constant 1.000000e+00 : f32
    %138 = vector.broadcast %cst_53 : f32 to vector<1x128xf32>
    %139 = arith.subf %138, %132 : vector<1x128xf32>
    %140 = arith.mulf %139, %137 : vector<1x128xf32>
    %141 = arith.mulf %132, %68 : vector<1x128xf32>
    %142 = arith.addf %140, %141 : vector<1x128xf32>
    %143 = arith.truncf %142 : vector<1x128xf32> to vector<1x128xbf16>
    %cst_54 = arith.constant dense<0.000000e+00> : vector<1x128xf32>
    %144 = tpu.matmul %143, %5, %cst_54 {dimension_numbers = #tpu.dot_dimension_numbers<[1], [0], [0], [1], [0, 0, 1, 1], [], []>} : vector<1x128xbf16>, vector<128x128xbf16>, vector<1x128xf32> -> vector<1x128xf32>
    %145 = arith.addf %144, %10 : vector<1x128xf32>
    %cst_55 = arith.constant dense<0xFF800000> : vector<1xf32>
    %146 = vector.multi_reduction <maximumf>, %145, %cst_55 [1] : vector<1x128xf32> to vector<1xf32>
    %147 = vector.shape_cast %146 : vector<1xf32> to vector<1x1xf32>
    %148 = vector.broadcast %147 : vector<1x1xf32> to vector<1x128xf32>
    %149 = arith.subf %145, %148 : vector<1x128xf32>
    %150 = math.exp %149 : vector<1x128xf32>
    %cst_56 = arith.constant dense<0.000000e+00> : vector<1xf32>
    %151 = vector.multi_reduction <add>, %150, %cst_56 [1] : vector<1x128xf32> to vector<1xf32>
    %152 = vector.shape_cast %151 : vector<1xf32> to vector<1x1xf32>
    %153 = math.log %152 : vector<1x1xf32>
    %154 = arith.addf %147, %153 : vector<1x1xf32>
    %155 = vector.broadcast %154 : vector<1x1xf32> to vector<1x128xf32>
    %156 = arith.subf %145, %155 : vector<1x128xf32>
    %c1_57 = arith.constant 1 : index
    %c0_58 = arith.constant 0 : index
    %157 = vector.load %arg13[%c1_57, %c0_58] : memref<6x384xf32, #tpu.memory_space<vmem>>, vector<1x128xf32>
    tpu.vector_store %arg13[%c1_57, %c0_58], %156 {strides = array<i32>} : memref<6x384xf32, #tpu.memory_space<vmem>>, vector<1x128xf32>,
    %c1_59 = arith.constant 1 : index
    %c128_60 = arith.constant 128 : index
    %158 = vector.load %arg13[%c1_59, %c128_60] : memref<6x384xf32, #tpu.memory_space<vmem>>, vector<1x128xf32>
    tpu.vector_store %arg13[%c1_59, %c128_60], %142 {strides = array<i32>} : memref<6x384xf32, #tpu.memory_space<vmem>>, vector<1x128xf32>,
    %c1_61 = arith.constant 1 : index
    %c256_62 = arith.constant 256 : index
    %159 = vector.load %arg13[%c1_61, %c256_62] : memref<6x384xf32, #tpu.memory_space<vmem>>, vector<1x128xf32>
    tpu.vector_store %arg13[%c1_61, %c256_62], %102 {strides = array<i32>} : memref<6x384xf32, #tpu.memory_space<vmem>>, vector<1x128xf32>,
    %c2 = arith.constant 2 : index
    %c0_63 = arith.constant 0 : index
    %160 = vector.load %arg0[%c2, %c0_63] : memref<6x128xbf16, #tpu.memory_space<vmem>>, vector<1x128xbf16>
    %161 = arith.truncf %142 : vector<1x128xf32> to vector<1x128xbf16>
    %cst_64 = arith.constant dense<0.000000e+00> : vector<1x256xf32>
    %162 = tpu.matmul %160, %1, %cst_64 {dimension_numbers = #tpu.dot_dimension_numbers<[1], [0], [0], [1], [0, 0, 1, 1], [], []>} : vector<1x128xbf16>, vector<128x256xbf16>, vector<1x256xf32> -> vector<1x256xf32>
    %cst_65 = arith.constant dense<0.000000e+00> : vector<1x512xf32>
    %163 = tpu.matmul %161, %2, %cst_65 {dimension_numbers = #tpu.dot_dimension_numbers<[1], [0], [0], [1], [0, 0, 1, 1], [], []>} : vector<1x128xbf16>, vector<128x512xbf16>, vector<1x512xf32> -> vector<1x512xf32>
    %164 = vector.extract_strided_slice %162 {offsets = [0, 0], sizes = [1, 128], strides = [1, 1]} : vector<1x256xf32> to vector<1x128xf32>
    %165 = vector.extract_strided_slice %163 {offsets = [0, 0], sizes = [1, 128], strides = [1, 1]} : vector<1x512xf32> to vector<1x128xf32>
    %166 = arith.addf %164, %165 : vector<1x128xf32>
    %167 = arith.addf %166, %6 : vector<1x128xf32>
    %cst_66 = arith.constant dense<0xFF800000> : vector<1xf32>
    %168 = vector.multi_reduction <maximumf>, %167, %cst_66 [1] : vector<1x128xf32> to vector<1xf32>
    %169 = vector.shape_cast %168 : vector<1xf32> to vector<1x1xf32>
    %170 = vector.broadcast %169 : vector<1x1xf32> to vector<1x128xf32>
    %171 = arith.subf %167, %170 : vector<1x128xf32>
    %172 = math.exp %171 : vector<1x128xf32>
    %cst_67 = arith.constant dense<0.000000e+00> : vector<1xf32>
    %173 = vector.multi_reduction <add>, %172, %cst_67 [1] : vector<1x128xf32> to vector<1xf32>
    %174 = vector.shape_cast %173 : vector<1xf32> to vector<1x1xf32>
    %175 = vector.broadcast %174 : vector<1x1xf32> to vector<1x128xf32>
    %176 = arith.divf %172, %175 : vector<1x128xf32>
    %177 = arith.truncf %176 : vector<1x128xf32> to vector<1x128xbf16>
    %cst_68 = arith.constant dense<0.000000e+00> : vector<1x128xf32>
    %178 = tpu.matmul %177, %0, %cst_68 {dimension_numbers = #tpu.dot_dimension_numbers<[1], [0], [0], [1], [0, 0, 1, 1], [], []>} : vector<1x128xbf16>, vector<128x128xbf16>, vector<1x128xf32> -> vector<1x128xf32>
    %179 = vector.extract_strided_slice %162 {offsets = [0, 128], sizes = [1, 128], strides = [1, 1]} : vector<1x256xf32> to vector<1x128xf32>
    %180 = arith.truncf %178 : vector<1x128xf32> to vector<1x128xbf16>
    %cst_69 = arith.constant dense<0.000000e+00> : vector<1x128xf32>
    %181 = tpu.matmul %180, %3, %cst_69 {dimension_numbers = #tpu.dot_dimension_numbers<[1], [0], [0], [1], [0, 0, 1, 1], [], []>} : vector<1x128xbf16>, vector<128x128xbf16>, vector<1x128xf32> -> vector<1x128xf32>
    %182 = arith.addf %179, %181 : vector<1x128xf32>
    %183 = arith.addf %182, %7 : vector<1x128xf32>
    %cst_70 = arith.constant 0.000000e+00 : f32
    %184 = vector.broadcast %cst_70 : f32 to vector<1x128xf32>
    %185 = arith.maximumf %183, %184 : vector<1x128xf32>
    %186 = arith.truncf %185 : vector<1x128xf32> to vector<1x128xbf16>
    %cst_71 = arith.constant dense<0.000000e+00> : vector<1x384xf32>
    %187 = tpu.matmul %186, %4, %cst_71 {dimension_numbers = #tpu.dot_dimension_numbers<[1], [0], [0], [1], [0, 0, 1, 1], [], []>} : vector<1x128xbf16>, vector<128x384xbf16>, vector<1x384xf32> -> vector<1x384xf32>
    %188 = arith.addf %187, %8 : vector<1x384xf32>
    %189 = vector.extract_strided_slice %163 {offsets = [0, 128], sizes = [1, 384], strides = [1, 1]} : vector<1x512xf32> to vector<1x384xf32>
    %190 = arith.addf %189, %9 : vector<1x384xf32>
    %191 = vector.extract_strided_slice %188 {offsets = [0, 0], sizes = [1, 128], strides = [1, 1]} : vector<1x384xf32> to vector<1x128xf32>
    %192 = vector.extract_strided_slice %190 {offsets = [0, 0], sizes = [1, 128], strides = [1, 1]} : vector<1x384xf32> to vector<1x128xf32>
    %193 = arith.addf %191, %192 : vector<1x128xf32>
    %194 = arith.negf %193 : vector<1x128xf32>
    %195 = math.exp %194 : vector<1x128xf32>
    %cst_72 = arith.constant 1.000000e+00 : f32
    %196 = vector.broadcast %cst_72 : f32 to vector<1x128xf32>
    %197 = arith.addf %196, %195 : vector<1x128xf32>
    %198 = arith.divf %196, %197 : vector<1x128xf32>
    %199 = vector.extract_strided_slice %188 {offsets = [0, 128], sizes = [1, 128], strides = [1, 1]} : vector<1x384xf32> to vector<1x128xf32>
    %200 = vector.extract_strided_slice %190 {offsets = [0, 128], sizes = [1, 128], strides = [1, 1]} : vector<1x384xf32> to vector<1x128xf32>
    %201 = arith.addf %199, %200 : vector<1x128xf32>
    %202 = arith.negf %201 : vector<1x128xf32>
    %203 = math.exp %202 : vector<1x128xf32>
    %cst_73 = arith.constant 1.000000e+00 : f32
    %204 = vector.broadcast %cst_73 : f32 to vector<1x128xf32>
    %205 = arith.addf %204, %203 : vector<1x128xf32>
    %206 = arith.divf %204, %205 : vector<1x128xf32>
    %207 = vector.extract_strided_slice %188 {offsets = [0, 256], sizes = [1, 128], strides = [1, 1]} : vector<1x384xf32> to vector<1x128xf32>
    %208 = vector.extract_strided_slice %190 {offsets = [0, 256], sizes = [1, 128], strides = [1, 1]} : vector<1x384xf32> to vector<1x128xf32>
    %209 = arith.mulf %198, %208 : vector<1x128xf32>
    %210 = arith.addf %207, %209 : vector<1x128xf32>
    %211 = math.tanh %210 : vector<1x128xf32>
    %cst_74 = arith.constant 1.000000e+00 : f32
    %212 = vector.broadcast %cst_74 : f32 to vector<1x128xf32>
    %213 = arith.subf %212, %206 : vector<1x128xf32>
    %214 = arith.mulf %213, %211 : vector<1x128xf32>
    %215 = arith.mulf %206, %142 : vector<1x128xf32>
    %216 = arith.addf %214, %215 : vector<1x128xf32>
    %217 = arith.truncf %216 : vector<1x128xf32> to vector<1x128xbf16>
    %cst_75 = arith.constant dense<0.000000e+00> : vector<1x128xf32>
    %218 = tpu.matmul %217, %5, %cst_75 {dimension_numbers = #tpu.dot_dimension_numbers<[1], [0], [0], [1], [0, 0, 1, 1], [], []>} : vector<1x128xbf16>, vector<128x128xbf16>, vector<1x128xf32> -> vector<1x128xf32>
    %219 = arith.addf %218, %10 : vector<1x128xf32>
    %cst_76 = arith.constant dense<0xFF800000> : vector<1xf32>
    %220 = vector.multi_reduction <maximumf>, %219, %cst_76 [1] : vector<1x128xf32> to vector<1xf32>
    %221 = vector.shape_cast %220 : vector<1xf32> to vector<1x1xf32>
    %222 = vector.broadcast %221 : vector<1x1xf32> to vector<1x128xf32>
    %223 = arith.subf %219, %222 : vector<1x128xf32>
    %224 = math.exp %223 : vector<1x128xf32>
    %cst_77 = arith.constant dense<0.000000e+00> : vector<1xf32>
    %225 = vector.multi_reduction <add>, %224, %cst_77 [1] : vector<1x128xf32> to vector<1xf32>
    %226 = vector.shape_cast %225 : vector<1xf32> to vector<1x1xf32>
    %227 = math.log %226 : vector<1x1xf32>
    %228 = arith.addf %221, %227 : vector<1x1xf32>
    %229 = vector.broadcast %228 : vector<1x1xf32> to vector<1x128xf32>
    %230 = arith.subf %219, %229 : vector<1x128xf32>
    %c2_78 = arith.constant 2 : index
    %c0_79 = arith.constant 0 : index
    %231 = vector.load %arg13[%c2_78, %c0_79] : memref<6x384xf32, #tpu.memory_space<vmem>>, vector<1x128xf32>
    tpu.vector_store %arg13[%c2_78, %c0_79], %230 {strides = array<i32>} : memref<6x384xf32, #tpu.memory_space<vmem>>, vector<1x128xf32>,
    %c2_80 = arith.constant 2 : index
    %c128_81 = arith.constant 128 : index
    %232 = vector.load %arg13[%c2_80, %c128_81] : memref<6x384xf32, #tpu.memory_space<vmem>>, vector<1x128xf32>
    tpu.vector_store %arg13[%c2_80, %c128_81], %216 {strides = array<i32>} : memref<6x384xf32, #tpu.memory_space<vmem>>, vector<1x128xf32>,
    %c2_82 = arith.constant 2 : index
    %c256_83 = arith.constant 256 : index
    %233 = vector.load %arg13[%c2_82, %c256_83] : memref<6x384xf32, #tpu.memory_space<vmem>>, vector<1x128xf32>
    tpu.vector_store %arg13[%c2_82, %c256_83], %176 {strides = array<i32>} : memref<6x384xf32, #tpu.memory_space<vmem>>, vector<1x128xf32>,
    %c3 = arith.constant 3 : index
    %c0_84 = arith.constant 0 : index
    %234 = vector.load %arg0[%c3, %c0_84] : memref<6x128xbf16, #tpu.memory_space<vmem>>, vector<1x128xbf16>
    %235 = arith.truncf %216 : vector<1x128xf32> to vector<1x128xbf16>
    %cst_85 = arith.constant dense<0.000000e+00> : vector<1x256xf32>
    %236 = tpu.matmul %234, %1, %cst_85 {dimension_numbers = #tpu.dot_dimension_numbers<[1], [0], [0], [1], [0, 0, 1, 1], [], []>} : vector<1x128xbf16>, vector<128x256xbf16>, vector<1x256xf32> -> vector<1x256xf32>
    %cst_86 = arith.constant dense<0.000000e+00> : vector<1x512xf32>
    %237 = tpu.matmul %235, %2, %cst_86 {dimension_numbers = #tpu.dot_dimension_numbers<[1], [0], [0], [1], [0, 0, 1, 1], [], []>} : vector<1x128xbf16>, vector<128x512xbf16>, vector<1x512xf32> -> vector<1x512xf32>
    %238 = vector.extract_strided_slice %236 {offsets = [0, 0], sizes = [1, 128], strides = [1, 1]} : vector<1x256xf32> to vector<1x128xf32>
    %239 = vector.extract_strided_slice %237 {offsets = [0, 0], sizes = [1, 128], strides = [1, 1]} : vector<1x512xf32> to vector<1x128xf32>
    %240 = arith.addf %238, %239 : vector<1x128xf32>
    %241 = arith.addf %240, %6 : vector<1x128xf32>
    %cst_87 = arith.constant dense<0xFF800000> : vector<1xf32>
    %242 = vector.multi_reduction <maximumf>, %241, %cst_87 [1] : vector<1x128xf32> to vector<1xf32>
    %243 = vector.shape_cast %242 : vector<1xf32> to vector<1x1xf32>
    %244 = vector.broadcast %243 : vector<1x1xf32> to vector<1x128xf32>
    %245 = arith.subf %241, %244 : vector<1x128xf32>
    %246 = math.exp %245 : vector<1x128xf32>
    %cst_88 = arith.constant dense<0.000000e+00> : vector<1xf32>
    %247 = vector.multi_reduction <add>, %246, %cst_88 [1] : vector<1x128xf32> to vector<1xf32>
    %248 = vector.shape_cast %247 : vector<1xf32> to vector<1x1xf32>
    %249 = vector.broadcast %248 : vector<1x1xf32> to vector<1x128xf32>
    %250 = arith.divf %246, %249 : vector<1x128xf32>
    %251 = arith.truncf %250 : vector<1x128xf32> to vector<1x128xbf16>
    %cst_89 = arith.constant dense<0.000000e+00> : vector<1x128xf32>
    %252 = tpu.matmul %251, %0, %cst_89 {dimension_numbers = #tpu.dot_dimension_numbers<[1], [0], [0], [1], [0, 0, 1, 1], [], []>} : vector<1x128xbf16>, vector<128x128xbf16>, vector<1x128xf32> -> vector<1x128xf32>
    %253 = vector.extract_strided_slice %236 {offsets = [0, 128], sizes = [1, 128], strides = [1, 1]} : vector<1x256xf32> to vector<1x128xf32>
    %254 = arith.truncf %252 : vector<1x128xf32> to vector<1x128xbf16>
    %cst_90 = arith.constant dense<0.000000e+00> : vector<1x128xf32>
    %255 = tpu.matmul %254, %3, %cst_90 {dimension_numbers = #tpu.dot_dimension_numbers<[1], [0], [0], [1], [0, 0, 1, 1], [], []>} : vector<1x128xbf16>, vector<128x128xbf16>, vector<1x128xf32> -> vector<1x128xf32>
    %256 = arith.addf %253, %255 : vector<1x128xf32>
    %257 = arith.addf %256, %7 : vector<1x128xf32>
    %cst_91 = arith.constant 0.000000e+00 : f32
    %258 = vector.broadcast %cst_91 : f32 to vector<1x128xf32>
    %259 = arith.maximumf %257, %258 : vector<1x128xf32>
    %260 = arith.truncf %259 : vector<1x128xf32> to vector<1x128xbf16>
    %cst_92 = arith.constant dense<0.000000e+00> : vector<1x384xf32>
    %261 = tpu.matmul %260, %4, %cst_92 {dimension_numbers = #tpu.dot_dimension_numbers<[1], [0], [0], [1], [0, 0, 1, 1], [], []>} : vector<1x128xbf16>, vector<128x384xbf16>, vector<1x384xf32> -> vector<1x384xf32>
    %262 = arith.addf %261, %8 : vector<1x384xf32>
    %263 = vector.extract_strided_slice %237 {offsets = [0, 128], sizes = [1, 384], strides = [1, 1]} : vector<1x512xf32> to vector<1x384xf32>
    %264 = arith.addf %263, %9 : vector<1x384xf32>
    %265 = vector.extract_strided_slice %262 {offsets = [0, 0], sizes = [1, 128], strides = [1, 1]} : vector<1x384xf32> to vector<1x128xf32>
    %266 = vector.extract_strided_slice %264 {offsets = [0, 0], sizes = [1, 128], strides = [1, 1]} : vector<1x384xf32> to vector<1x128xf32>
    %267 = arith.addf %265, %266 : vector<1x128xf32>
    %268 = arith.negf %267 : vector<1x128xf32>
    %269 = math.exp %268 : vector<1x128xf32>
    %cst_93 = arith.constant 1.000000e+00 : f32
    %270 = vector.broadcast %cst_93 : f32 to vector<1x128xf32>
    %271 = arith.addf %270, %269 : vector<1x128xf32>
    %272 = arith.divf %270, %271 : vector<1x128xf32>
    %273 = vector.extract_strided_slice %262 {offsets = [0, 128], sizes = [1, 128], strides = [1, 1]} : vector<1x384xf32> to vector<1x128xf32>
    %274 = vector.extract_strided_slice %264 {offsets = [0, 128], sizes = [1, 128], strides = [1, 1]} : vector<1x384xf32> to vector<1x128xf32>
    %275 = arith.addf %273, %274 : vector<1x128xf32>
    %276 = arith.negf %275 : vector<1x128xf32>
    %277 = math.exp %276 : vector<1x128xf32>
    %cst_94 = arith.constant 1.000000e+00 : f32
    %278 = vector.broadcast %cst_94 : f32 to vector<1x128xf32>
    %279 = arith.addf %278, %277 : vector<1x128xf32>
    %280 = arith.divf %278, %279 : vector<1x128xf32>
    %281 = vector.extract_strided_slice %262 {offsets = [0, 256], sizes = [1, 128], strides = [1, 1]} : vector<1x384xf32> to vector<1x128xf32>
    %282 = vector.extract_strided_slice %264 {offsets = [0, 256], sizes = [1, 128], strides = [1, 1]} : vector<1x384xf32> to vector<1x128xf32>
    %283 = arith.mulf %272, %282 : vector<1x128xf32>
    %284 = arith.addf %281, %283 : vector<1x128xf32>
    %285 = math.tanh %284 : vector<1x128xf32>
    %cst_95 = arith.constant 1.000000e+00 : f32
    %286 = vector.broadcast %cst_95 : f32 to vector<1x128xf32>
    %287 = arith.subf %286, %280 : vector<1x128xf32>
    %288 = arith.mulf %287, %285 : vector<1x128xf32>
    %289 = arith.mulf %280, %216 : vector<1x128xf32>
    %290 = arith.addf %288, %289 : vector<1x128xf32>
    %291 = arith.truncf %290 : vector<1x128xf32> to vector<1x128xbf16>
    %cst_96 = arith.constant dense<0.000000e+00> : vector<1x128xf32>
    %292 = tpu.matmul %291, %5, %cst_96 {dimension_numbers = #tpu.dot_dimension_numbers<[1], [0], [0], [1], [0, 0, 1, 1], [], []>} : vector<1x128xbf16>, vector<128x128xbf16>, vector<1x128xf32> -> vector<1x128xf32>
    %293 = arith.addf %292, %10 : vector<1x128xf32>
    %cst_97 = arith.constant dense<0xFF800000> : vector<1xf32>
    %294 = vector.multi_reduction <maximumf>, %293, %cst_97 [1] : vector<1x128xf32> to vector<1xf32>
    %295 = vector.shape_cast %294 : vector<1xf32> to vector<1x1xf32>
    %296 = vector.broadcast %295 : vector<1x1xf32> to vector<1x128xf32>
    %297 = arith.subf %293, %296 : vector<1x128xf32>
    %298 = math.exp %297 : vector<1x128xf32>
    %cst_98 = arith.constant dense<0.000000e+00> : vector<1xf32>
    %299 = vector.multi_reduction <add>, %298, %cst_98 [1] : vector<1x128xf32> to vector<1xf32>
    %300 = vector.shape_cast %299 : vector<1xf32> to vector<1x1xf32>
    %301 = math.log %300 : vector<1x1xf32>
    %302 = arith.addf %295, %301 : vector<1x1xf32>
    %303 = vector.broadcast %302 : vector<1x1xf32> to vector<1x128xf32>
    %304 = arith.subf %293, %303 : vector<1x128xf32>
    %c3_99 = arith.constant 3 : index
    %c0_100 = arith.constant 0 : index
    %305 = vector.load %arg13[%c3_99, %c0_100] : memref<6x384xf32, #tpu.memory_space<vmem>>, vector<1x128xf32>
    tpu.vector_store %arg13[%c3_99, %c0_100], %304 {strides = array<i32>} : memref<6x384xf32, #tpu.memory_space<vmem>>, vector<1x128xf32>,
    %c3_101 = arith.constant 3 : index
    %c128_102 = arith.constant 128 : index
    %306 = vector.load %arg13[%c3_101, %c128_102] : memref<6x384xf32, #tpu.memory_space<vmem>>, vector<1x128xf32>
    tpu.vector_store %arg13[%c3_101, %c128_102], %290 {strides = array<i32>} : memref<6x384xf32, #tpu.memory_space<vmem>>, vector<1x128xf32>,
    %c3_103 = arith.constant 3 : index
    %c256_104 = arith.constant 256 : index
    %307 = vector.load %arg13[%c3_103, %c256_104] : memref<6x384xf32, #tpu.memory_space<vmem>>, vector<1x128xf32>
    tpu.vector_store %arg13[%c3_103, %c256_104], %250 {strides = array<i32>} : memref<6x384xf32, #tpu.memory_space<vmem>>, vector<1x128xf32>,
    %c4 = arith.constant 4 : index
    %c0_105 = arith.constant 0 : index
    %308 = vector.load %arg0[%c4, %c0_105] : memref<6x128xbf16, #tpu.memory_space<vmem>>, vector<1x128xbf16>
    %309 = arith.truncf %290 : vector<1x128xf32> to vector<1x128xbf16>
    %cst_106 = arith.constant dense<0.000000e+00> : vector<1x256xf32>
    %310 = tpu.matmul %308, %1, %cst_106 {dimension_numbers = #tpu.dot_dimension_numbers<[1], [0], [0], [1], [0, 0, 1, 1], [], []>} : vector<1x128xbf16>, vector<128x256xbf16>, vector<1x256xf32> -> vector<1x256xf32>
    %cst_107 = arith.constant dense<0.000000e+00> : vector<1x512xf32>
    %311 = tpu.matmul %309, %2, %cst_107 {dimension_numbers = #tpu.dot_dimension_numbers<[1], [0], [0], [1], [0, 0, 1, 1], [], []>} : vector<1x128xbf16>, vector<128x512xbf16>, vector<1x512xf32> -> vector<1x512xf32>
    %312 = vector.extract_strided_slice %310 {offsets = [0, 0], sizes = [1, 128], strides = [1, 1]} : vector<1x256xf32> to vector<1x128xf32>
    %313 = vector.extract_strided_slice %311 {offsets = [0, 0], sizes = [1, 128], strides = [1, 1]} : vector<1x512xf32> to vector<1x128xf32>
    %314 = arith.addf %312, %313 : vector<1x128xf32>
    %315 = arith.addf %314, %6 : vector<1x128xf32>
    %cst_108 = arith.constant dense<0xFF800000> : vector<1xf32>
    %316 = vector.multi_reduction <maximumf>, %315, %cst_108 [1] : vector<1x128xf32> to vector<1xf32>
    %317 = vector.shape_cast %316 : vector<1xf32> to vector<1x1xf32>
    %318 = vector.broadcast %317 : vector<1x1xf32> to vector<1x128xf32>
    %319 = arith.subf %315, %318 : vector<1x128xf32>
    %320 = math.exp %319 : vector<1x128xf32>
    %cst_109 = arith.constant dense<0.000000e+00> : vector<1xf32>
    %321 = vector.multi_reduction <add>, %320, %cst_109 [1] : vector<1x128xf32> to vector<1xf32>
    %322 = vector.shape_cast %321 : vector<1xf32> to vector<1x1xf32>
    %323 = vector.broadcast %322 : vector<1x1xf32> to vector<1x128xf32>
    %324 = arith.divf %320, %323 : vector<1x128xf32>
    %325 = arith.truncf %324 : vector<1x128xf32> to vector<1x128xbf16>
    %cst_110 = arith.constant dense<0.000000e+00> : vector<1x128xf32>
    %326 = tpu.matmul %325, %0, %cst_110 {dimension_numbers = #tpu.dot_dimension_numbers<[1], [0], [0], [1], [0, 0, 1, 1], [], []>} : vector<1x128xbf16>, vector<128x128xbf16>, vector<1x128xf32> -> vector<1x128xf32>
    %327 = vector.extract_strided_slice %310 {offsets = [0, 128], sizes = [1, 128], strides = [1, 1]} : vector<1x256xf32> to vector<1x128xf32>
    %328 = arith.truncf %326 : vector<1x128xf32> to vector<1x128xbf16>
    %cst_111 = arith.constant dense<0.000000e+00> : vector<1x128xf32>
    %329 = tpu.matmul %328, %3, %cst_111 {dimension_numbers = #tpu.dot_dimension_numbers<[1], [0], [0], [1], [0, 0, 1, 1], [], []>} : vector<1x128xbf16>, vector<128x128xbf16>, vector<1x128xf32> -> vector<1x128xf32>
    %330 = arith.addf %327, %329 : vector<1x128xf32>
    %331 = arith.addf %330, %7 : vector<1x128xf32>
    %cst_112 = arith.constant 0.000000e+00 : f32
    %332 = vector.broadcast %cst_112 : f32 to vector<1x128xf32>
    %333 = arith.maximumf %331, %332 : vector<1x128xf32>
    %334 = arith.truncf %333 : vector<1x128xf32> to vector<1x128xbf16>
    %cst_113 = arith.constant dense<0.000000e+00> : vector<1x384xf32>
    %335 = tpu.matmul %334, %4, %cst_113 {dimension_numbers = #tpu.dot_dimension_numbers<[1], [0], [0], [1], [0, 0, 1, 1], [], []>} : vector<1x128xbf16>, vector<128x384xbf16>, vector<1x384xf32> -> vector<1x384xf32>
    %336 = arith.addf %335, %8 : vector<1x384xf32>
    %337 = vector.extract_strided_slice %311 {offsets = [0, 128], sizes = [1, 384], strides = [1, 1]} : vector<1x512xf32> to vector<1x384xf32>
    %338 = arith.addf %337, %9 : vector<1x384xf32>
    %339 = vector.extract_strided_slice %336 {offsets = [0, 0], sizes = [1, 128], strides = [1, 1]} : vector<1x384xf32> to vector<1x128xf32>
    %340 = vector.extract_strided_slice %338 {offsets = [0, 0], sizes = [1, 128], strides = [1, 1]} : vector<1x384xf32> to vector<1x128xf32>
    %341 = arith.addf %339, %340 : vector<1x128xf32>
    %342 = arith.negf %341 : vector<1x128xf32>
    %343 = math.exp %342 : vector<1x128xf32>
    %cst_114 = arith.constant 1.000000e+00 : f32
    %344 = vector.broadcast %cst_114 : f32 to vector<1x128xf32>
    %345 = arith.addf %344, %343 : vector<1x128xf32>
    %346 = arith.divf %344, %345 : vector<1x128xf32>
    %347 = vector.extract_strided_slice %336 {offsets = [0, 128], sizes = [1, 128], strides = [1, 1]} : vector<1x384xf32> to vector<1x128xf32>
    %348 = vector.extract_strided_slice %338 {offsets = [0, 128], sizes = [1, 128], strides = [1, 1]} : vector<1x384xf32> to vector<1x128xf32>
    %349 = arith.addf %347, %348 : vector<1x128xf32>
    %350 = arith.negf %349 : vector<1x128xf32>
    %351 = math.exp %350 : vector<1x128xf32>
    %cst_115 = arith.constant 1.000000e+00 : f32
    %352 = vector.broadcast %cst_115 : f32 to vector<1x128xf32>
    %353 = arith.addf %352, %351 : vector<1x128xf32>
    %354 = arith.divf %352, %353 : vector<1x128xf32>
    %355 = vector.extract_strided_slice %336 {offsets = [0, 256], sizes = [1, 128], strides = [1, 1]} : vector<1x384xf32> to vector<1x128xf32>
    %356 = vector.extract_strided_slice %338 {offsets = [0, 256], sizes = [1, 128], strides = [1, 1]} : vector<1x384xf32> to vector<1x128xf32>
    %357 = arith.mulf %346, %356 : vector<1x128xf32>
    %358 = arith.addf %355, %357 : vector<1x128xf32>
    %359 = math.tanh %358 : vector<1x128xf32>
    %cst_116 = arith.constant 1.000000e+00 : f32
    %360 = vector.broadcast %cst_116 : f32 to vector<1x128xf32>
    %361 = arith.subf %360, %354 : vector<1x128xf32>
    %362 = arith.mulf %361, %359 : vector<1x128xf32>
    %363 = arith.mulf %354, %290 : vector<1x128xf32>
    %364 = arith.addf %362, %363 : vector<1x128xf32>
    %365 = arith.truncf %364 : vector<1x128xf32> to vector<1x128xbf16>
    %cst_117 = arith.constant dense<0.000000e+00> : vector<1x128xf32>
    %366 = tpu.matmul %365, %5, %cst_117 {dimension_numbers = #tpu.dot_dimension_numbers<[1], [0], [0], [1], [0, 0, 1, 1], [], []>} : vector<1x128xbf16>, vector<128x128xbf16>, vector<1x128xf32> -> vector<1x128xf32>
    %367 = arith.addf %366, %10 : vector<1x128xf32>
    %cst_118 = arith.constant dense<0xFF800000> : vector<1xf32>
    %368 = vector.multi_reduction <maximumf>, %367, %cst_118 [1] : vector<1x128xf32> to vector<1xf32>
    %369 = vector.shape_cast %368 : vector<1xf32> to vector<1x1xf32>
    %370 = vector.broadcast %369 : vector<1x1xf32> to vector<1x128xf32>
    %371 = arith.subf %367, %370 : vector<1x128xf32>
    %372 = math.exp %371 : vector<1x128xf32>
    %cst_119 = arith.constant dense<0.000000e+00> : vector<1xf32>
    %373 = vector.multi_reduction <add>, %372, %cst_119 [1] : vector<1x128xf32> to vector<1xf32>
    %374 = vector.shape_cast %373 : vector<1xf32> to vector<1x1xf32>
    %375 = math.log %374 : vector<1x1xf32>
    %376 = arith.addf %369, %375 : vector<1x1xf32>
    %377 = vector.broadcast %376 : vector<1x1xf32> to vector<1x128xf32>
    %378 = arith.subf %367, %377 : vector<1x128xf32>
    %c4_120 = arith.constant 4 : index
    %c0_121 = arith.constant 0 : index
    %379 = vector.load %arg13[%c4_120, %c0_121] : memref<6x384xf32, #tpu.memory_space<vmem>>, vector<1x128xf32>
    tpu.vector_store %arg13[%c4_120, %c0_121], %378 {strides = array<i32>} : memref<6x384xf32, #tpu.memory_space<vmem>>, vector<1x128xf32>,
    %c4_122 = arith.constant 4 : index
    %c128_123 = arith.constant 128 : index
    %380 = vector.load %arg13[%c4_122, %c128_123] : memref<6x384xf32, #tpu.memory_space<vmem>>, vector<1x128xf32>
    tpu.vector_store %arg13[%c4_122, %c128_123], %364 {strides = array<i32>} : memref<6x384xf32, #tpu.memory_space<vmem>>, vector<1x128xf32>,
    %c4_124 = arith.constant 4 : index
    %c256_125 = arith.constant 256 : index
    %381 = vector.load %arg13[%c4_124, %c256_125] : memref<6x384xf32, #tpu.memory_space<vmem>>, vector<1x128xf32>
    tpu.vector_store %arg13[%c4_124, %c256_125], %324 {strides = array<i32>} : memref<6x384xf32, #tpu.memory_space<vmem>>, vector<1x128xf32>,
    %c5 = arith.constant 5 : index
    %c0_126 = arith.constant 0 : index
    %382 = vector.load %arg0[%c5, %c0_126] : memref<6x128xbf16, #tpu.memory_space<vmem>>, vector<1x128xbf16>
    %383 = arith.truncf %364 : vector<1x128xf32> to vector<1x128xbf16>
    %cst_127 = arith.constant dense<0.000000e+00> : vector<1x256xf32>
    %384 = tpu.matmul %382, %1, %cst_127 {dimension_numbers = #tpu.dot_dimension_numbers<[1], [0], [0], [1], [0, 0, 1, 1], [], []>} : vector<1x128xbf16>, vector<128x256xbf16>, vector<1x256xf32> -> vector<1x256xf32>
    %cst_128 = arith.constant dense<0.000000e+00> : vector<1x512xf32>
    %385 = tpu.matmul %383, %2, %cst_128 {dimension_numbers = #tpu.dot_dimension_numbers<[1], [0], [0], [1], [0, 0, 1, 1], [], []>} : vector<1x128xbf16>, vector<128x512xbf16>, vector<1x512xf32> -> vector<1x512xf32>
    %386 = vector.extract_strided_slice %384 {offsets = [0, 0], sizes = [1, 128], strides = [1, 1]} : vector<1x256xf32> to vector<1x128xf32>
    %387 = vector.extract_strided_slice %385 {offsets = [0, 0], sizes = [1, 128], strides = [1, 1]} : vector<1x512xf32> to vector<1x128xf32>
    %388 = arith.addf %386, %387 : vector<1x128xf32>
    %389 = arith.addf %388, %6 : vector<1x128xf32>
    %cst_129 = arith.constant dense<0xFF800000> : vector<1xf32>
    %390 = vector.multi_reduction <maximumf>, %389, %cst_129 [1] : vector<1x128xf32> to vector<1xf32>
    %391 = vector.shape_cast %390 : vector<1xf32> to vector<1x1xf32>
    %392 = vector.broadcast %391 : vector<1x1xf32> to vector<1x128xf32>
    %393 = arith.subf %389, %392 : vector<1x128xf32>
    %394 = math.exp %393 : vector<1x128xf32>
    %cst_130 = arith.constant dense<0.000000e+00> : vector<1xf32>
    %395 = vector.multi_reduction <add>, %394, %cst_130 [1] : vector<1x128xf32> to vector<1xf32>
    %396 = vector.shape_cast %395 : vector<1xf32> to vector<1x1xf32>
    %397 = vector.broadcast %396 : vector<1x1xf32> to vector<1x128xf32>
    %398 = arith.divf %394, %397 : vector<1x128xf32>
    %399 = arith.truncf %398 : vector<1x128xf32> to vector<1x128xbf16>
    %cst_131 = arith.constant dense<0.000000e+00> : vector<1x128xf32>
    %400 = tpu.matmul %399, %0, %cst_131 {dimension_numbers = #tpu.dot_dimension_numbers<[1], [0], [0], [1], [0, 0, 1, 1], [], []>} : vector<1x128xbf16>, vector<128x128xbf16>, vector<1x128xf32> -> vector<1x128xf32>
    %401 = vector.extract_strided_slice %384 {offsets = [0, 128], sizes = [1, 128], strides = [1, 1]} : vector<1x256xf32> to vector<1x128xf32>
    %402 = arith.truncf %400 : vector<1x128xf32> to vector<1x128xbf16>
    %cst_132 = arith.constant dense<0.000000e+00> : vector<1x128xf32>
    %403 = tpu.matmul %402, %3, %cst_132 {dimension_numbers = #tpu.dot_dimension_numbers<[1], [0], [0], [1], [0, 0, 1, 1], [], []>} : vector<1x128xbf16>, vector<128x128xbf16>, vector<1x128xf32> -> vector<1x128xf32>
    %404 = arith.addf %401, %403 : vector<1x128xf32>
    %405 = arith.addf %404, %7 : vector<1x128xf32>
    %cst_133 = arith.constant 0.000000e+00 : f32
    %406 = vector.broadcast %cst_133 : f32 to vector<1x128xf32>
    %407 = arith.maximumf %405, %406 : vector<1x128xf32>
    %408 = arith.truncf %407 : vector<1x128xf32> to vector<1x128xbf16>
    %cst_134 = arith.constant dense<0.000000e+00> : vector<1x384xf32>
    %409 = tpu.matmul %408, %4, %cst_134 {dimension_numbers = #tpu.dot_dimension_numbers<[1], [0], [0], [1], [0, 0, 1, 1], [], []>} : vector<1x128xbf16>, vector<128x384xbf16>, vector<1x384xf32> -> vector<1x384xf32>
    %410 = arith.addf %409, %8 : vector<1x384xf32>
    %411 = vector.extract_strided_slice %385 {offsets = [0, 128], sizes = [1, 384], strides = [1, 1]} : vector<1x512xf32> to vector<1x384xf32>
    %412 = arith.addf %411, %9 : vector<1x384xf32>
    %413 = vector.extract_strided_slice %410 {offsets = [0, 0], sizes = [1, 128], strides = [1, 1]} : vector<1x384xf32> to vector<1x128xf32>
    %414 = vector.extract_strided_slice %412 {offsets = [0, 0], sizes = [1, 128], strides = [1, 1]} : vector<1x384xf32> to vector<1x128xf32>
    %415 = arith.addf %413, %414 : vector<1x128xf32>
    %416 = arith.negf %415 : vector<1x128xf32>
    %417 = math.exp %416 : vector<1x128xf32>
    %cst_135 = arith.constant 1.000000e+00 : f32
    %418 = vector.broadcast %cst_135 : f32 to vector<1x128xf32>
    %419 = arith.addf %418, %417 : vector<1x128xf32>
    %420 = arith.divf %418, %419 : vector<1x128xf32>
    %421 = vector.extract_strided_slice %410 {offsets = [0, 128], sizes = [1, 128], strides = [1, 1]} : vector<1x384xf32> to vector<1x128xf32>
    %422 = vector.extract_strided_slice %412 {offsets = [0, 128], sizes = [1, 128], strides = [1, 1]} : vector<1x384xf32> to vector<1x128xf32>
    %423 = arith.addf %421, %422 : vector<1x128xf32>
    %424 = arith.negf %423 : vector<1x128xf32>
    %425 = math.exp %424 : vector<1x128xf32>
    %cst_136 = arith.constant 1.000000e+00 : f32
    %426 = vector.broadcast %cst_136 : f32 to vector<1x128xf32>
    %427 = arith.addf %426, %425 : vector<1x128xf32>
    %428 = arith.divf %426, %427 : vector<1x128xf32>
    %429 = vector.extract_strided_slice %410 {offsets = [0, 256], sizes = [1, 128], strides = [1, 1]} : vector<1x384xf32> to vector<1x128xf32>
    %430 = vector.extract_strided_slice %412 {offsets = [0, 256], sizes = [1, 128], strides = [1, 1]} : vector<1x384xf32> to vector<1x128xf32>
    %431 = arith.mulf %420, %430 : vector<1x128xf32>
    %432 = arith.addf %429, %431 : vector<1x128xf32>
    %433 = math.tanh %432 : vector<1x128xf32>
    %cst_137 = arith.constant 1.000000e+00 : f32
    %434 = vector.broadcast %cst_137 : f32 to vector<1x128xf32>
    %435 = arith.subf %434, %428 : vector<1x128xf32>
    %436 = arith.mulf %435, %433 : vector<1x128xf32>
    %437 = arith.mulf %428, %364 : vector<1x128xf32>
    %438 = arith.addf %436, %437 : vector<1x128xf32>
    %439 = arith.truncf %438 : vector<1x128xf32> to vector<1x128xbf16>
    %cst_138 = arith.constant dense<0.000000e+00> : vector<1x128xf32>
    %440 = tpu.matmul %439, %5, %cst_138 {dimension_numbers = #tpu.dot_dimension_numbers<[1], [0], [0], [1], [0, 0, 1, 1], [], []>} : vector<1x128xbf16>, vector<128x128xbf16>, vector<1x128xf32> -> vector<1x128xf32>
    %441 = arith.addf %440, %10 : vector<1x128xf32>
    %cst_139 = arith.constant dense<0xFF800000> : vector<1xf32>
    %442 = vector.multi_reduction <maximumf>, %441, %cst_139 [1] : vector<1x128xf32> to vector<1xf32>
    %443 = vector.shape_cast %442 : vector<1xf32> to vector<1x1xf32>
    %444 = vector.broadcast %443 : vector<1x1xf32> to vector<1x128xf32>
    %445 = arith.subf %441, %444 : vector<1x128xf32>
    %446 = math.exp %445 : vector<1x128xf32>
    %cst_140 = arith.constant dense<0.000000e+00> : vector<1xf32>
    %447 = vector.multi_reduction <add>, %446, %cst_140 [1] : vector<1x128xf32> to vector<1xf32>
    %448 = vector.shape_cast %447 : vector<1xf32> to vector<1x1xf32>
    %449 = math.log %448 : vector<1x1xf32>
    %450 = arith.addf %443, %449 : vector<1x1xf32>
    %451 = vector.broadcast %450 : vector<1x1xf32> to vector<1x128xf32>
    %452 = arith.subf %441, %451 : vector<1x128xf32>
    %c5_141 = arith.constant 5 : index
    %c0_142 = arith.constant 0 : index
    %453 = vector.load %arg13[%c5_141, %c0_142] : memref<6x384xf32, #tpu.memory_space<vmem>>, vector<1x128xf32>
    tpu.vector_store %arg13[%c5_141, %c0_142], %452 {strides = array<i32>} : memref<6x384xf32, #tpu.memory_space<vmem>>, vector<1x128xf32>,
    %c5_143 = arith.constant 5 : index
    %c128_144 = arith.constant 128 : index
    %454 = vector.load %arg13[%c5_143, %c128_144] : memref<6x384xf32, #tpu.memory_space<vmem>>, vector<1x128xf32>
    tpu.vector_store %arg13[%c5_143, %c128_144], %438 {strides = array<i32>} : memref<6x384xf32, #tpu.memory_space<vmem>>, vector<1x128xf32>,
    %c5_145 = arith.constant 5 : index
    %c256_146 = arith.constant 256 : index
    %455 = vector.load %arg13[%c5_145, %c256_146] : memref<6x384xf32, #tpu.memory_space<vmem>>, vector<1x128xf32>
    tpu.vector_store %arg13[%c5_145, %c256_146], %398 {strides = array<i32>} : memref<6x384xf32, #tpu.memory_space<vmem>>, vector<1x128xf32>,
    return
  }
}

</mosaic_0001>

<llo_original>
// kernel: tpu_custom_call.1
$region0: #{tpu_custom_call.1}
  #allocation0 [shape = 'u32[]', space=smem, size = 0x4, offset = 0x4, fixed_abs, tag = 'smem constant byte address 0x4 - core index']
  #allocation1 [shape = 'u32[144,128]{1,0:T(1,128)}', space=vmem, size = 0x12000, scoped, tag = 'internal scratch']
  %s0 = inlined_call_operand.hbm [shape: bf16[6,128], index: 0, kind: input, shape index: {}]
  %s1 = inlined_call_operand.vmem [shape: f32[1,128], index: 1, kind: input, shape index: {}]
  %s2 = inlined_call_operand.hbm [shape: bf16[128,128], index: 2, kind: input, shape index: {}]
  %s3 = inlined_call_operand.hbm [shape: bf16[128,256], index: 3, kind: input, shape index: {}]
  %s4 = inlined_call_operand.hbm [shape: bf16[128,512], index: 4, kind: input, shape index: {}]
  %s5 = inlined_call_operand.hbm [shape: bf16[128,128], index: 5, kind: input, shape index: {}]
  %s6 = inlined_call_operand.hbm [shape: bf16[128,384], index: 6, kind: input, shape index: {}]
  %s7 = inlined_call_operand.hbm [shape: bf16[128,128], index: 7, kind: input, shape index: {}]
  %s8 = inlined_call_operand.vmem [shape: f32[1,128], index: 8, kind: input, shape index: {}]
  %s9 = inlined_call_operand.vmem [shape: f32[1,128], index: 9, kind: input, shape index: {}]
  %s10 = inlined_call_operand.vmem [shape: f32[1,384], index: 10, kind: input, shape index: {}]
  %s11 = inlined_call_operand.vmem [shape: f32[1,384], index: 11, kind: input, shape index: {}]
  %s12 = inlined_call_operand.vmem [shape: f32[1,128], index: 12, kind: input, shape index: {}]
  %s13 = inlined_call_operand.hbm [shape: f32[6,384], index: 13, kind: output, shape index: {}]
  %s14 = sld [smem:[#allocation0]]
  $region90: #{tpu_custom_call.1} parent=0
    _
  %s16 = ssub.s32 1, %s14
  %s17 = scalar_select 0, %s16, %s14
  $region1: #{tpu_custom_call.1} parent=0
    #allocation2 [shape = 'u8[2048]{0}', space=vmem, size = 0x800, scoped, tag = 'input window, operand 0, single buffered']
    #allocation3 [shape = 's32[1]{0}', space=sflag, size = 0x4, scoped, tag = 'scoped memory for tpu_custom_call.1']
    #allocation4 [shape = 's32[1]{0}', space=sflag, size = 0x4, scoped, tag = 'scoped memory for tpu_custom_call.1']
    #allocation5 [shape = 'u8[32768]{0}', space=vmem, size = 0x8000, scoped, tag = 'input window, operand 2, single buffered']
    #allocation6 [shape = 's32[1]{0}', space=sflag, size = 0x4, scoped, tag = 'scoped memory for tpu_custom_call.1']
    #allocation7 [shape = 'u8[65536]{0}', space=vmem, size = 0x10000, scoped, tag = 'input window, operand 3, single buffered']
    #allocation8 [shape = 'u8[131072]{0}', space=vmem, size = 0x20000, scoped, tag = 'input window, operand 4, single buffered']
    #allocation9 [shape = 's32[1]{0}', space=sflag, size = 0x4, scoped, tag = 'scoped memory for tpu_custom_call.1']
    #allocation10 [shape = 'u8[32768]{0}', space=vmem, size = 0x8000, scoped, tag = 'input window, operand 5, single buffered']
    #allocation11 [shape = 'u8[98304]{0}', space=vmem, size = 0x18000, scoped, tag = 'input window, operand 6, single buffered']
    #allocation12 [shape = 's32[1]{0}', space=sflag, size = 0x4, scoped, tag = 'scoped memory for tpu_custom_call.1']
    #allocation13 [shape = 'u8[32768]{0}', space=vmem, size = 0x8000, scoped, tag = 'input window, operand 7, single buffered']
    #allocation14 [shape = 'u8[12288]{0}', space=vmem, size = 0x3000, scoped, tag = 'output window, operand 0, single buffered']
    %18 = vsyncpa [#allocation3], 0
    %19 = vsyncpa [#allocation6], 0
    %20 = vsyncpa [#allocation9], 0
    %21 = vsyncpa [#allocation12], 0
    %22 = vsyncpa [#allocation4], 0
    // Predicated region
    $region2: #{tpu_custom_call.1} parent=1 // pred_check
      _
    $region3: #{tpu_custom_call.1} parent=1 // pred_check_branch
      %24 = sbr.rel (0) target = $region5
    $region4: #{tpu_custom_call.1} parent=1 // pred_region
      %s26 = ssub.s32 64, 64
      %27 = vsyncadd [#allocation3], %s26
      %s29 = sshll.u32 [#allocation2], 4
      %s30 = int_to_ptr.vmem [resolvable:$true] %s29
      %32 = dma.hbm_to_vmem [thread:$0]  %s0, 64, %s30, [#allocation3]
    $region5: #{tpu_custom_call.1} parent=1 // pred_fallthru
      _
    // Predicated region
    $region6: #{tpu_custom_call.1} parent=1 // pred_check
      _
    $region7: #{tpu_custom_call.1} parent=1 // pred_check_branch
      %34 = sbr.rel (0) target = $region9
    $region8: #{tpu_custom_call.1} parent=1 // pred_region
      _
    $region9: #{tpu_custom_call.1} parent=1 // pred_fallthru
      _
    // Predicated region
    $region10: #{tpu_custom_call.1} parent=1 // pred_check
      _
    $region11: #{tpu_custom_call.1} parent=1 // pred_check_branch
      %36 = sbr.rel (0) target = $region13
    $region12: #{tpu_custom_call.1} parent=1 // pred_region
      %s38 = ssub.s32 1024, 1024
      %39 = vsyncadd [#allocation6], %s38
      %s40 = sshll.u32 [#allocation5], 4
      %s41 = int_to_ptr.vmem [resolvable:$true] %s40
      %46 = dma.hbm_to_vmem [thread:$0]  %s2, 1024, %s41, [#allocation6], 64, 64, 4
    $region13: #{tpu_custom_call.1} parent=1 // pred_fallthru
      _
    // Predicated region
    $region14: #{tpu_custom_call.1} parent=1 // pred_check
      _
    $region15: #{tpu_custom_call.1} parent=1 // pred_check_branch
      %48 = sbr.rel (0) target = $region17
    $region16: #{tpu_custom_call.1} parent=1 // pred_region
      %s50 = ssub.s32 2048, 2048
      %51 = vsyncadd [#allocation6], %s50
      %s52 = sshll.u32 [#allocation7], 4
      %s53 = int_to_ptr.vmem [resolvable:$true] %s52
      %58 = dma.hbm_to_vmem [thread:$0]  %s3, 2048, %s53, [#allocation6], 128, 128, 8
    $region17: #{tpu_custom_call.1} parent=1 // pred_fallthru
      _
    // Predicated region
    $region18: #{tpu_custom_call.1} parent=1 // pred_check
      _
    $region19: #{tpu_custom_call.1} parent=1 // pred_check_branch
      %60 = sbr.rel (0) target = $region21
    $region20: #{tpu_custom_call.1} parent=1 // pred_region
      %s62 = ssub.s32 4096, 4096
      %63 = vsyncadd [#allocation9], %s62
      %s64 = sshll.u32 [#allocation8], 4
      %s65 = int_to_ptr.vmem [resolvable:$true] %s64
      %70 = dma.hbm_to_vmem [thread:$0]  %s4, 4096, %s65, [#allocation9], 256, 256, 16
    $region21: #{tpu_custom_call.1} parent=1 // pred_fallthru
      _
    // Predicated region
    $region22: #{tpu_custom_call.1} parent=1 // pred_check
      _
    $region23: #{tpu_custom_call.1} parent=1 // pred_check_branch
      %72 = sbr.rel (0) target = $region25
    $region24: #{tpu_custom_call.1} parent=1 // pred_region
      %s74 = ssub.s32 1024, 1024
      %75 = vsyncadd [#allocation9], %s74
      %s76 = sshll.u32 [#allocation10], 4
      %s77 = int_to_ptr.vmem [resolvable:$true] %s76
      %82 = dma.hbm_to_vmem [thread:$0]  %s5, 1024, %s77, [#allocation9], 64, 64, 4
    $region25: #{tpu_custom_call.1} parent=1 // pred_fallthru
      _
    // Predicated region
    $region26: #{tpu_custom_call.1} parent=1 // pred_check
      _
    $region27: #{tpu_custom_call.1} parent=1 // pred_check_branch
      %84 = sbr.rel (0) target = $region29
    $region28: #{tpu_custom_call.1} parent=1 // pred_region
      %s86 = ssub.s32 3072, 3072
      %87 = vsyncadd [#allocation12], %s86
      %s88 = sshll.u32 [#allocation11], 4
      %s89 = int_to_ptr.vmem [resolvable:$true] %s88
      %94 = dma.hbm_to_vmem [thread:$0]  %s6, 3072, %s89, [#allocation12], 192, 192, 12
    $region29: #{tpu_custom_call.1} parent=1 // pred_fallthru
      _
    // Predicated region
    $region30: #{tpu_custom_call.1} parent=1 // pred_check
      _
    $region31: #{tpu_custom_call.1} parent=1 // pred_check_branch
      %96 = sbr.rel (0) target = $region33
    $region32: #{tpu_custom_call.1} parent=1 // pred_region
      %s98 = ssub.s32 1024, 1024
      %99 = vsyncadd [#allocation12], %s98
      %s100 = sshll.u32 [#allocation13], 4
      %s101 = int_to_ptr.vmem [resolvable:$true] %s100
      %106 = dma.hbm_to_vmem [thread:$0]  %s7, 1024, %s101, [#allocation12], 64, 64, 4
    $region33: #{tpu_custom_call.1} parent=1 // pred_fallthru
      _
    // Predicated region
    $region34: #{tpu_custom_call.1} parent=1 // pred_check
      _
    $region35: #{tpu_custom_call.1} parent=1 // pred_check_branch
      %108 = sbr.rel (0) target = $region37
    $region36: #{tpu_custom_call.1} parent=1 // pred_region
      _
    $region37: #{tpu_custom_call.1} parent=1 // pred_fallthru
      _
    // Predicated region
    $region38: #{tpu_custom_call.1} parent=1 // pred_check
      _
    $region39: #{tpu_custom_call.1} parent=1 // pred_check_branch
      %110 = sbr.rel (0) target = $region41
    $region40: #{tpu_custom_call.1} parent=1 // pred_region
      _
    $region41: #{tpu_custom_call.1} parent=1 // pred_fallthru
      _
    // Predicated region
    $region42: #{tpu_custom_call.1} parent=1 // pred_check
      _
    $region43: #{tpu_custom_call.1} parent=1 // pred_check_branch
      %112 = sbr.rel (0) target = $region45
    $region44: #{tpu_custom_call.1} parent=1 // pred_region
      _
    $region45: #{tpu_custom_call.1} parent=1 // pred_fallthru
      _
    // Predicated region
    $region46: #{tpu_custom_call.1} parent=1 // pred_check
      _
    $region47: #{tpu_custom_call.1} parent=1 // pred_check_branch
      %114 = sbr.rel (0) target = $region49
    $region48: #{tpu_custom_call.1} parent=1 // pred_region
      _
    $region49: #{tpu_custom_call.1} parent=1 // pred_fallthru
      _
    // Predicated region
    $region50: #{tpu_custom_call.1} parent=1 // pred_check
      _
    $region51: #{tpu_custom_call.1} parent=1 // pred_check_branch
      %116 = sbr.rel (0) target = $region53
    $region52: #{tpu_custom_call.1} parent=1 // pred_region
      _
    $region53: #{tpu_custom_call.1} parent=1 // pred_fallthru
      _
    // Predicated region
    $region54: #{tpu_custom_call.1} parent=1 // pred_check
      _
    $region55: #{tpu_custom_call.1} parent=1 // pred_check_branch
      %118 = sbr.rel (0) target = $region57
    $region56: #{tpu_custom_call.1} parent=1 // pred_region
      %119 = dma.done [#allocation3], 64
    $region57: #{tpu_custom_call.1} parent=1 // pred_fallthru
      _
    // Predicated region
    $region58: #{tpu_custom_call.1} parent=1 // pred_check
      _
    $region59: #{tpu_custom_call.1} parent=1 // pred_check_branch
      %121 = sbr.rel (0) target = $region61
    $region60: #{tpu_custom_call.1} parent=1 // pred_region
      %122 = dma.done [#allocation6], 1024
    $region61: #{tpu_custom_call.1} parent=1 // pred_fallthru
      _
    // Predicated region
    $region62: #{tpu_custom_call.1} parent=1 // pred_check
      _
    $region63: #{tpu_custom_call.1} parent=1 // pred_check_branch
      %124 = sbr.rel (0) target = $region65
    $region64: #{tpu_custom_call.1} parent=1 // pred_region
      %125 = dma.done [#allocation6], 2048
    $region65: #{tpu_custom_call.1} parent=1 // pred_fallthru
      _
    // Predicated region
    $region66: #{tpu_custom_call.1} parent=1 // pred_check
      _
    $region67: #{tpu_custom_call.1} parent=1 // pred_check_branch
      %127 = sbr.rel (0) target = $region69
    $region68: #{tpu_custom_call.1} parent=1 // pred_region
      %128 = dma.done [#allocation9], 4096
    $region69: #{tpu_custom_call.1} parent=1 // pred_fallthru
      _
    // Predicated region
    $region70: #{tpu_custom_call.1} parent=1 // pred_check
      _
    $region71: #{tpu_custom_call.1} parent=1 // pred_check_branch
      %130 = sbr.rel (0) target = $region73
    $region72: #{tpu_custom_call.1} parent=1 // pred_region
      %131 = dma.done [#allocation9], 1024
    $region73: #{tpu_custom_call.1} parent=1 // pred_fallthru
      _
    // Predicated region
    $region74: #{tpu_custom_call.1} parent=1 // pred_check
      _
    $region75: #{tpu_custom_call.1} parent=1 // pred_check_branch
      %133 = sbr.rel (0) target = $region77
    $region76: #{tpu_custom_call.1} parent=1 // pred_region
      %134 = dma.done [#allocation12], 3072
    $region77: #{tpu_custom_call.1} parent=1 // pred_fallthru
      _
    // Predicated region
    $region78: #{tpu_custom_call.1} parent=1 // pred_check
      _
    $region79: #{tpu_custom_call.1} parent=1 // pred_check_branch
      %136 = sbr.rel (0) target = $region81
    $region80: #{tpu_custom_call.1} parent=1 // pred_region
      %137 = dma.done [#allocation12], 1024
    $region81: #{tpu_custom_call.1} parent=1 // pred_fallthru
      _
    %v139 = vld [vmem:[#allocation5] sm:$0xf]
    %v140 = vld [vmem:[#allocation5 + $0x4] sm:$0xf]
    %v141 = vld [vmem:[#allocation5 + $0x8] sm:$0xf]
    %v142 = vld [vmem:[#allocation5 + $0xc] sm:$0xf]
    %v143 = vld [vmem:[#allocation5 + $0x10] sm:$0xf]
    %v144 = vld [vmem:[#allocation5 + $0x14] sm:$0xf]
    %v145 = vld [vmem:[#allocation5 + $0x18] sm:$0xf]
    %v146 = vld [vmem:[#allocation5 + $0x1c] sm:$0xf]
    %v147 = vld [vmem:[#allocation5 + $0x20] sm:$0xf]
    %v148 = vld [vmem:[#allocation5 + $0x24] sm:$0xf]
    %v149 = vld [vmem:[#allocation5 + $0x28] sm:$0xf]
    %v150 = vld [vmem:[#allocation5 + $0x2c] sm:$0xf]
    %v151 = vld [vmem:[#allocation5 + $0x30] sm:$0xf]
    %v152 = vld [vmem:[#allocation5 + $0x34] sm:$0xf]
    %v153 = vld [vmem:[#allocation5 + $0x38] sm:$0xf]
    %v154 = vld [vmem:[#allocation5 + $0x3c] sm:$0xf]
    %v155 = vld [vmem:[#allocation7] sm:$0xff]
    %v156 = vld [vmem:[#allocation7 + $0x8] sm:$0xff]
    %v157 = vld [vmem:[#allocation7 + $0x10] sm:$0xff]
    %v158 = vld [vmem:[#allocation7 + $0x18] sm:$0xff]
    %v159 = vld [vmem:[#allocation7 + $0x20] sm:$0xff]
    %v160 = vld [vmem:[#allocation7 + $0x28] sm:$0xff]
    %v161 = vld [vmem:[#allocation7 + $0x30] sm:$0xff]
    %v162 = vld [vmem:[#allocation7 + $0x38] sm:$0xff]
    %v163 = vld [vmem:[#allocation7 + $0x40] sm:$0xff]
    %v164 = vld [vmem:[#allocation7 + $0x48] sm:$0xff]
    %v165 = vld [vmem:[#allocation7 + $0x50] sm:$0xff]
    %v166 = vld [vmem:[#allocation7 + $0x58] sm:$0xff]
    %v167 = vld [vmem:[#allocation7 + $0x60] sm:$0xff]
    %v168 = vld [vmem:[#allocation7 + $0x68] sm:$0xff]
    %v169 = vld [vmem:[#allocation7 + $0x70] sm:$0xff]
    %v170 = vld [vmem:[#allocation7 + $0x78] sm:$0xff]
    %v171 = vld [vmem:[#allocation8] sm:$0xff]
    %v172 = vld [vmem:[#allocation8 + $0x8] sm:$0xff]
    %v173 = vld [vmem:[#allocation8 + $0x10] sm:$0xff]
    %v174 = vld [vmem:[#allocation8 + $0x18] sm:$0xff]
    %v175 = vld [vmem:[#allocation8 + $0x20] sm:$0xff]
    %v176 = vld [vmem:[#allocation8 + $0x28] sm:$0xff]
    %v177 = vld [vmem:[#allocation8 + $0x30] sm:$0xff]
    %v178 = vld [vmem:[#allocation8 + $0x38] sm:$0xff]
    %v179 = vld [vmem:[#allocation8 + $0x40] sm:$0xff]
    %v180 = vld [vmem:[#allocation8 + $0x48] sm:$0xff]
    %v181 = vld [vmem:[#allocation8 + $0x50] sm:$0xff]
    %v182 = vld [vmem:[#allocation8 + $0x58] sm:$0xff]
    %v183 = vld [vmem:[#allocation8 + $0x60] sm:$0xff]
    %v184 = vld [vmem:[#allocation8 + $0x68] sm:$0xff]
    %v185 = vld [vmem:[#allocation8 + $0x70] sm:$0xff]
    %v186 = vld [vmem:[#allocation8 + $0x78] sm:$0xff]
    %v187 = vld [vmem:[#allocation8 + $0x80] sm:$0xff]
    %v188 = vld [vmem:[#allocation8 + $0x88] sm:$0xff]
    %v189 = vld [vmem:[#allocation8 + $0x90] sm:$0xff]
    %v190 = vld [vmem:[#allocation8 + $0x98] sm:$0xff]
    %v191 = vld [vmem:[#allocation8 + $0xa0] sm:$0xff]
    %v192 = vld [vmem:[#allocation8 + $0xa8] sm:$0xff]
    %v193 = vld [vmem:[#allocation8 + $0xb0] sm:$0xff]
    %v194 = vld [vmem:[#allocation8 + $0xb8] sm:$0xff]
    %v195 = vld [vmem:[#allocation8 + $0xc0] sm:$0xff]
    %v196 = vld [vmem:[#allocation8 + $0xc8] sm:$0xff]
    %v197 = vld [vmem:[#allocation8 + $0xd0] sm:$0xff]
    %v198 = vld [vmem:[#allocation8 + $0xd8] sm:$0xff]
    %v199 = vld [vmem:[#allocation8 + $0xe0] sm:$0xff]
    %v200 = vld [vmem:[#allocation8 + $0xe8] sm:$0xff]
    %v201 = vld [vmem:[#allocation8 + $0xf0] sm:$0xff]
    %v202 = vld [vmem:[#allocation8 + $0xf8] sm:$0xff]
    %v203 = vld [vmem:[#allocation10] sm:$0xf]
    %v204 = vld [vmem:[#allocation10 + $0x4] sm:$0xf]
    %v205 = vld [vmem:[#allocation10 + $0x8] sm:$0xf]
    %v206 = vld [vmem:[#allocation10 + $0xc] sm:$0xf]
    %v207 = vld [vmem:[#allocation10 + $0x10] sm:$0xf]
    %v208 = vld [vmem:[#allocation10 + $0x14] sm:$0xf]
    %v209 = vld [vmem:[#allocation10 + $0x18] sm:$0xf]
    %v210 = vld [vmem:[#allocation10 + $0x1c] sm:$0xf]
    %v211 = vld [vmem:[#allocation10 + $0x20] sm:$0xf]
    %v212 = vld [vmem:[#allocation10 + $0x24] sm:$0xf]
    %v213 = vld [vmem:[#allocation10 + $0x28] sm:$0xf]
    %v214 = vld [vmem:[#allocation10 + $0x2c] sm:$0xf]
    %v215 = vld [vmem:[#allocation10 + $0x30] sm:$0xf]
    %v216 = vld [vmem:[#allocation10 + $0x34] sm:$0xf]
    %v217 = vld [vmem:[#allocation10 + $0x38] sm:$0xf]
    %v218 = vld [vmem:[#allocation10 + $0x3c] sm:$0xf]
    %v219 = vld [vmem:[#allocation11] sm:$0xff]
    %v220 = vld [vmem:[#allocation11 + $0x8] sm:$0xf]
    %v221 = vld [vmem:[#allocation11 + $0xc] sm:$0xff]
    %v222 = vld [vmem:[#allocation11 + $0x14] sm:$0xf]
    %v223 = vld [vmem:[#allocation11 + $0x18] sm:$0xff]
    %v224 = vld [vmem:[#allocation11 + $0x20] sm:$0xf]
    %v225 = vld [vmem:[#allocation11 + $0x24] sm:$0xff]
    %v226 = vld [vmem:[#allocation11 + $0x2c] sm:$0xf]
    %v227 = vld [vmem:[#allocation11 + $0x30] sm:$0xff]
    %v228 = vld [vmem:[#allocation11 + $0x38] sm:$0xf]
    %v229 = vld [vmem:[#allocation11 + $0x3c] sm:$0xff]
    %v230 = vld [vmem:[#allocation11 + $0x44] sm:$0xf]
    %v231 = vld [vmem:[#allocation11 + $0x48] sm:$0xff]
    %v232 = vld [vmem:[#allocation11 + $0x50] sm:$0xf]
    %v233 = vld [vmem:[#allocation11 + $0x54] sm:$0xff]
    %v234 = vld [vmem:[#allocation11 + $0x5c] sm:$0xf]
    %v235 = vld [vmem:[#allocation11 + $0x60] sm:$0xff]
    %v236 = vld [vmem:[#allocation11 + $0x68] sm:$0xf]
    %v237 = vld [vmem:[#allocation11 + $0x6c] sm:$0xff]
    %v238 = vld [vmem:[#allocation11 + $0x74] sm:$0xf]
    %v239 = vld [vmem:[#allocation11 + $0x78] sm:$0xff]
    %v240 = vld [vmem:[#allocation11 + $0x80] sm:$0xf]
    %v241 = vld [vmem:[#allocation11 + $0x84] sm:$0xff]
    %v242 = vld [vmem:[#allocation11 + $0x8c] sm:$0xf]
    %v243 = vld [vmem:[#allocation11 + $0x90] sm:$0xff]
    %v244 = vld [vmem:[#allocation11 + $0x98] sm:$0xf]
    %v245 = vld [vmem:[#allocation11 + $0x9c] sm:$0xff]
    %v246 = vld [vmem:[#allocation11 + $0xa4] sm:$0xf]
    %v247 = vld [vmem:[#allocation11 + $0xa8] sm:$0xff]
    %v248 = vld [vmem:[#allocation11 + $0xb0] sm:$0xf]
    %v249 = vld [vmem:[#allocation11 + $0xb4] sm:$0xff]
    %v250 = vld [vmem:[#allocation11 + $0xbc] sm:$0xf]
    %v251 = vld [vmem:[#allocation13] sm:$0xf]
    %v252 = vld [vmem:[#allocation13 + $0x4] sm:$0xf]
    %v253 = vld [vmem:[#allocation13 + $0x8] sm:$0xf]
    %v254 = vld [vmem:[#allocation13 + $0xc] sm:$0xf]
    %v255 = vld [vmem:[#allocation13 + $0x10] sm:$0xf]
    %v256 = vld [vmem:[#allocation13 + $0x14] sm:$0xf]
    %v257 = vld [vmem:[#allocation13 + $0x18] sm:$0xf]
    %v258 = vld [vmem:[#allocation13 + $0x1c] sm:$0xf]
    %v259 = vld [vmem:[#allocation13 + $0x20] sm:$0xf]
    %v260 = vld [vmem:[#allocation13 + $0x24] sm:$0xf]
    %v261 = vld [vmem:[#allocation13 + $0x28] sm:$0xf]
    %v262 = vld [vmem:[#allocation13 + $0x2c] sm:$0xf]
    %v263 = vld [vmem:[#allocation13 + $0x30] sm:$0xf]
    %v264 = vld [vmem:[#allocation13 + $0x34] sm:$0xf]
    %v265 = vld [vmem:[#allocation13 + $0x38] sm:$0xf]
    %v266 = vld [vmem:[#allocation13 + $0x3c] sm:$0xf]
    %v267 = vld [vmem:[%s8] sm:$0x1]
    %v268 = vld [vmem:[%s9] sm:$0x1]
    %v269 = vld [vmem:[%s10] sm:$0x7]
    %v270 = vld [vmem:[%s11] sm:$0x7]
    %v271 = vld [vmem:[%s12] sm:$0x1]
    %v272 = vld [vmem:[%s1] sm:$0x1]
    %v273 = vld [vmem:[#allocation2] sm:$0x1]
    %v274 = vpack.c.bf16 %v272, %v272
    %v291 = vunpack.c.l.b16 %v155
    %v292 = vunpack.c.h.b16 %v155
    %v293 = vunpack.c.l.b16 %v156
    %v294 = vunpack.c.h.b16 %v156
    %v295 = vunpack.c.l.b16 %v157
    %v296 = vunpack.c.h.b16 %v157
    %v297 = vunpack.c.l.b16 %v158
    %v298 = vunpack.c.h.b16 %v158
    %v299 = vunpack.c.l.b16 %v159
    %v300 = vunpack.c.h.b16 %v159
    %v301 = vunpack.c.l.b16 %v160
    %v302 = vunpack.c.h.b16 %v160
    %v303 = vunpack.c.l.b16 %v161
    %v304 = vunpack.c.h.b16 %v161
    %v305 = vunpack.c.l.b16 %v162
    %v306 = vunpack.c.h.b16 %v162
    %v307 = vunpack.c.l.b16 %v163
    %v308 = vunpack.c.h.b16 %v163
    %v309 = vunpack.c.l.b16 %v164
    %v310 = vunpack.c.h.b16 %v164
    %v311 = vunpack.c.l.b16 %v165
    %v312 = vunpack.c.h.b16 %v165
    %v313 = vunpack.c.l.b16 %v166
    %v314 = vunpack.c.h.b16 %v166
    %v315 = vunpack.c.l.b16 %v167
    %v316 = vunpack.c.h.b16 %v167
    %v317 = vunpack.c.l.b16 %v168
    %v318 = vunpack.c.h.b16 %v168
    %v319 = vunpack.c.l.b16 %v169
    %v320 = vunpack.c.h.b16 %v169
    %v321 = vunpack.c.l.b16 %v170
    %v322 = vunpack.c.h.b16 %v170
    %v323 = vpack.c.b16 %v293, %v291
    %v324 = vpack.c.b16 %v294, %v292
    %v325 = vpack.c.b16 %v297, %v295
    %v326 = vpack.c.b16 %v298, %v296
    %v327 = vpack.c.b16 %v301, %v299
    %v328 = vpack.c.b16 %v302, %v300
    %v329 = vpack.c.b16 %v305, %v303
    %v330 = vpack.c.b16 %v306, %v304
    %v331 = vpack.c.b16 %v309, %v307
    %v332 = vpack.c.b16 %v310, %v308
    %v333 = vpack.c.b16 %v313, %v311
    %v334 = vpack.c.b16 %v314, %v312
    %v335 = vpack.c.b16 %v317, %v315
    %v336 = vpack.c.b16 %v318, %v316
    %v337 = vpack.c.b16 %v321, %v319
    %v338 = vpack.c.b16 %v322, %v320
    %355 = vmatprep.subr.bf16.mxu0 %v338
    %356 = vmatpush1.bf16.msra.mxu0 %v337
    %357 = vmatprep.subr.bf16.mxu0 %v336
    %358 = vmatpush1.bf16.msra.mxu0 %v335
    %359 = vmatprep.subr.bf16.mxu0 %v334
    %360 = vmatpush1.bf16.msra.mxu0 %v333
    %361 = vmatprep.subr.bf16.mxu0 %v332
    %362 = vmatpush1.bf16.msra.mxu0 %v331
    %363 = vmatprep.subr.bf16.mxu0 %v330
    %364 = vmatpush1.bf16.msra.mxu0 %v329
    %365 = vmatprep.subr.bf16.mxu0 %v328
    %366 = vmatpush1.bf16.msra.mxu0 %v327
    %367 = vmatprep.subr.bf16.mxu0 %v326
    %368 = vmatpush1.bf16.msra.mxu0 %v325
    %369 = vmatprep.subr.bf16.mxu0 %v324
    %370 = vmatpush1.bf16.msra.mxu0 %v323
    %371 = vmatprep.subr.bf16.mxu0 0
    %372 = vmatpush2.bf16.msra.mxu0 0
    %373 = vmatprep.subr.bf16.mxu0 0
    %374 = vmatpush2.bf16.msra.mxu0 0
    %375 = vmatprep.subr.bf16.mxu0 0
    %376 = vmatpush2.bf16.msra.mxu0 0
    %377 = vmatprep.subr.bf16.mxu0 0
    %378 = vmatpush2.bf16.msra.mxu0 0
    %379 = vmatprep.subr.bf16.mxu0 0
    %380 = vmatpush2.bf16.msra.mxu0 0
    %381 = vmatprep.subr.bf16.mxu0 0
    %382 = vmatpush2.bf16.msra.mxu0 0
    %383 = vmatprep.subr.bf16.mxu0 0
    %384 = vmatpush2.bf16.msra.mxu0 0
    %385 = vmatprep.subr.bf16.mxu0 0
    %386 = vmatpush2.bf16.msra.mxu0 0
    %387 = vmatprep.mubr.bf16.mxu0 0
    %388 = vmatmul.mubr.bf16.gmra.mxu0 %v273
    %v389 = vpop.f32.mrf.mxu0
    %v390 = vadd.f32 0.0, %v389
    %v391 = vpop.f32.mrf.mxu0
    %v392 = vadd.f32 0.0, %v391
    %v393 = vpop.f32.mrf.mxu0
    %v394 = vpop.f32.mrf.mxu0
    %395 = vdwg.mxu0
    %v428 = vunpack.c.l.b16 %v171
    %v429 = vunpack.c.h.b16 %v171
    %v430 = vunpack.c.l.b16 %v172
    %v431 = vunpack.c.h.b16 %v172
    %v432 = vunpack.c.l.b16 %v173
    %v433 = vunpack.c.h.b16 %v173
    %v434 = vunpack.c.l.b16 %v174
    %v435 = vunpack.c.h.b16 %v174
    %v436 = vunpack.c.l.b16 %v175
    %v437 = vunpack.c.h.b16 %v175
    %v438 = vunpack.c.l.b16 %v176
    %v439 = vunpack.c.h.b16 %v176
    %v440 = vunpack.c.l.b16 %v177
    %v441 = vunpack.c.h.b16 %v177
    %v442 = vunpack.c.l.b16 %v178
    %v443 = vunpack.c.h.b16 %v178
    %v444 = vunpack.c.l.b16 %v179
    %v445 = vunpack.c.h.b16 %v179
    %v446 = vunpack.c.l.b16 %v180
    %v447 = vunpack.c.h.b16 %v180
    %v448 = vunpack.c.l.b16 %v181
    %v449 = vunpack.c.h.b16 %v181
    %v450 = vunpack.c.l.b16 %v182
    %v451 = vunpack.c.h.b16 %v182
    %v452 = vunpack.c.l.b16 %v183
    %v453 = vunpack.c.h.b16 %v183
    %v454 = vunpack.c.l.b16 %v184
    %v455 = vunpack.c.h.b16 %v184
    %v456 = vunpack.c.l.b16 %v185
    %v457 = vunpack.c.h.b16 %v185
    %v458 = vunpack.c.l.b16 %v186
    %v459 = vunpack.c.h.b16 %v186
    %v460 = vunpack.c.l.b16 %v187
    %v461 = vunpack.c.h.b16 %v187
    %v462 = vunpack.c.l.b16 %v188
    %v463 = vunpack.c.h.b16 %v188
    %v464 = vunpack.c.l.b16 %v189
    %v465 = vunpack.c.h.b16 %v189
    %v466 = vunpack.c.l.b16 %v190
    %v467 = vunpack.c.h.b16 %v190
    %v468 = vunpack.c.l.b16 %v191
    %v469 = vunpack.c.h.b16 %v191
    %v470 = vunpack.c.l.b16 %v192
    %v471 = vunpack.c.h.b16 %v192
    %v472 = vunpack.c.l.b16 %v193
    %v473 = vunpack.c.h.b16 %v193
    %v474 = vunpack.c.l.b16 %v194
    %v475 = vunpack.c.h.b16 %v194
    %v476 = vunpack.c.l.b16 %v195
    %v477 = vunpack.c.h.b16 %v195
    %v478 = vunpack.c.l.b16 %v196
    %v479 = vunpack.c.h.b16 %v196
    %v480 = vunpack.c.l.b16 %v197
    %v481 = vunpack.c.h.b16 %v197
    %v482 = vunpack.c.l.b16 %v198
    %v483 = vunpack.c.h.b16 %v198
    %v484 = vunpack.c.l.b16 %v199
    %v485 = vunpack.c.h.b16 %v199
    %v486 = vunpack.c.l.b16 %v200
    %v487 = vunpack.c.h.b16 %v200
    %v488 = vunpack.c.l.b16 %v201
    %v489 = vunpack.c.h.b16 %v201
    %v490 = vunpack.c.l.b16 %v202
    %v491 = vunpack.c.h.b16 %v202
    %v492 = vpack.c.b16 %v432, %v428
    %v493 = vpack.c.b16 %v433, %v429
    %v494 = vpack.c.b16 %v434, %v430
    %v495 = vpack.c.b16 %v435, %v431
    %v496 = vpack.c.b16 %v440, %v436
    %v497 = vpack.c.b16 %v441, %v437
    %v498 = vpack.c.b16 %v442, %v438
    %v499 = vpack.c.b16 %v443, %v439
    %v500 = vpack.c.b16 %v448, %v444
    %v501 = vpack.c.b16 %v449, %v445
    %v502 = vpack.c.b16 %v450, %v446
    %v503 = vpack.c.b16 %v451, %v447
    %v504 = vpack.c.b16 %v456, %v452
    %v505 = vpack.c.b16 %v457, %v453
    %v506 = vpack.c.b16 %v458, %v454
    %v507 = vpack.c.b16 %v459, %v455
    %v508 = vpack.c.b16 %v464, %v460
    %v509 = vpack.c.b16 %v465, %v461
    %v510 = vpack.c.b16 %v466, %v462
    %v511 = vpack.c.b16 %v467, %v463
    %v512 = vpack.c.b16 %v472, %v468
    %v513 = vpack.c.b16 %v473, %v469
    %v514 = vpack.c.b16 %v474, %v470
    %v515 = vpack.c.b16 %v475, %v471
    %v516 = vpack.c.b16 %v480, %v476
    %v517 = vpack.c.b16 %v481, %v477
    %v518 = vpack.c.b16 %v482, %v478
    %v519 = vpack.c.b16 %v483, %v479
    %v520 = vpack.c.b16 %v488, %v484
    %v521 = vpack.c.b16 %v489, %v485
    %v522 = vpack.c.b16 %v490, %v486
    %v523 = vpack.c.b16 %v491, %v487
    %556 = vmatprep.subr.bf16.mxu0 %v521
    %557 = vmatpush1.bf16.msra.mxu0 %v520
    %558 = vmatprep.subr.bf16.mxu0 %v517
    %559 = vmatpush1.bf16.msra.mxu0 %v516
    %560 = vmatprep.subr.bf16.mxu0 %v513
    %561 = vmatpush1.bf16.msra.mxu0 %v512
    %562 = vmatprep.subr.bf16.mxu0 %v509
    %563 = vmatpush1.bf16.msra.mxu0 %v508
    %564 = vmatprep.subr.bf16.mxu0 %v505
    %565 = vmatpush1.bf16.msra.mxu0 %v504
    %566 = vmatprep.subr.bf16.mxu0 %v501
    %567 = vmatpush1.bf16.msra.mxu0 %v500
    %568 = vmatprep.subr.bf16.mxu0 %v497
    %569 = vmatpush1.bf16.msra.mxu0 %v496
    %570 = vmatprep.subr.bf16.mxu0 %v493
    %571 = vmatpush1.bf16.msra.mxu0 %v492
    %572 = vmatprep.subr.bf16.mxu0 0
    %573 = vmatpush2.bf16.msra.mxu0 0
    %574 = vmatprep.subr.bf16.mxu0 0
    %575 = vmatpush2.bf16.msra.mxu0 0
    %576 = vmatprep.subr.bf16.mxu0 0
    %577 = vmatpush2.bf16.msra.mxu0 0
    %578 = vmatprep.subr.bf16.mxu0 0
    %579 = vmatpush2.bf16.msra.mxu0 0
    %580 = vmatprep.subr.bf16.mxu0 0
    %581 = vmatpush2.bf16.msra.mxu0 0
    %582 = vmatprep.subr.bf16.mxu0 0
    %583 = vmatpush2.bf16.msra.mxu0 0
    %584 = vmatprep.subr.bf16.mxu0 0
    %585 = vmatpush2.bf16.msra.mxu0 0
    %586 = vmatprep.subr.bf16.mxu0 0
    %587 = vmatpush2.bf16.msra.mxu0 0
    %588 = vmatprep.mubr.bf16.mxu0 0
    %589 = vmatmul.mubr.bf16.gmra.mxu0 %v274
    %v590 = vpop.f32.mrf.mxu0
    %v591 = vadd.f32 0.0, %v590
    %v592 = vpop.f32.mrf.mxu0
    %v593 = vadd.f32 0.0, %v592
    %v594 = vpop.f32.mrf.mxu0
    %v595 = vpop.f32.mrf.mxu0
    %596 = vdwg.mxu0
    %597 = vmatprep.subr.bf16.mxu0 %v523
    %598 = vmatpush1.bf16.msra.mxu0 %v522
    %599 = vmatprep.subr.bf16.mxu0 %v519
    %600 = vmatpush1.bf16.msra.mxu0 %v518
    %601 = vmatprep.subr.bf16.mxu0 %v515
    %602 = vmatpush1.bf16.msra.mxu0 %v514
    %603 = vmatprep.subr.bf16.mxu0 %v511
    %604 = vmatpush1.bf16.msra.mxu0 %v510
    %605 = vmatprep.subr.bf16.mxu0 %v507
    %606 = vmatpush1.bf16.msra.mxu0 %v506
    %607 = vmatprep.subr.bf16.mxu0 %v503
    %608 = vmatpush1.bf16.msra.mxu0 %v502
    %609 = vmatprep.subr.bf16.mxu0 %v499
    %610 = vmatpush1.bf16.msra.mxu0 %v498
    %611 = vmatprep.subr.bf16.mxu0 %v495
    %612 = vmatpush1.bf16.msra.mxu0 %v494
    %613 = vmatprep.subr.bf16.mxu0 0
    %614 = vmatpush2.bf16.msra.mxu0 0
    %615 = vmatprep.subr.bf16.mxu0 0
    %616 = vmatpush2.bf16.msra.mxu0 0
    %617 = vmatprep.subr.bf16.mxu0 0
    %618 = vmatpush2.bf16.msra.mxu0 0
    %619 = vmatprep.subr.bf16.mxu0 0
    %620 = vmatpush2.bf16.msra.mxu0 0
    %621 = vmatprep.subr.bf16.mxu0 0
    %622 = vmatpush2.bf16.msra.mxu0 0
    %623 = vmatprep.subr.bf16.mxu0 0
    %624 = vmatpush2.bf16.msra.mxu0 0
    %625 = vmatprep.subr.bf16.mxu0 0
    %626 = vmatpush2.bf16.msra.mxu0 0
    %627 = vmatprep.subr.bf16.mxu0 0
    %628 = vmatpush2.bf16.msra.mxu0 0
    %629 = vmatprep.mubr.bf16.mxu0 0
    %630 = vmatmul.mubr.bf16.gmra.mxu0 %v274
    %v631 = vpop.f32.mrf.mxu0
    %v632 = vadd.f32 0.0, %v631
    %v633 = vpop.f32.mrf.mxu0
    %v634 = vadd.f32 0.0, %v633
    %v635 = vpop.f32.mrf.mxu0
    %v636 = vpop.f32.mrf.mxu0
    %637 = vdwg.mxu0
    %v638 = vadd.f32 %v390, %v591
    %v639 = vadd.f32 %v638, %v267
    %vm640 = vcmask 1040384
    %v641 = vsel %vm640, %v639, -inf
    %642 = vmax.xlane.f32.xlu0 %v641
    %v643 = vpop.xlane.xlu0 %642
    %v644 = vsub.f32 %v639, %v643
    %v645 = vmul.f32 %v644, 1.442695
    %v646 = vpow.pop %v645
    %v647 = vsel %vm640, %v646, 0.0
    %648 = vadd.xlane.f32.xlu0 %v647
    %v649 = vpop.xlane.xlu0 %648
    %v650 = vrcp.pop %v649
    %v651 = vmul.f32 %v646, %v650
    %v652 = vpack.c.bf16 %v651, %v651
    %v669 = vunpack.c.l.b16 %v139
    %v670 = vunpack.c.l.b16 %v140
    %v671 = vunpack.c.l.b16 %v141
    %v672 = vunpack.c.l.b16 %v142
    %v673 = vunpack.c.l.b16 %v143
    %v674 = vunpack.c.l.b16 %v144
    %v675 = vunpack.c.l.b16 %v145
    %v676 = vunpack.c.l.b16 %v146
    %v677 = vunpack.c.l.b16 %v147
    %v678 = vunpack.c.l.b16 %v148
    %v679 = vunpack.c.l.b16 %v149
    %v680 = vunpack.c.l.b16 %v150
    %v681 = vunpack.c.l.b16 %v151
    %v682 = vunpack.c.l.b16 %v152
    %v683 = vunpack.c.l.b16 %v153
    %v684 = vunpack.c.l.b16 %v154
    %v685 = vpack.c.b16 %v670, %v669
    %v686 = vpack.c.b16 %v672, %v671
    %v687 = vpack.c.b16 %v674, %v673
    %v688 = vpack.c.b16 %v676, %v675
    %v689 = vpack.c.b16 %v678, %v677
    %v690 = vpack.c.b16 %v680, %v679
    %v691 = vpack.c.b16 %v682, %v681
    %v692 = vpack.c.b16 %v684, %v683
    %701 = vmatprep.subr.bf16.mxu0 0
    %702 = vmatpush1.bf16.msra.mxu0 %v692
    %703 = vmatprep.subr.bf16.mxu0 0
    %704 = vmatpush1.bf16.msra.mxu0 %v691
    %705 = vmatprep.subr.bf16.mxu0 0
    %706 = vmatpush1.bf16.msra.mxu0 %v690
    %707 = vmatprep.subr.bf16.mxu0 0
    %708 = vmatpush1.bf16.msra.mxu0 %v689
    %709 = vmatprep.subr.bf16.mxu0 0
    %710 = vmatpush1.bf16.msra.mxu0 %v688
    %711 = vmatprep.subr.bf16.mxu0 0
    %712 = vmatpush1.bf16.msra.mxu0 %v687
    %713 = vmatprep.subr.bf16.mxu0 0
    %714 = vmatpush1.bf16.msra.mxu0 %v686
    %715 = vmatprep.subr.bf16.mxu0 0
    %716 = vmatpush1.bf16.msra.mxu0 %v685
    %717 = vmatprep.subr.bf16.mxu0 0
    %718 = vmatpush2.bf16.msra.mxu0 0
    %719 = vmatprep.subr.bf16.mxu0 0
    %720 = vmatpush2.bf16.msra.mxu0 0
    %721 = vmatprep.subr.bf16.mxu0 0
    %722 = vmatpush2.bf16.msra.mxu0 0
    %723 = vmatprep.subr.bf16.mxu0 0
    %724 = vmatpush2.bf16.msra.mxu0 0
    %725 = vmatprep.subr.bf16.mxu0 0
    %726 = vmatpush2.bf16.msra.mxu0 0
    %727 = vmatprep.subr.bf16.mxu0 0
    %728 = vmatpush2.bf16.msra.mxu0 0
    %729 = vmatprep.subr.bf16.mxu0 0
    %730 = vmatpush2.bf16.msra.mxu0 0
    %731 = vmatprep.subr.bf16.mxu0 0
    %732 = vmatpush2.bf16.msra.mxu0 0
    %733 = vmatprep.mubr.bf16.mxu0 0
    %734 = vmatmul.mubr.bf16.gmra.mxu0 %v652
    %v735 = vpop.f32.mrf.mxu0
    %v736 = vadd.f32 0.0, %v735
    %v737 = vpop.f32.mrf.mxu0
    %v738 = vpop.f32.mrf.mxu0
    %v739 = vpop.f32.mrf.mxu0
    %740 = vdwg.mxu0
    %v741 = vpack.c.bf16 %v736, %v736
    %v758 = vunpack.c.l.b16 %v203
    %v759 = vunpack.c.l.b16 %v204
    %v760 = vunpack.c.l.b16 %v205
    %v761 = vunpack.c.l.b16 %v206
    %v762 = vunpack.c.l.b16 %v207
    %v763 = vunpack.c.l.b16 %v208
    %v764 = vunpack.c.l.b16 %v209
    %v765 = vunpack.c.l.b16 %v210
    %v766 = vunpack.c.l.b16 %v211
    %v767 = vunpack.c.l.b16 %v212
    %v768 = vunpack.c.l.b16 %v213
    %v769 = vunpack.c.l.b16 %v214
    %v770 = vunpack.c.l.b16 %v215
    %v771 = vunpack.c.l.b16 %v216
    %v772 = vunpack.c.l.b16 %v217
    %v773 = vunpack.c.l.b16 %v218
    %v774 = vpack.c.b16 %v759, %v758
    %v775 = vpack.c.b16 %v761, %v760
    %v776 = vpack.c.b16 %v763, %v762
    %v777 = vpack.c.b16 %v765, %v764
    %v778 = vpack.c.b16 %v767, %v766
    %v779 = vpack.c.b16 %v769, %v768
    %v780 = vpack.c.b16 %v771, %v770
    %v781 = vpack.c.b16 %v773, %v772
    %790 = vmatprep.subr.bf16.mxu0 0
    %791 = vmatpush1.bf16.msra.mxu0 %v781
    %792 = vmatprep.subr.bf16.mxu0 0
    %793 = vmatpush1.bf16.msra.mxu0 %v780
    %794 = vmatprep.subr.bf16.mxu0 0
    %795 = vmatpush1.bf16.msra.mxu0 %v779
    %796 = vmatprep.subr.bf16.mxu0 0
    %797 = vmatpush1.bf16.msra.mxu0 %v778
    %798 = vmatprep.subr.bf16.mxu0 0
    %799 = vmatpush1.bf16.msra.mxu0 %v777
    %800 = vmatprep.subr.bf16.mxu0 0
    %801 = vmatpush1.bf16.msra.mxu0 %v776
    %802 = vmatprep.subr.bf16.mxu0 0
    %803 = vmatpush1.bf16.msra.mxu0 %v775
    %804 = vmatprep.subr.bf16.mxu0 0
    %805 = vmatpush1.bf16.msra.mxu0 %v774
    %806 = vmatprep.subr.bf16.mxu0 0
    %807 = vmatpush2.bf16.msra.mxu0 0
    %808 = vmatprep.subr.bf16.mxu0 0
    %809 = vmatpush2.bf16.msra.mxu0 0
    %810 = vmatprep.subr.bf16.mxu0 0
    %811 = vmatpush2.bf16.msra.mxu0 0
    %812 = vmatprep.subr.bf16.mxu0 0
    %813 = vmatpush2.bf16.msra.mxu0 0
    %814 = vmatprep.subr.bf16.mxu0 0
    %815 = vmatpush2.bf16.msra.mxu0 0
    %816 = vmatprep.subr.bf16.mxu0 0
    %817 = vmatpush2.bf16.msra.mxu0 0
    %818 = vmatprep.subr.bf16.mxu0 0
    %819 = vmatpush2.bf16.msra.mxu0 0
    %820 = vmatprep.subr.bf16.mxu0 0
    %821 = vmatpush2.bf16.msra.mxu0 0
    %822 = vmatprep.mubr.bf16.mxu0 0
    %823 = vmatmul.mubr.bf16.gmra.mxu0 %v741
    %v824 = vpop.f32.mrf.mxu0
    %v825 = vadd.f32 0.0, %v824
    %v826 = vpop.f32.mrf.mxu0
    %v827 = vpop.f32.mrf.mxu0
    %v828 = vpop.f32.mrf.mxu0
    %829 = vdwg.mxu0
    %v830 = vadd.f32 %v392, %v825
    %v831 = vadd.f32 %v830, %v268
    %v832 = vmax.f32 %v831, 0.0
    %v833 = vpack.c.bf16 %v832, %v832
    %v866 = vunpack.c.l.b16 %v219
    %v867 = vunpack.c.h.b16 %v219
    %v868 = vunpack.c.l.b16 %v220
    %v869 = vunpack.c.l.b16 %v221
    %v870 = vunpack.c.h.b16 %v221
    %v871 = vunpack.c.l.b16 %v222
    %v872 = vunpack.c.l.b16 %v223
    %v873 = vunpack.c.h.b16 %v223
    %v874 = vunpack.c.l.b16 %v224
    %v875 = vunpack.c.l.b16 %v225
    %v876 = vunpack.c.h.b16 %v225
    %v877 = vunpack.c.l.b16 %v226
    %v878 = vunpack.c.l.b16 %v227
    %v879 = vunpack.c.h.b16 %v227
    %v880 = vunpack.c.l.b16 %v228
    %v881 = vunpack.c.l.b16 %v229
    %v882 = vunpack.c.h.b16 %v229
    %v883 = vunpack.c.l.b16 %v230
    %v884 = vunpack.c.l.b16 %v231
    %v885 = vunpack.c.h.b16 %v231
    %v886 = vunpack.c.l.b16 %v232
    %v887 = vunpack.c.l.b16 %v233
    %v888 = vunpack.c.h.b16 %v233
    %v889 = vunpack.c.l.b16 %v234
    %v890 = vunpack.c.l.b16 %v235
    %v891 = vunpack.c.h.b16 %v235
    %v892 = vunpack.c.l.b16 %v236
    %v893 = vunpack.c.l.b16 %v237
    %v894 = vunpack.c.h.b16 %v237
    %v895 = vunpack.c.l.b16 %v238
    %v896 = vunpack.c.l.b16 %v239
    %v897 = vunpack.c.h.b16 %v239
    %v898 = vunpack.c.l.b16 %v240
    %v899 = vunpack.c.l.b16 %v241
    %v900 = vunpack.c.h.b16 %v241
    %v901 = vunpack.c.l.b16 %v242
    %v902 = vunpack.c.l.b16 %v243
    %v903 = vunpack.c.h.b16 %v243
    %v904 = vunpack.c.l.b16 %v244
    %v905 = vunpack.c.l.b16 %v245
    %v906 = vunpack.c.h.b16 %v245
    %v907 = vunpack.c.l.b16 %v246
    %v908 = vunpack.c.l.b16 %v247
    %v909 = vunpack.c.h.b16 %v247
    %v910 = vunpack.c.l.b16 %v248
    %v911 = vunpack.c.l.b16 %v249
    %v912 = vunpack.c.h.b16 %v249
    %v913 = vunpack.c.l.b16 %v250
    %v914 = vpack.c.b16 %v869, %v866
    %v915 = vpack.c.b16 %v870, %v867
    %v916 = vpack.c.b16 %v871, %v868
    %v917 = vpack.c.b16 %v875, %v872
    %v918 = vpack.c.b16 %v876, %v873
    %v919 = vpack.c.b16 %v877, %v874
    %v920 = vpack.c.b16 %v881, %v878
    %v921 = vpack.c.b16 %v882, %v879
    %v922 = vpack.c.b16 %v883, %v880
    %v923 = vpack.c.b16 %v887, %v884
    %v924 = vpack.c.b16 %v888, %v885
    %v925 = vpack.c.b16 %v889, %v886
    %v926 = vpack.c.b16 %v893, %v890
    %v927 = vpack.c.b16 %v894, %v891
    %v928 = vpack.c.b16 %v895, %v892
    %v929 = vpack.c.b16 %v899, %v896
    %v930 = vpack.c.b16 %v900, %v897
    %v931 = vpack.c.b16 %v901, %v898
    %v932 = vpack.c.b16 %v905, %v902
    %v933 = vpack.c.b16 %v906, %v903
    %v934 = vpack.c.b16 %v907, %v904
    %v935 = vpack.c.b16 %v911, %v908
    %v936 = vpack.c.b16 %v912, %v909
    %v937 = vpack.c.b16 %v913, %v910
    %v963 = vlaneseq
    %v964 = vshrl.u32 %v963, 7
    %v965 = vsub.s32 0, %v964
    %v966 = vrot.slane %v269, %v965
    %v967 = vlaneseq
    %v968 = vshrl.u32 %v967, 7
    %v969 = vsub.s32 1, %v968
    %v970 = vrot.slane %v269, %v969
    %v971 = vlaneseq
    %v972 = vshrl.u32 %v971, 7
    %v973 = vsub.s32 2, %v972
    %v974 = vrot.slane %v269, %v973
    %978 = vmatprep.subr.bf16.mxu0 %v936
    %979 = vmatpush1.bf16.msra.mxu0 %v935
    %980 = vmatprep.subr.bf16.mxu0 %v933
    %981 = vmatpush1.bf16.msra.mxu0 %v932
    %982 = vmatprep.subr.bf16.mxu0 %v930
    %983 = vmatpush1.bf16.msra.mxu0 %v929
    %984 = vmatprep.subr.bf16.mxu0 %v927
    %985 = vmatpush1.bf16.msra.mxu0 %v926
    %986 = vmatprep.subr.bf16.mxu0 %v924
    %987 = vmatpush1.bf16.msra.mxu0 %v923
    %988 = vmatprep.subr.bf16.mxu0 %v921
    %989 = vmatpush1.bf16.msra.mxu0 %v920
    %990 = vmatprep.subr.bf16.mxu0 %v918
    %991 = vmatpush1.bf16.msra.mxu0 %v917
    %992 = vmatprep.subr.bf16.mxu0 %v915
    %993 = vmatpush1.bf16.msra.mxu0 %v914
    %994 = vmatprep.subr.bf16.mxu0 0
    %995 = vmatpush2.bf16.msra.mxu0 0
    %996 = vmatprep.subr.bf16.mxu0 0
    %997 = vmatpush2.bf16.msra.mxu0 0
    %998 = vmatprep.subr.bf16.mxu0 0
    %999 = vmatpush2.bf16.msra.mxu0 0
    %1000 = vmatprep.subr.bf16.mxu0 0
    %1001 = vmatpush2.bf16.msra.mxu0 0
    %1002 = vmatprep.subr.bf16.mxu0 0
    %1003 = vmatpush2.bf16.msra.mxu0 0
    %1004 = vmatprep.subr.bf16.mxu0 0
    %1005 = vmatpush2.bf16.msra.mxu0 0
    %1006 = vmatprep.subr.bf16.mxu0 0
    %1007 = vmatpush2.bf16.msra.mxu0 0
    %1008 = vmatprep.subr.bf16.mxu0 0
    %1009 = vmatpush2.bf16.msra.mxu0 0
    %1010 = vmatprep.mubr.bf16.mxu0 0
    %1011 = vmatmul.mubr.bf16.gmra.mxu0 %v833
    %v1012 = vpop.f32.mrf.mxu0
    %v1013 = vadd.f32 %v966, %v1012
    %v1014 = vpop.f32.mrf.mxu0
    %v1015 = vadd.f32 %v970, %v1014
    %v1016 = vpop.f32.mrf.mxu0
    %v1017 = vpop.f32.mrf.mxu0
    %1018 = vdwg.mxu0
    %1019 = vmatprep.subr.bf16.mxu0 0
    %1020 = vmatpush1.bf16.msra.mxu0 %v937
    %1021 = vmatprep.subr.bf16.mxu0 0
    %1022 = vmatpush1.bf16.msra.mxu0 %v934
    %1023 = vmatprep.subr.bf16.mxu0 0
    %1024 = vmatpush1.bf16.msra.mxu0 %v931
    %1025 = vmatprep.subr.bf16.mxu0 0
    %1026 = vmatpush1.bf16.msra.mxu0 %v928
    %1027 = vmatprep.subr.bf16.mxu0 0
    %1028 = vmatpush1.bf16.msra.mxu0 %v925
    %1029 = vmatprep.subr.bf16.mxu0 0
    %1030 = vmatpush1.bf16.msra.mxu0 %v922
    %1031 = vmatprep.subr.bf16.mxu0 0
    %1032 = vmatpush1.bf16.msra.mxu0 %v919
    %1033 = vmatprep.subr.bf16.mxu0 0
    %1034 = vmatpush1.bf16.msra.mxu0 %v916
    %1035 = vmatprep.subr.bf16.mxu0 0
    %1036 = vmatpush2.bf16.msra.mxu0 0
    %1037 = vmatprep.subr.bf16.mxu0 0
    %1038 = vmatpush2.bf16.msra.mxu0 0
    %1039 = vmatprep.subr.bf16.mxu0 0
    %1040 = vmatpush2.bf16.msra.mxu0 0
    %1041 = vmatprep.subr.bf16.mxu0 0
    %1042 = vmatpush2.bf16.msra.mxu0 0
    %1043 = vmatprep.subr.bf16.mxu0 0
    %1044 = vmatpush2.bf16.msra.mxu0 0
    %1045 = vmatprep.subr.bf16.mxu0 0
    %1046 = vmatpush2.bf16.msra.mxu0 0
    %1047 = vmatprep.subr.bf16.mxu0 0
    %1048 = vmatpush2.bf16.msra.mxu0 0
    %1049 = vmatprep.subr.bf16.mxu0 0
    %1050 = vmatpush2.bf16.msra.mxu0 0
    %1051 = vmatprep.mubr.bf16.mxu0 0
    %1052 = vmatmul.mubr.bf16.gmra.mxu0 %v833
    %v1053 = vpop.f32.mrf.mxu0
    %v1054 = vadd.f32 %v974, %v1053
    %v1055 = vpop.f32.mrf.mxu0
    %v1056 = vpop.f32.mrf.mxu0
    %v1057 = vpop.f32.mrf.mxu0
    %1058 = vdwg.mxu0
    %v1060 = vlaneseq
    %v1061 = vshrl.u32 %v1060, 7
    %v1062 = vsub.s32 0, %v1061
    %v1063 = vrot.slane %v270, %v1062
    %v1064 = vlaneseq
    %v1065 = vshrl.u32 %v1064, 7
    %v1066 = vsub.s32 1, %v1065
    %v1067 = vrot.slane %v270, %v1066
    %v1068 = vlaneseq
    %v1069 = vshrl.u32 %v1068, 7
    %v1070 = vsub.s32 2, %v1069
    %v1071 = vrot.slane %v270, %v1070
    %v1075 = vadd.f32 %v593, %v1063
    %v1076 = vadd.f32 %v632, %v1067
    %v1077 = vadd.f32 %v634, %v1071
    %v1078 = vadd.f32 %v1013, %v1075
    %v1079 = vxor.u32 %v1078, 2147483648
    %v1080 = vmul.f32 %v1079, 1.442695
    %v1081 = vpow.pop %v1080
    %v1082 = vadd.f32 %v1081, 1.0
    %v1083 = vrcp.pop %v1082
    %v1084 = vmul.f32 1.0, %v1083
    %v1085 = vadd.f32 %v1015, %v1076
    %v1086 = vxor.u32 %v1085, 2147483648
    %v1087 = vmul.f32 %v1086, 1.442695
    %v1088 = vpow.pop %v1087
    %v1089 = vadd.f32 %v1088, 1.0
    %v1090 = vrcp.pop %v1089
    %v1091 = vmul.f32 1.0, %v1090
    %v1092 = vmul.f32 %v1084, %v1077
    %v1093 = vadd.f32 %v1054, %v1092
    %v1094 = vtanh.pop %v1093
    %v1095 = vsub.f32 1.0, %v1091
    %v1096 = vmul.f32 %v1095, %v1094
    %v1097 = vmul.f32 %v1091, %v272
    %v1098 = vadd.f32 %v1096, %v1097
    %v1099 = vpack.c.bf16 %v1098, %v1098
    %v1116 = vunpack.c.l.b16 %v251
    %v1117 = vunpack.c.l.b16 %v252
    %v1118 = vunpack.c.l.b16 %v253
    %v1119 = vunpack.c.l.b16 %v254
    %v1120 = vunpack.c.l.b16 %v255
    %v1121 = vunpack.c.l.b16 %v256
    %v1122 = vunpack.c.l.b16 %v257
    %v1123 = vunpack.c.l.b16 %v258
    %v1124 = vunpack.c.l.b16 %v259
    %v1125 = vunpack.c.l.b16 %v260
    %v1126 = vunpack.c.l.b16 %v261
    %v1127 = vunpack.c.l.b16 %v262
    %v1128 = vunpack.c.l.b16 %v263
    %v1129 = vunpack.c.l.b16 %v264
    %v1130 = vunpack.c.l.b16 %v265
    %v1131 = vunpack.c.l.b16 %v266
    %v1132 = vpack.c.b16 %v1117, %v1116
    %v1133 = vpack.c.b16 %v1119, %v1118
    %v1134 = vpack.c.b16 %v1121, %v1120
    %v1135 = vpack.c.b16 %v1123, %v1122
    %v1136 = vpack.c.b16 %v1125, %v1124
    %v1137 = vpack.c.b16 %v1127, %v1126
    %v1138 = vpack.c.b16 %v1129, %v1128
    %v1139 = vpack.c.b16 %v1131, %v1130
    %1148 = vmatprep.subr.bf16.mxu0 0
    %1149 = vmatpush1.bf16.msra.mxu0 %v1139
    %1150 = vmatprep.subr.bf16.mxu0 0
    %1151 = vmatpush1.bf16.msra.mxu0 %v1138
    %1152 = vmatprep.subr.bf16.mxu0 0
    %1153 = vmatpush1.bf16.msra.mxu0 %v1137
    %1154 = vmatprep.subr.bf16.mxu0 0
    %1155 = vmatpush1.bf16.msra.mxu0 %v1136
    %1156 = vmatprep.subr.bf16.mxu0 0
    %1157 = vmatpush1.bf16.msra.mxu0 %v1135
    %1158 = vmatprep.subr.bf16.mxu0 0
    %1159 = vmatpush1.bf16.msra.mxu0 %v1134
    %1160 = vmatprep.subr.bf16.mxu0 0
    %1161 = vmatpush1.bf16.msra.mxu0 %v1133
    %1162 = vmatprep.subr.bf16.mxu0 0
    %1163 = vmatpush1.bf16.msra.mxu0 %v1132
    %1164 = vmatprep.subr.bf16.mxu0 0
    %1165 = vmatpush2.bf16.msra.mxu0 0
    %1166 = vmatprep.subr.bf16.mxu0 0
    %1167 = vmatpush2.bf16.msra.mxu0 0
    %1168 = vmatprep.subr.bf16.mxu0 0
    %1169 = vmatpush2.bf16.msra.mxu0 0
    %1170 = vmatprep.subr.bf16.mxu0 0
    %1171 = vmatpush2.bf16.msra.mxu0 0
    %1172 = vmatprep.subr.bf16.mxu0 0
    %1173 = vmatpush2.bf16.msra.mxu0 0
    %1174 = vmatprep.subr.bf16.mxu0 0
    %1175 = vmatpush2.bf16.msra.mxu0 0
    %1176 = vmatprep.subr.bf16.mxu0 0
    %1177 = vmatpush2.bf16.msra.mxu0 0
    %1178 = vmatprep.subr.bf16.mxu0 0
    %1179 = vmatpush2.bf16.msra.mxu0 0
    %1180 = vmatprep.mubr.bf16.mxu0 0
    %1181 = vmatmul.mubr.bf16.gmra.mxu0 %v1099
    %v1182 = vpop.f32.mrf.mxu0
    %v1183 = vadd.f32 %v271, %v1182
    %v1184 = vpop.f32.mrf.mxu0
    %v1185 = vpop.f32.mrf.mxu0
    %v1186 = vpop.f32.mrf.mxu0
    %1187 = vdwg.mxu0
    %v1188 = vsel %vm640, %v1183, -inf
    %1189 = vmax.xlane.f32.xlu0 %v1188
    %v1190 = vpop.xlane.xlu0 %1189
    %v1191 = vsub.f32 %v1183, %v1190
    %v1192 = vmul.f32 %v1191, 1.442695
    %v1193 = vpow.pop %v1192
    %v1194 = vsel %vm640, %v1193, 0.0
    %1195 = vadd.xlane.f32.xlu0 %v1194
    %v1196 = vpop.xlane.xlu0 %1195
    %v1197 = vlog2.pop %v1196
    %v1198 = vmul.f32 %v1197, 0.6931472
    %v1199 = vadd.f32 %v1190, %v1198
    %v1200 = vsub.f32 %v1183, %v1199
    %1201 = vst [vmem:[#allocation14] sm:$0x1] %v1200
    %1202 = vst [vmem:[#allocation14 + $0x8] sm:$0x1] %v1098
    %1203 = vst [vmem:[#allocation14 + $0x10] sm:$0x1] %v651
    %v1204 = vld [vmem:[#allocation2] sm:$0x1]
    %v1206 = vunpack.c.l.b16 %v1204
    %v1207 = vpack.c.b16 %v1206, %v1206
    %v1209 = vshrl.u32 %v1207, 16
    %1212 = vmatprep.subr.bf16.mxu0 %v338
    %1213 = vmatpush1.bf16.msra.mxu0 %v337
    %1214 = vmatprep.subr.bf16.mxu0 %v336
    %1215 = vmatpush1.bf16.msra.mxu0 %v335
    %1216 = vmatprep.subr.bf16.mxu0 %v334
    %1217 = vmatpush1.bf16.msra.mxu0 %v333
    %1218 = vmatprep.subr.bf16.mxu0 %v332
    %1219 = vmatpush1.bf16.msra.mxu0 %v331
    %1220 = vmatprep.subr.bf16.mxu0 %v330
    %1221 = vmatpush1.bf16.msra.mxu0 %v329
    %1222 = vmatprep.subr.bf16.mxu0 %v328
    %1223 = vmatpush1.bf16.msra.mxu0 %v327
    %1224 = vmatprep.subr.bf16.mxu0 %v326
    %1225 = vmatpush1.bf16.msra.mxu0 %v325
    %1226 = vmatprep.subr.bf16.mxu0 %v324
    %1227 = vmatpush1.bf16.msra.mxu0 %v323
    %1228 = vmatprep.subr.bf16.mxu0 0
    %1229 = vmatpush2.bf16.msra.mxu0 0
    %1230 = vmatprep.subr.bf16.mxu0 0
    %1231 = vmatpush2.bf16.msra.mxu0 0
    %1232 = vmatprep.subr.bf16.mxu0 0
    %1233 = vmatpush2.bf16.msra.mxu0 0
    %1234 = vmatprep.subr.bf16.mxu0 0
    %1235 = vmatpush2.bf16.msra.mxu0 0
    %1236 = vmatprep.subr.bf16.mxu0 0
    %1237 = vmatpush2.bf16.msra.mxu0 0
    %1238 = vmatprep.subr.bf16.mxu0 0
    %1239 = vmatpush2.bf16.msra.mxu0 0
    %1240 = vmatprep.subr.bf16.mxu0 0
    %1241 = vmatpush2.bf16.msra.mxu0 0
    %1242 = vmatprep.subr.bf16.mxu0 0
    %1243 = vmatpush2.bf16.msra.mxu0 0
    %1244 = vmatprep.mubr.bf16.mxu0 0
    %1245 = vmatmul.mubr.bf16.gmra.mxu0 %v1209
    %v1246 = vpop.f32.mrf.mxu0
    %v1247 = vadd.f32 0.0, %v1246
    %v1248 = vpop.f32.mrf.mxu0
    %v1249 = vadd.f32 0.0, %v1248
    %v1250 = vpop.f32.mrf.mxu0
    %v1251 = vpop.f32.mrf.mxu0
    %1252 = vdwg.mxu0
    %1253 = vmatprep.subr.bf16.mxu0 %v521
    %1254 = vmatpush1.bf16.msra.mxu0 %v520
    %1255 = vmatprep.subr.bf16.mxu0 %v517
    %1256 = vmatpush1.bf16.msra.mxu0 %v516
    %1257 = vmatprep.subr.bf16.mxu0 %v513
    %1258 = vmatpush1.bf16.msra.mxu0 %v512
    %1259 = vmatprep.subr.bf16.mxu0 %v509
    %1260 = vmatpush1.bf16.msra.mxu0 %v508
    %1261 = vmatprep.subr.bf16.mxu0 %v505
    %1262 = vmatpush1.bf16.msra.mxu0 %v504
    %1263 = vmatprep.subr.bf16.mxu0 %v501
    %1264 = vmatpush1.bf16.msra.mxu0 %v500
    %1265 = vmatprep.subr.bf16.mxu0 %v497
    %1266 = vmatpush1.bf16.msra.mxu0 %v496
    %1267 = vmatprep.subr.bf16.mxu0 %v493
    %1268 = vmatpush1.bf16.msra.mxu0 %v492
    %1269 = vmatprep.subr.bf16.mxu0 0
    %1270 = vmatpush2.bf16.msra.mxu0 0
    %1271 = vmatprep.subr.bf16.mxu0 0
    %1272 = vmatpush2.bf16.msra.mxu0 0
    %1273 = vmatprep.subr.bf16.mxu0 0
    %1274 = vmatpush2.bf16.msra.mxu0 0
    %1275 = vmatprep.subr.bf16.mxu0 0
    %1276 = vmatpush2.bf16.msra.mxu0 0
    %1277 = vmatprep.subr.bf16.mxu0 0
    %1278 = vmatpush2.bf16.msra.mxu0 0
    %1279 = vmatprep.subr.bf16.mxu0 0
    %1280 = vmatpush2.bf16.msra.mxu0 0
    %1281 = vmatprep.subr.bf16.mxu0 0
    %1282 = vmatpush2.bf16.msra.mxu0 0
    %1283 = vmatprep.subr.bf16.mxu0 0
    %1284 = vmatpush2.bf16.msra.mxu0 0
    %1285 = vmatprep.mubr.bf16.mxu0 0
    %1286 = vmatmul.mubr.bf16.gmra.mxu0 %v1099
    %v1287 = vpop.f32.mrf.mxu0
    %v1288 = vadd.f32 0.0, %v1287
    %v1289 = vpop.f32.mrf.mxu0
    %v1290 = vadd.f32 0.0, %v1289
    %v1291 = vpop.f32.mrf.mxu0
    %v1292 = vpop.f32.mrf.mxu0
    %1293 = vdwg.mxu0
    %1294 = vmatprep.subr.bf16.mxu0 %v523
    %1295 = vmatpush1.bf16.msra.mxu0 %v522
    %1296 = vmatprep.subr.bf16.mxu0 %v519
    %1297 = vmatpush1.bf16.msra.mxu0 %v518
    %1298 = vmatprep.subr.bf16.mxu0 %v515
    %1299 = vmatpush1.bf16.msra.mxu0 %v514
    %1300 = vmatprep.subr.bf16.mxu0 %v511
    %1301 = vmatpush1.bf16.msra.mxu0 %v510
    %1302 = vmatprep.subr.bf16.mxu0 %v507
    %1303 = vmatpush1.bf16.msra.mxu0 %v506
    %1304 = vmatprep.subr.bf16.mxu0 %v503
    %1305 = vmatpush1.bf16.msra.mxu0 %v502
    %1306 = vmatprep.subr.bf16.mxu0 %v499
    %1307 = vmatpush1.bf16.msra.mxu0 %v498
    %1308 = vmatprep.subr.bf16.mxu0 %v495
    %1309 = vmatpush1.bf16.msra.mxu0 %v494
    %1310 = vmatprep.subr.bf16.mxu0 0
    %1311 = vmatpush2.bf16.msra.mxu0 0
    %1312 = vmatprep.subr.bf16.mxu0 0
    %1313 = vmatpush2.bf16.msra.mxu0 0
    %1314 = vmatprep.subr.bf16.mxu0 0
    %1315 = vmatpush2.bf16.msra.mxu0 0
    %1316 = vmatprep.subr.bf16.mxu0 0
    %1317 = vmatpush2.bf16.msra.mxu0 0
    %1318 = vmatprep.subr.bf16.mxu0 0
    %1319 = vmatpush2.bf16.msra.mxu0 0
    %1320 = vmatprep.subr.bf16.mxu0 0
    %1321 = vmatpush2.bf16.msra.mxu0 0
    %1322 = vmatprep.subr.bf16.mxu0 0
    %1323 = vmatpush2.bf16.msra.mxu0 0
    %1324 = vmatprep.subr.bf16.mxu0 0
    %1325 = vmatpush2.bf16.msra.mxu0 0
    %1326 = vmatprep.mubr.bf16.mxu0 0
    %1327 = vmatmul.mubr.bf16.gmra.mxu0 %v1099
    %v1328 = vpop.f32.mrf.mxu0
    %v1329 = vadd.f32 0.0, %v1328
    %v1330 = vpop.f32.mrf.mxu0
    %v1331 = vadd.f32 0.0, %v1330
    %v1332 = vpop.f32.mrf.mxu0
    %v1333 = vpop.f32.mrf.mxu0
    %1334 = vdwg.mxu0
    %v1335 = vadd.f32 %v1247, %v1288
    %v1336 = vadd.f32 %v1335, %v267
    %v1337 = vsel %vm640, %v1336, -inf
    %1338 = vmax.xlane.f32.xlu0 %v1337
    %v1339 = vpop.xlane.xlu0 %1338
    %v1340 = vsub.f32 %v1336, %v1339
    %v1341 = vmul.f32 %v1340, 1.442695
    %v1342 = vpow.pop %v1341
    %v1343 = vsel %vm640, %v1342, 0.0
    %1344 = vadd.xlane.f32.xlu0 %v1343
    %v1345 = vpop.xlane.xlu0 %1344
    %v1346 = vrcp.pop %v1345
    %v1347 = vmul.f32 %v1342, %v1346
    %v1348 = vpack.c.bf16 %v1347, %v1347
    %1349 = vmatprep.subr.bf16.mxu0 0
    %1350 = vmatpush1.bf16.msra.mxu0 %v692
    %1351 = vmatprep.subr.bf16.mxu0 0
    %1352 = vmatpush1.bf16.msra.mxu0 %v691
    %1353 = vmatprep.subr.bf16.mxu0 0
    %1354 = vmatpush1.bf16.msra.mxu0 %v690
    %1355 = vmatprep.subr.bf16.mxu0 0
    %1356 = vmatpush1.bf16.msra.mxu0 %v689
    %1357 = vmatprep.subr.bf16.mxu0 0
    %1358 = vmatpush1.bf16.msra.mxu0 %v688
    %1359 = vmatprep.subr.bf16.mxu0 0
    %1360 = vmatpush1.bf16.msra.mxu0 %v687
    %1361 = vmatprep.subr.bf16.mxu0 0
    %1362 = vmatpush1.bf16.msra.mxu0 %v686
    %1363 = vmatprep.subr.bf16.mxu0 0
    %1364 = vmatpush1.bf16.msra.mxu0 %v685
    %1365 = vmatprep.subr.bf16.mxu0 0
    %1366 = vmatpush2.bf16.msra.mxu0 0
    %1367 = vmatprep.subr.bf16.mxu0 0
    %1368 = vmatpush2.bf16.msra.mxu0 0
    %1369 = vmatprep.subr.bf16.mxu0 0
    %1370 = vmatpush2.bf16.msra.mxu0 0
    %1371 = vmatprep.subr.bf16.mxu0 0
    %1372 = vmatpush2.bf16.msra.mxu0 0
    %1373 = vmatprep.subr.bf16.mxu0 0
    %1374 = vmatpush2.bf16.msra.mxu0 0
    %1375 = vmatprep.subr.bf16.mxu0 0
    %1376 = vmatpush2.bf16.msra.mxu0 0
    %1377 = vmatprep.subr.bf16.mxu0 0
    %1378 = vmatpush2.bf16.msra.mxu0 0
    %1379 = vmatprep.subr.bf16.mxu0 0
    %1380 = vmatpush2.bf16.msra.mxu0 0
    %1381 = vmatprep.mubr.bf16.mxu0 0
    %1382 = vmatmul.mubr.bf16.gmra.mxu0 %v1348
    %v1383 = vpop.f32.mrf.mxu0
    %v1384 = vadd.f32 0.0, %v1383
    %v1385 = vpop.f32.mrf.mxu0
    %v1386 = vpop.f32.mrf.mxu0
    %v1387 = vpop.f32.mrf.mxu0
    %1388 = vdwg.mxu0
    %v1389 = vpack.c.bf16 %v1384, %v1384
    %1390 = vmatprep.subr.bf16.mxu0 0
    %1391 = vmatpush1.bf16.msra.mxu0 %v781
    %1392 = vmatprep.subr.bf16.mxu0 0
    %1393 = vmatpush1.bf16.msra.mxu0 %v780
    %1394 = vmatprep.subr.bf16.mxu0 0
    %1395 = vmatpush1.bf16.msra.mxu0 %v779
    %1396 = vmatprep.subr.bf16.mxu0 0
    %1397 = vmatpush1.bf16.msra.mxu0 %v778
    %1398 = vmatprep.subr.bf16.mxu0 0
    %1399 = vmatpush1.bf16.msra.mxu0 %v777
    %1400 = vmatprep.subr.bf16.mxu0 0
    %1401 = vmatpush1.bf16.msra.mxu0 %v776
    %1402 = vmatprep.subr.bf16.mxu0 0
    %1403 = vmatpush1.bf16.msra.mxu0 %v775
    %1404 = vmatprep.subr.bf16.mxu0 0
    %1405 = vmatpush1.bf16.msra.mxu0 %v774
    %1406 = vmatprep.subr.bf16.mxu0 0
    %1407 = vmatpush2.bf16.msra.mxu0 0
    %1408 = vmatprep.subr.bf16.mxu0 0
    %1409 = vmatpush2.bf16.msra.mxu0 0
    %1410 = vmatprep.subr.bf16.mxu0 0
    %1411 = vmatpush2.bf16.msra.mxu0 0
    %1412 = vmatprep.subr.bf16.mxu0 0
    %1413 = vmatpush2.bf16.msra.mxu0 0
    %1414 = vmatprep.subr.bf16.mxu0 0
    %1415 = vmatpush2.bf16.msra.mxu0 0
    %1416 = vmatprep.subr.bf16.mxu0 0
    %1417 = vmatpush2.bf16.msra.mxu0 0
    %1418 = vmatprep.subr.bf16.mxu0 0
    %1419 = vmatpush2.bf16.msra.mxu0 0
    %1420 = vmatprep.subr.bf16.mxu0 0
    %1421 = vmatpush2.bf16.msra.mxu0 0
    %1422 = vmatprep.mubr.bf16.mxu0 0
    %1423 = vmatmul.mubr.bf16.gmra.mxu0 %v1389
    %v1424 = vpop.f32.mrf.mxu0
    %v1425 = vadd.f32 0.0, %v1424
    %v1426 = vpop.f32.mrf.mxu0
    %v1427 = vpop.f32.mrf.mxu0
    %v1428 = vpop.f32.mrf.mxu0
    %1429 = vdwg.mxu0
    %v1430 = vadd.f32 %v1249, %v1425
    %v1431 = vadd.f32 %v1430, %v268
    %v1432 = vmax.f32 %v1431, 0.0
    %v1433 = vpack.c.bf16 %v1432, %v1432
    %1434 = vmatprep.subr.bf16.mxu0 %v936
    %1435 = vmatpush1.bf16.msra.mxu0 %v935
    %1436 = vmatprep.subr.bf16.mxu0 %v933
    %1437 = vmatpush1.bf16.msra.mxu0 %v932
    %1438 = vmatprep.subr.bf16.mxu0 %v930
    %1439 = vmatpush1.bf16.msra.mxu0 %v929
    %1440 = vmatprep.subr.bf16.mxu0 %v927
    %1441 = vmatpush1.bf16.msra.mxu0 %v926
    %1442 = vmatprep.subr.bf16.mxu0 %v924
    %1443 = vmatpush1.bf16.msra.mxu0 %v923
    %1444 = vmatprep.subr.bf16.mxu0 %v921
    %1445 = vmatpush1.bf16.msra.mxu0 %v920
    %1446 = vmatprep.subr.bf16.mxu0 %v918
    %1447 = vmatpush1.bf16.msra.mxu0 %v917
    %1448 = vmatprep.subr.bf16.mxu0 %v915
    %1449 = vmatpush1.bf16.msra.mxu0 %v914
    %1450 = vmatprep.subr.bf16.mxu0 0
    %1451 = vmatpush2.bf16.msra.mxu0 0
    %1452 = vmatprep.subr.bf16.mxu0 0
    %1453 = vmatpush2.bf16.msra.mxu0 0
    %1454 = vmatprep.subr.bf16.mxu0 0
    %1455 = vmatpush2.bf16.msra.mxu0 0
    %1456 = vmatprep.subr.bf16.mxu0 0
    %1457 = vmatpush2.bf16.msra.mxu0 0
    %1458 = vmatprep.subr.bf16.mxu0 0
    %1459 = vmatpush2.bf16.msra.mxu0 0
    %1460 = vmatprep.subr.bf16.mxu0 0
    %1461 = vmatpush2.bf16.msra.mxu0 0
    %1462 = vmatprep.subr.bf16.mxu0 0
    %1463 = vmatpush2.bf16.msra.mxu0 0
    %1464 = vmatprep.subr.bf16.mxu0 0
    %1465 = vmatpush2.bf16.msra.mxu0 0
    %1466 = vmatprep.mubr.bf16.mxu0 0
    %1467 = vmatmul.mubr.bf16.gmra.mxu0 %v1433
    %v1468 = vpop.f32.mrf.mxu0
    %v1469 = vadd.f32 %v966, %v1468
    %v1470 = vpop.f32.mrf.mxu0
    %v1471 = vadd.f32 %v970, %v1470
    %v1472 = vpop.f32.mrf.mxu0
    %v1473 = vpop.f32.mrf.mxu0
    %1474 = vdwg.mxu0
    %1475 = vmatprep.subr.bf16.mxu0 0
    %1476 = vmatpush1.bf16.msra.mxu0 %v937
    %1477 = vmatprep.subr.bf16.mxu0 0
    %1478 = vmatpush1.bf16.msra.mxu0 %v934
    %1479 = vmatprep.subr.bf16.mxu0 0
    %1480 = vmatpush1.bf16.msra.mxu0 %v931
    %1481 = vmatprep.subr.bf16.mxu0 0
    %1482 = vmatpush1.bf16.msra.mxu0 %v928
    %1483 = vmatprep.subr.bf16.mxu0 0
    %1484 = vmatpush1.bf16.msra.mxu0 %v925
    %1485 = vmatprep.subr.bf16.mxu0 0
    %1486 = vmatpush1.bf16.msra.mxu0 %v922
    %1487 = vmatprep.subr.bf16.mxu0 0
    %1488 = vmatpush1.bf16.msra.mxu0 %v919
    %1489 = vmatprep.subr.bf16.mxu0 0
    %1490 = vmatpush1.bf16.msra.mxu0 %v916
    %1491 = vmatprep.subr.bf16.mxu0 0
    %1492 = vmatpush2.bf16.msra.mxu0 0
    %1493 = vmatprep.subr.bf16.mxu0 0
    %1494 = vmatpush2.bf16.msra.mxu0 0
    %1495 = vmatprep.subr.bf16.mxu0 0
    %1496 = vmatpush2.bf16.msra.mxu0 0
    %1497 = vmatprep.subr.bf16.mxu0 0
    %1498 = vmatpush2.bf16.msra.mxu0 0
    %1499 = vmatprep.subr.bf16.mxu0 0
    %1500 = vmatpush2.bf16.msra.mxu0 0
    %1501 = vmatprep.subr.bf16.mxu0 0
    %1502 = vmatpush2.bf16.msra.mxu0 0
    %1503 = vmatprep.subr.bf16.mxu0 0
    %1504 = vmatpush2.bf16.msra.mxu0 0
    %1505 = vmatprep.subr.bf16.mxu0 0
    %1506 = vmatpush2.bf16.msra.mxu0 0
    %1507 = vmatprep.mubr.bf16.mxu0 0
    %1508 = vmatmul.mubr.bf16.gmra.mxu0 %v1433
    %v1509 = vpop.f32.mrf.mxu0
    %v1510 = vadd.f32 %v974, %v1509
    %v1511 = vpop.f32.mrf.mxu0
    %v1512 = vpop.f32.mrf.mxu0
    %v1513 = vpop.f32.mrf.mxu0
    %1514 = vdwg.mxu0
    %v1515 = vadd.f32 %v1290, %v1063
    %v1516 = vadd.f32 %v1329, %v1067
    %v1517 = vadd.f32 %v1331, %v1071
    %v1518 = vadd.f32 %v1469, %v1515
    %v1519 = vxor.u32 %v1518, 2147483648
    %v1520 = vmul.f32 %v1519, 1.442695
    %v1521 = vpow.pop %v1520
    %v1522 = vadd.f32 %v1521, 1.0
    %v1523 = vrcp.pop %v1522
    %v1524 = vmul.f32 1.0, %v1523
    %v1525 = vadd.f32 %v1471, %v1516
    %v1526 = vxor.u32 %v1525, 2147483648
    %v1527 = vmul.f32 %v1526, 1.442695
    %v1528 = vpow.pop %v1527
    %v1529 = vadd.f32 %v1528, 1.0
    %v1530 = vrcp.pop %v1529
    %v1531 = vmul.f32 1.0, %v1530
    %v1532 = vmul.f32 %v1524, %v1517
    %v1533 = vadd.f32 %v1510, %v1532
    %v1534 = vtanh.pop %v1533
    %v1535 = vsub.f32 1.0, %v1531
    %v1536 = vmul.f32 %v1535, %v1534
    %v1537 = vmul.f32 %v1531, %v1098
    %v1538 = vadd.f32 %v1536, %v1537
    %v1539 = vpack.c.bf16 %v1538, %v1538
    %1540 = vmatprep.subr.bf16.mxu0 0
    %1541 = vmatpush1.bf16.msra.mxu0 %v1139
    %1542 = vmatprep.subr.bf16.mxu0 0
    %1543 = vmatpush1.bf16.msra.mxu0 %v1138
    %1544 = vmatprep.subr.bf16.mxu0 0
    %1545 = vmatpush1.bf16.msra.mxu0 %v1137
    %1546 = vmatprep.subr.bf16.mxu0 0
    %1547 = vmatpush1.bf16.msra.mxu0 %v1136
    %1548 = vmatprep.subr.bf16.mxu0 0
    %1549 = vmatpush1.bf16.msra.mxu0 %v1135
    %1550 = vmatprep.subr.bf16.mxu0 0
    %1551 = vmatpush1.bf16.msra.mxu0 %v1134
    %1552 = vmatprep.subr.bf16.mxu0 0
    %1553 = vmatpush1.bf16.msra.mxu0 %v1133
    %1554 = vmatprep.subr.bf16.mxu0 0
    %1555 = vmatpush1.bf16.msra.mxu0 %v1132
    %1556 = vmatprep.subr.bf16.mxu0 0
    %1557 = vmatpush2.bf16.msra.mxu0 0
    %1558 = vmatprep.subr.bf16.mxu0 0
    %1559 = vmatpush2.bf16.msra.mxu0 0
    %1560 = vmatprep.subr.bf16.mxu0 0
    %1561 = vmatpush2.bf16.msra.mxu0 0
    %1562 = vmatprep.subr.bf16.mxu0 0
    %1563 = vmatpush2.bf16.msra.mxu0 0
    %1564 = vmatprep.subr.bf16.mxu0 0
    %1565 = vmatpush2.bf16.msra.mxu0 0
    %1566 = vmatprep.subr.bf16.mxu0 0
    %1567 = vmatpush2.bf16.msra.mxu0 0
    %1568 = vmatprep.subr.bf16.mxu0 0
    %1569 = vmatpush2.bf16.msra.mxu0 0
    %1570 = vmatprep.subr.bf16.mxu0 0
    %1571 = vmatpush2.bf16.msra.mxu0 0
    %1572 = vmatprep.mubr.bf16.mxu0 0
    %1573 = vmatmul.mubr.bf16.gmra.mxu0 %v1539
    %v1574 = vpop.f32.mrf.mxu0
    %v1575 = vadd.f32 %v271, %v1574
    %v1576 = vpop.f32.mrf.mxu0
    %v1577 = vpop.f32.mrf.mxu0
    %v1578 = vpop.f32.mrf.mxu0
    %1579 = vdwg.mxu0
    %v1580 = vsel %vm640, %v1575, -inf
    %1581 = vmax.xlane.f32.xlu0 %v1580
    %v1582 = vpop.xlane.xlu0 %1581
    %v1583 = vsub.f32 %v1575, %v1582
    %v1584 = vmul.f32 %v1583, 1.442695
    %v1585 = vpow.pop %v1584
    %v1586 = vsel %vm640, %v1585, 0.0
    %1587 = vadd.xlane.f32.xlu0 %v1586
    %v1588 = vpop.xlane.xlu0 %1587
    %v1589 = vlog2.pop %v1588
    %v1590 = vmul.f32 %v1589, 0.6931472
    %v1591 = vadd.f32 %v1582, %v1590
    %v1592 = vsub.f32 %v1575, %v1591
    %1593 = vst [vmem:[#allocation14 + $0x1] sm:$0x1] %v1592
    %1594 = vst [vmem:[#allocation14 + $0x9] sm:$0x1] %v1538
    %1595 = vst [vmem:[#allocation14 + $0x11] sm:$0x1] %v1347
    %v1596 = vld [vmem:[#allocation2] sm:$0x2]
    %v1598 = vunpack.c.l.b16 %v1596
    %v1599 = vpack.c.b16 %v1598, %v1598
    %v1600 = vrot.slane %v1599, 1
    %1602 = vmatprep.subr.bf16.mxu0 %v338
    %1603 = vmatpush1.bf16.msra.mxu0 %v337
    %1604 = vmatprep.subr.bf16.mxu0 %v336
    %1605 = vmatpush1.bf16.msra.mxu0 %v335
    %1606 = vmatprep.subr.bf16.mxu0 %v334
    %1607 = vmatpush1.bf16.msra.mxu0 %v333
    %1608 = vmatprep.subr.bf16.mxu0 %v332
    %1609 = vmatpush1.bf16.msra.mxu0 %v331
    %1610 = vmatprep.subr.bf16.mxu0 %v330
    %1611 = vmatpush1.bf16.msra.mxu0 %v329
    %1612 = vmatprep.subr.bf16.mxu0 %v328
    %1613 = vmatpush1.bf16.msra.mxu0 %v327
    %1614 = vmatprep.subr.bf16.mxu0 %v326
    %1615 = vmatpush1.bf16.msra.mxu0 %v325
    %1616 = vmatprep.subr.bf16.mxu0 %v324
    %1617 = vmatpush1.bf16.msra.mxu0 %v323
    %1618 = vmatprep.subr.bf16.mxu0 0
    %1619 = vmatpush2.bf16.msra.mxu0 0
    %1620 = vmatprep.subr.bf16.mxu0 0
    %1621 = vmatpush2.bf16.msra.mxu0 0
    %1622 = vmatprep.subr.bf16.mxu0 0
    %1623 = vmatpush2.bf16.msra.mxu0 0
    %1624 = vmatprep.subr.bf16.mxu0 0
    %1625 = vmatpush2.bf16.msra.mxu0 0
    %1626 = vmatprep.subr.bf16.mxu0 0
    %1627 = vmatpush2.bf16.msra.mxu0 0
    %1628 = vmatprep.subr.bf16.mxu0 0
    %1629 = vmatpush2.bf16.msra.mxu0 0
    %1630 = vmatprep.subr.bf16.mxu0 0
    %1631 = vmatpush2.bf16.msra.mxu0 0
    %1632 = vmatprep.subr.bf16.mxu0 0
    %1633 = vmatpush2.bf16.msra.mxu0 0
    %1634 = vmatprep.mubr.bf16.mxu0 0
    %1635 = vmatmul.mubr.bf16.gmra.mxu0 %v1600
    %v1636 = vpop.f32.mrf.mxu0
    %v1637 = vadd.f32 0.0, %v1636
    %v1638 = vpop.f32.mrf.mxu0
    %v1639 = vadd.f32 0.0, %v1638
    %v1640 = vpop.f32.mrf.mxu0
    %v1641 = vpop.f32.mrf.mxu0
    %1642 = vdwg.mxu0
    %1643 = vmatprep.subr.bf16.mxu0 %v521
    %1644 = vmatpush1.bf16.msra.mxu0 %v520
    %1645 = vmatprep.subr.bf16.mxu0 %v517
    %1646 = vmatpush1.bf16.msra.mxu0 %v516
    %1647 = vmatprep.subr.bf16.mxu0 %v513
    %1648 = vmatpush1.bf16.msra.mxu0 %v512
    %1649 = vmatprep.subr.bf16.mxu0 %v509
    %1650 = vmatpush1.bf16.msra.mxu0 %v508
    %1651 = vmatprep.subr.bf16.mxu0 %v505
    %1652 = vmatpush1.bf16.msra.mxu0 %v504
    %1653 = vmatprep.subr.bf16.mxu0 %v501
    %1654 = vmatpush1.bf16.msra.mxu0 %v500
    %1655 = vmatprep.subr.bf16.mxu0 %v497
    %1656 = vmatpush1.bf16.msra.mxu0 %v496
    %1657 = vmatprep.subr.bf16.mxu0 %v493
    %1658 = vmatpush1.bf16.msra.mxu0 %v492
    %1659 = vmatprep.subr.bf16.mxu0 0
    %1660 = vmatpush2.bf16.msra.mxu0 0
    %1661 = vmatprep.subr.bf16.mxu0 0
    %1662 = vmatpush2.bf16.msra.mxu0 0
    %1663 = vmatprep.subr.bf16.mxu0 0
    %1664 = vmatpush2.bf16.msra.mxu0 0
    %1665 = vmatprep.subr.bf16.mxu0 0
    %1666 = vmatpush2.bf16.msra.mxu0 0
    %1667 = vmatprep.subr.bf16.mxu0 0
    %1668 = vmatpush2.bf16.msra.mxu0 0
    %1669 = vmatprep.subr.bf16.mxu0 0
    %1670 = vmatpush2.bf16.msra.mxu0 0
    %1671 = vmatprep.subr.bf16.mxu0 0
    %1672 = vmatpush2.bf16.msra.mxu0 0
    %1673 = vmatprep.subr.bf16.mxu0 0
    %1674 = vmatpush2.bf16.msra.mxu0 0
    %1675 = vmatprep.mubr.bf16.mxu0 0
    %1676 = vmatmul.mubr.bf16.gmra.mxu0 %v1539
    %v1677 = vpop.f32.mrf.mxu0
    %v1678 = vadd.f32 0.0, %v1677
    %v1679 = vpop.f32.mrf.mxu0
    %v1680 = vadd.f32 0.0, %v1679
    %v1681 = vpop.f32.mrf.mxu0
    %v1682 = vpop.f32.mrf.mxu0
    %1683 = vdwg.mxu0
    %1684 = vmatprep.subr.bf16.mxu0 %v523
    %1685 = vmatpush1.bf16.msra.mxu0 %v522
    %1686 = vmatprep.subr.bf16.mxu0 %v519
    %1687 = vmatpush1.bf16.msra.mxu0 %v518
    %1688 = vmatprep.subr.bf16.mxu0 %v515
    %1689 = vmatpush1.bf16.msra.mxu0 %v514
    %1690 = vmatprep.subr.bf16.mxu0 %v511
    %1691 = vmatpush1.bf16.msra.mxu0 %v510
    %1692 = vmatprep.subr.bf16.mxu0 %v507
    %1693 = vmatpush1.bf16.msra.mxu0 %v506
    %1694 = vmatprep.subr.bf16.mxu0 %v503
    %1695 = vmatpush1.bf16.msra.mxu0 %v502
    %1696 = vmatprep.subr.bf16.mxu0 %v499
    %1697 = vmatpush1.bf16.msra.mxu0 %v498
    %1698 = vmatprep.subr.bf16.mxu0 %v495
    %1699 = vmatpush1.bf16.msra.mxu0 %v494
    %1700 = vmatprep.subr.bf16.mxu0 0
    %1701 = vmatpush2.bf16.msra.mxu0 0
    %1702 = vmatprep.subr.bf16.mxu0 0
    %1703 = vmatpush2.bf16.msra.mxu0 0
    %1704 = vmatprep.subr.bf16.mxu0 0
    %1705 = vmatpush2.bf16.msra.mxu0 0
    %1706 = vmatprep.subr.bf16.mxu0 0
    %1707 = vmatpush2.bf16.msra.mxu0 0
    %1708 = vmatprep.subr.bf16.mxu0 0
    %1709 = vmatpush2.bf16.msra.mxu0 0
    %1710 = vmatprep.subr.bf16.mxu0 0
    %1711 = vmatpush2.bf16.msra.mxu0 0
    %1712 = vmatprep.subr.bf16.mxu0 0
    %1713 = vmatpush2.bf16.msra.mxu0 0
    %1714 = vmatprep.subr.bf16.mxu0 0
    %1715 = vmatpush2.bf16.msra.mxu0 0
    %1716 = vmatprep.mubr.bf16.mxu0 0
    %1717 = vmatmul.mubr.bf16.gmra.mxu0 %v1539
    %v1718 = vpop.f32.mrf.mxu0
    %v1719 = vadd.f32 0.0, %v1718
    %v1720 = vpop.f32.mrf.mxu0
    %v1721 = vadd.f32 0.0, %v1720
    %v1722 = vpop.f32.mrf.mxu0
    %v1723 = vpop.f32.mrf.mxu0
    %1724 = vdwg.mxu0
    %v1725 = vadd.f32 %v1637, %v1678
    %v1726 = vadd.f32 %v1725, %v267
    %v1727 = vsel %vm640, %v1726, -inf
    %1728 = vmax.xlane.f32.xlu0 %v1727
    %v1729 = vpop.xlane.xlu0 %1728
    %v1730 = vsub.f32 %v1726, %v1729
    %v1731 = vmul.f32 %v1730, 1.442695
    %v1732 = vpow.pop %v1731
    %v1733 = vsel %vm640, %v1732, 0.0
    %1734 = vadd.xlane.f32.xlu0 %v1733
    %v1735 = vpop.xlane.xlu0 %1734
    %v1736 = vrcp.pop %v1735
    %v1737 = vmul.f32 %v1732, %v1736
    %v1738 = vpack.c.bf16 %v1737, %v1737
    %1739 = vmatprep.subr.bf16.mxu0 0
    %1740 = vmatpush1.bf16.msra.mxu0 %v692
    %1741 = vmatprep.subr.bf16.mxu0 0
    %1742 = vmatpush1.bf16.msra.mxu0 %v691
    %1743 = vmatprep.subr.bf16.mxu0 0
    %1744 = vmatpush1.bf16.msra.mxu0 %v690
    %1745 = vmatprep.subr.bf16.mxu0 0
    %1746 = vmatpush1.bf16.msra.mxu0 %v689
    %1747 = vmatprep.subr.bf16.mxu0 0
    %1748 = vmatpush1.bf16.msra.mxu0 %v688
    %1749 = vmatprep.subr.bf16.mxu0 0
    %1750 = vmatpush1.bf16.msra.mxu0 %v687
    %1751 = vmatprep.subr.bf16.mxu0 0
    %1752 = vmatpush1.bf16.msra.mxu0 %v686
    %1753 = vmatprep.subr.bf16.mxu0 0
    %1754 = vmatpush1.bf16.msra.mxu0 %v685
    %1755 = vmatprep.subr.bf16.mxu0 0
    %1756 = vmatpush2.bf16.msra.mxu0 0
    %1757 = vmatprep.subr.bf16.mxu0 0
    %1758 = vmatpush2.bf16.msra.mxu0 0
    %1759 = vmatprep.subr.bf16.mxu0 0
    %1760 = vmatpush2.bf16.msra.mxu0 0
    %1761 = vmatprep.subr.bf16.mxu0 0
    %1762 = vmatpush2.bf16.msra.mxu0 0
    %1763 = vmatprep.subr.bf16.mxu0 0
    %1764 = vmatpush2.bf16.msra.mxu0 0
    %1765 = vmatprep.subr.bf16.mxu0 0
    %1766 = vmatpush2.bf16.msra.mxu0 0
    %1767 = vmatprep.subr.bf16.mxu0 0
    %1768 = vmatpush2.bf16.msra.mxu0 0
    %1769 = vmatprep.subr.bf16.mxu0 0
    %1770 = vmatpush2.bf16.msra.mxu0 0
    %1771 = vmatprep.mubr.bf16.mxu0 0
    %1772 = vmatmul.mubr.bf16.gmra.mxu0 %v1738
    %v1773 = vpop.f32.mrf.mxu0
    %v1774 = vadd.f32 0.0, %v1773
    %v1775 = vpop.f32.mrf.mxu0
    %v1776 = vpop.f32.mrf.mxu0
    %v1777 = vpop.f32.mrf.mxu0
    %1778 = vdwg.mxu0
    %v1779 = vpack.c.bf16 %v1774, %v1774
    %1780 = vmatprep.subr.bf16.mxu0 0
    %1781 = vmatpush1.bf16.msra.mxu0 %v781
    %1782 = vmatprep.subr.bf16.mxu0 0
    %1783 = vmatpush1.bf16.msra.mxu0 %v780
    %1784 = vmatprep.subr.bf16.mxu0 0
    %1785 = vmatpush1.bf16.msra.mxu0 %v779
    %1786 = vmatprep.subr.bf16.mxu0 0
    %1787 = vmatpush1.bf16.msra.mxu0 %v778
    %1788 = vmatprep.subr.bf16.mxu0 0
    %1789 = vmatpush1.bf16.msra.mxu0 %v777
    %1790 = vmatprep.subr.bf16.mxu0 0
    %1791 = vmatpush1.bf16.msra.mxu0 %v776
    %1792 = vmatprep.subr.bf16.mxu0 0
    %1793 = vmatpush1.bf16.msra.mxu0 %v775
    %1794 = vmatprep.subr.bf16.mxu0 0
    %1795 = vmatpush1.bf16.msra.mxu0 %v774
    %1796 = vmatprep.subr.bf16.mxu0 0
    %1797 = vmatpush2.bf16.msra.mxu0 0
    %1798 = vmatprep.subr.bf16.mxu0 0
    %1799 = vmatpush2.bf16.msra.mxu0 0
    %1800 = vmatprep.subr.bf16.mxu0 0
    %1801 = vmatpush2.bf16.msra.mxu0 0
    %1802 = vmatprep.subr.bf16.mxu0 0
    %1803 = vmatpush2.bf16.msra.mxu0 0
    %1804 = vmatprep.subr.bf16.mxu0 0
    %1805 = vmatpush2.bf16.msra.mxu0 0
    %1806 = vmatprep.subr.bf16.mxu0 0
    %1807 = vmatpush2.bf16.msra.mxu0 0
    %1808 = vmatprep.subr.bf16.mxu0 0
    %1809 = vmatpush2.bf16.msra.mxu0 0
    %1810 = vmatprep.subr.bf16.mxu0 0
    %1811 = vmatpush2.bf16.msra.mxu0 0
    %1812 = vmatprep.mubr.bf16.mxu0 0
    %1813 = vmatmul.mubr.bf16.gmra.mxu0 %v1779
    %v1814 = vpop.f32.mrf.mxu0
    %v1815 = vadd.f32 0.0, %v1814
    %v1816 = vpop.f32.mrf.mxu0
    %v1817 = vpop.f32.mrf.mxu0
    %v1818 = vpop.f32.mrf.mxu0
    %1819 = vdwg.mxu0
    %v1820 = vadd.f32 %v1639, %v1815
    %v1821 = vadd.f32 %v1820, %v268
    %v1822 = vmax.f32 %v1821, 0.0
    %v1823 = vpack.c.bf16 %v1822, %v1822
    %1824 = vmatprep.subr.bf16.mxu0 %v936
    %1825 = vmatpush1.bf16.msra.mxu0 %v935
    %1826 = vmatprep.subr.bf16.mxu0 %v933
    %1827 = vmatpush1.bf16.msra.mxu0 %v932
    %1828 = vmatprep.subr.bf16.mxu0 %v930
    %1829 = vmatpush1.bf16.msra.mxu0 %v929
    %1830 = vmatprep.subr.bf16.mxu0 %v927
    %1831 = vmatpush1.bf16.msra.mxu0 %v926
    %1832 = vmatprep.subr.bf16.mxu0 %v924
    %1833 = vmatpush1.bf16.msra.mxu0 %v923
    %1834 = vmatprep.subr.bf16.mxu0 %v921
    %1835 = vmatpush1.bf16.msra.mxu0 %v920
    %1836 = vmatprep.subr.bf16.mxu0 %v918
    %1837 = vmatpush1.bf16.msra.mxu0 %v917
    %1838 = vmatprep.subr.bf16.mxu0 %v915
    %1839 = vmatpush1.bf16.msra.mxu0 %v914
    %1840 = vmatprep.subr.bf16.mxu0 0
    %1841 = vmatpush2.bf16.msra.mxu0 0
    %1842 = vmatprep.subr.bf16.mxu0 0
    %1843 = vmatpush2.bf16.msra.mxu0 0
    %1844 = vmatprep.subr.bf16.mxu0 0
    %1845 = vmatpush2.bf16.msra.mxu0 0
    %1846 = vmatprep.subr.bf16.mxu0 0
    %1847 = vmatpush2.bf16.msra.mxu0 0
    %1848 = vmatprep.subr.bf16.mxu0 0
    %1849 = vmatpush2.bf16.msra.mxu0 0
    %1850 = vmatprep.subr.bf16.mxu0 0
    %1851 = vmatpush2.bf16.msra.mxu0 0
    %1852 = vmatprep.subr.bf16.mxu0 0
    %1853 = vmatpush2.bf16.msra.mxu0 0
    %1854 = vmatprep.subr.bf16.mxu0 0
    %1855 = vmatpush2.bf16.msra.mxu0 0
    %1856 = vmatprep.mubr.bf16.mxu0 0
    %1857 = vmatmul.mubr.bf16.gmra.mxu0 %v1823
    %v1858 = vpop.f32.mrf.mxu0
    %v1859 = vadd.f32 %v966, %v1858
    %v1860 = vpop.f32.mrf.mxu0
    %v1861 = vadd.f32 %v970, %v1860
    %v1862 = vpop.f32.mrf.mxu0
    %v1863 = vpop.f32.mrf.mxu0
    %1864 = vdwg.mxu0
    %1865 = vmatprep.subr.bf16.mxu0 0
    %1866 = vmatpush1.bf16.msra.mxu0 %v937
    %1867 = vmatprep.subr.bf16.mxu0 0
    %1868 = vmatpush1.bf16.msra.mxu0 %v934
    %1869 = vmatprep.subr.bf16.mxu0 0
    %1870 = vmatpush1.bf16.msra.mxu0 %v931
    %1871 = vmatprep.subr.bf16.mxu0 0
    %1872 = vmatpush1.bf16.msra.mxu0 %v928
    %1873 = vmatprep.subr.bf16.mxu0 0
    %1874 = vmatpush1.bf16.msra.mxu0 %v925
    %1875 = vmatprep.subr.bf16.mxu0 0
    %1876 = vmatpush1.bf16.msra.mxu0 %v922
    %1877 = vmatprep.subr.bf16.mxu0 0
    %1878 = vmatpush1.bf16.msra.mxu0 %v919
    %1879 = vmatprep.subr.bf16.mxu0 0
    %1880 = vmatpush1.bf16.msra.mxu0 %v916
    %1881 = vmatprep.subr.bf16.mxu0 0
    %1882 = vmatpush2.bf16.msra.mxu0 0
    %1883 = vmatprep.subr.bf16.mxu0 0
    %1884 = vmatpush2.bf16.msra.mxu0 0
    %1885 = vmatprep.subr.bf16.mxu0 0
    %1886 = vmatpush2.bf16.msra.mxu0 0
    %1887 = vmatprep.subr.bf16.mxu0 0
    %1888 = vmatpush2.bf16.msra.mxu0 0
    %1889 = vmatprep.subr.bf16.mxu0 0
    %1890 = vmatpush2.bf16.msra.mxu0 0
    %1891 = vmatprep.subr.bf16.mxu0 0
    %1892 = vmatpush2.bf16.msra.mxu0 0
    %1893 = vmatprep.subr.bf16.mxu0 0
    %1894 = vmatpush2.bf16.msra.mxu0 0
    %1895 = vmatprep.subr.bf16.mxu0 0
    %1896 = vmatpush2.bf16.msra.mxu0 0
    %1897 = vmatprep.mubr.bf16.mxu0 0
    %1898 = vmatmul.mubr.bf16.gmra.mxu0 %v1823
    %v1899 = vpop.f32.mrf.mxu0
    %v1900 = vadd.f32 %v974, %v1899
    %v1901 = vpop.f32.mrf.mxu0
    %v1902 = vpop.f32.mrf.mxu0
    %v1903 = vpop.f32.mrf.mxu0
    %1904 = vdwg.mxu0
    %v1905 = vadd.f32 %v1680, %v1063
    %v1906 = vadd.f32 %v1719, %v1067
    %v1907 = vadd.f32 %v1721, %v1071
    %v1908 = vadd.f32 %v1859, %v1905
    %v1909 = vxor.u32 %v1908, 2147483648
    %v1910 = vmul.f32 %v1909, 1.442695
    %v1911 = vpow.pop %v1910
    %v1912 = vadd.f32 %v1911, 1.0
    %v1913 = vrcp.pop %v1912
    %v1914 = vmul.f32 1.0, %v1913
    %v1915 = vadd.f32 %v1861, %v1906
    %v1916 = vxor.u32 %v1915, 2147483648
    %v1917 = vmul.f32 %v1916, 1.442695
    %v1918 = vpow.pop %v1917
    %v1919 = vadd.f32 %v1918, 1.0
    %v1920 = vrcp.pop %v1919
    %v1921 = vmul.f32 1.0, %v1920
    %v1922 = vmul.f32 %v1914, %v1907
    %v1923 = vadd.f32 %v1900, %v1922
    %v1924 = vtanh.pop %v1923
    %v1925 = vsub.f32 1.0, %v1921
    %v1926 = vmul.f32 %v1925, %v1924
    %v1927 = vmul.f32 %v1921, %v1538
    %v1928 = vadd.f32 %v1926, %v1927
    %v1929 = vpack.c.bf16 %v1928, %v1928
    %1930 = vmatprep.subr.bf16.mxu0 0
    %1931 = vmatpush1.bf16.msra.mxu0 %v1139
    %1932 = vmatprep.subr.bf16.mxu0 0
    %1933 = vmatpush1.bf16.msra.mxu0 %v1138
    %1934 = vmatprep.subr.bf16.mxu0 0
    %1935 = vmatpush1.bf16.msra.mxu0 %v1137
    %1936 = vmatprep.subr.bf16.mxu0 0
    %1937 = vmatpush1.bf16.msra.mxu0 %v1136
    %1938 = vmatprep.subr.bf16.mxu0 0
    %1939 = vmatpush1.bf16.msra.mxu0 %v1135
    %1940 = vmatprep.subr.bf16.mxu0 0
    %1941 = vmatpush1.bf16.msra.mxu0 %v1134
    %1942 = vmatprep.subr.bf16.mxu0 0
    %1943 = vmatpush1.bf16.msra.mxu0 %v1133
    %1944 = vmatprep.subr.bf16.mxu0 0
    %1945 = vmatpush1.bf16.msra.mxu0 %v1132
    %1946 = vmatprep.subr.bf16.mxu0 0
    %1947 = vmatpush2.bf16.msra.mxu0 0
    %1948 = vmatprep.subr.bf16.mxu0 0
    %1949 = vmatpush2.bf16.msra.mxu0 0
    %1950 = vmatprep.subr.bf16.mxu0 0
    %1951 = vmatpush2.bf16.msra.mxu0 0
    %1952 = vmatprep.subr.bf16.mxu0 0
    %1953 = vmatpush2.bf16.msra.mxu0 0
    %1954 = vmatprep.subr.bf16.mxu0 0
    %1955 = vmatpush2.bf16.msra.mxu0 0
    %1956 = vmatprep.subr.bf16.mxu0 0
    %1957 = vmatpush2.bf16.msra.mxu0 0
    %1958 = vmatprep.subr.bf16.mxu0 0
    %1959 = vmatpush2.bf16.msra.mxu0 0
    %1960 = vmatprep.subr.bf16.mxu0 0
    %1961 = vmatpush2.bf16.msra.mxu0 0
    %1962 = vmatprep.mubr.bf16.mxu0 0
    %1963 = vmatmul.mubr.bf16.gmra.mxu0 %v1929
    %v1964 = vpop.f32.mrf.mxu0
    %v1965 = vadd.f32 %v271, %v1964
    %v1966 = vpop.f32.mrf.mxu0
    %v1967 = vpop.f32.mrf.mxu0
    %v1968 = vpop.f32.mrf.mxu0
    %1969 = vdwg.mxu0
    %v1970 = vsel %vm640, %v1965, -inf
    %1971 = vmax.xlane.f32.xlu0 %v1970
    %v1972 = vpop.xlane.xlu0 %1971
    %v1973 = vsub.f32 %v1965, %v1972
    %v1974 = vmul.f32 %v1973, 1.442695
    %v1975 = vpow.pop %v1974
    %v1976 = vsel %vm640, %v1975, 0.0
    %1977 = vadd.xlane.f32.xlu0 %v1976
    %v1978 = vpop.xlane.xlu0 %1977
    %v1979 = vlog2.pop %v1978
    %v1980 = vmul.f32 %v1979, 0.6931472
    %v1981 = vadd.f32 %v1972, %v1980
    %v1982 = vsub.f32 %v1965, %v1981
    %1983 = vst [vmem:[#allocation14 + $0x2] sm:$0x1] %v1982
    %1984 = vst [vmem:[#allocation14 + $0xa] sm:$0x1] %v1928
    %1985 = vst [vmem:[#allocation14 + $0x12] sm:$0x1] %v1737
    %v1986 = vld [vmem:[#allocation2] sm:$0x2]
    %v1988 = vunpack.c.l.b16 %v1986
    %v1989 = vpack.c.b16 %v1988, %v1988
    %v1991 = vshrl.u32 %v1989, 16
    %v1993 = vrot.slane %v1991, 1
    %1995 = vmatprep.subr.bf16.mxu0 %v338
    %1996 = vmatpush1.bf16.msra.mxu0 %v337
    %1997 = vmatprep.subr.bf16.mxu0 %v336
    %1998 = vmatpush1.bf16.msra.mxu0 %v335
    %1999 = vmatprep.subr.bf16.mxu0 %v334
    %2000 = vmatpush1.bf16.msra.mxu0 %v333
    %2001 = vmatprep.subr.bf16.mxu0 %v332
    %2002 = vmatpush1.bf16.msra.mxu0 %v331
    %2003 = vmatprep.subr.bf16.mxu0 %v330
    %2004 = vmatpush1.bf16.msra.mxu0 %v329
    %2005 = vmatprep.subr.bf16.mxu0 %v328
    %2006 = vmatpush1.bf16.msra.mxu0 %v327
    %2007 = vmatprep.subr.bf16.mxu0 %v326
    %2008 = vmatpush1.bf16.msra.mxu0 %v325
    %2009 = vmatprep.subr.bf16.mxu0 %v324
    %2010 = vmatpush1.bf16.msra.mxu0 %v323
    %2011 = vmatprep.subr.bf16.mxu0 0
    %2012 = vmatpush2.bf16.msra.mxu0 0
    %2013 = vmatprep.subr.bf16.mxu0 0
    %2014 = vmatpush2.bf16.msra.mxu0 0
    %2015 = vmatprep.subr.bf16.mxu0 0
    %2016 = vmatpush2.bf16.msra.mxu0 0
    %2017 = vmatprep.subr.bf16.mxu0 0
    %2018 = vmatpush2.bf16.msra.mxu0 0
    %2019 = vmatprep.subr.bf16.mxu0 0
    %2020 = vmatpush2.bf16.msra.mxu0 0
    %2021 = vmatprep.subr.bf16.mxu0 0
    %2022 = vmatpush2.bf16.msra.mxu0 0
    %2023 = vmatprep.subr.bf16.mxu0 0
    %2024 = vmatpush2.bf16.msra.mxu0 0
    %2025 = vmatprep.subr.bf16.mxu0 0
    %2026 = vmatpush2.bf16.msra.mxu0 0
    %2027 = vmatprep.mubr.bf16.mxu0 0
    %2028 = vmatmul.mubr.bf16.gmra.mxu0 %v1993
    %v2029 = vpop.f32.mrf.mxu0
    %v2030 = vadd.f32 0.0, %v2029
    %v2031 = vpop.f32.mrf.mxu0
    %v2032 = vadd.f32 0.0, %v2031
    %v2033 = vpop.f32.mrf.mxu0
    %v2034 = vpop.f32.mrf.mxu0
    %2035 = vdwg.mxu0
    %2036 = vmatprep.subr.bf16.mxu0 %v521
    %2037 = vmatpush1.bf16.msra.mxu0 %v520
    %2038 = vmatprep.subr.bf16.mxu0 %v517
    %2039 = vmatpush1.bf16.msra.mxu0 %v516
    %2040 = vmatprep.subr.bf16.mxu0 %v513
    %2041 = vmatpush1.bf16.msra.mxu0 %v512
    %2042 = vmatprep.subr.bf16.mxu0 %v509
    %2043 = vmatpush1.bf16.msra.mxu0 %v508
    %2044 = vmatprep.subr.bf16.mxu0 %v505
    %2045 = vmatpush1.bf16.msra.mxu0 %v504
    %2046 = vmatprep.subr.bf16.mxu0 %v501
    %2047 = vmatpush1.bf16.msra.mxu0 %v500
    %2048 = vmatprep.subr.bf16.mxu0 %v497
    %2049 = vmatpush1.bf16.msra.mxu0 %v496
    %2050 = vmatprep.subr.bf16.mxu0 %v493
    %2051 = vmatpush1.bf16.msra.mxu0 %v492
    %2052 = vmatprep.subr.bf16.mxu0 0
    %2053 = vmatpush2.bf16.msra.mxu0 0
    %2054 = vmatprep.subr.bf16.mxu0 0
    %2055 = vmatpush2.bf16.msra.mxu0 0
    %2056 = vmatprep.subr.bf16.mxu0 0
    %2057 = vmatpush2.bf16.msra.mxu0 0
    %2058 = vmatprep.subr.bf16.mxu0 0
    %2059 = vmatpush2.bf16.msra.mxu0 0
    %2060 = vmatprep.subr.bf16.mxu0 0
    %2061 = vmatpush2.bf16.msra.mxu0 0
    %2062 = vmatprep.subr.bf16.mxu0 0
    %2063 = vmatpush2.bf16.msra.mxu0 0
    %2064 = vmatprep.subr.bf16.mxu0 0
    %2065 = vmatpush2.bf16.msra.mxu0 0
    %2066 = vmatprep.subr.bf16.mxu0 0
    %2067 = vmatpush2.bf16.msra.mxu0 0
    %2068 = vmatprep.mubr.bf16.mxu0 0
    %2069 = vmatmul.mubr.bf16.gmra.mxu0 %v1929
    %v2070 = vpop.f32.mrf.mxu0
    %v2071 = vadd.f32 0.0, %v2070
    %v2072 = vpop.f32.mrf.mxu0
    %v2073 = vadd.f32 0.0, %v2072
    %v2074 = vpop.f32.mrf.mxu0
    %v2075 = vpop.f32.mrf.mxu0
    %2076 = vdwg.mxu0
    %2077 = vmatprep.subr.bf16.mxu0 %v523
    %2078 = vmatpush1.bf16.msra.mxu0 %v522
    %2079 = vmatprep.subr.bf16.mxu0 %v519
    %2080 = vmatpush1.bf16.msra.mxu0 %v518
    %2081 = vmatprep.subr.bf16.mxu0 %v515
    %2082 = vmatpush1.bf16.msra.mxu0 %v514
    %2083 = vmatprep.subr.bf16.mxu0 %v511
    %2084 = vmatpush1.bf16.msra.mxu0 %v510
    %2085 = vmatprep.subr.bf16.mxu0 %v507
    %2086 = vmatpush1.bf16.msra.mxu0 %v506
    %2087 = vmatprep.subr.bf16.mxu0 %v503
    %2088 = vmatpush1.bf16.msra.mxu0 %v502
    %2089 = vmatprep.subr.bf16.mxu0 %v499
    %2090 = vmatpush1.bf16.msra.mxu0 %v498
    %2091 = vmatprep.subr.bf16.mxu0 %v495
    %2092 = vmatpush1.bf16.msra.mxu0 %v494
    %2093 = vmatprep.subr.bf16.mxu0 0
    %2094 = vmatpush2.bf16.msra.mxu0 0
    %2095 = vmatprep.subr.bf16.mxu0 0
    %2096 = vmatpush2.bf16.msra.mxu0 0
    %2097 = vmatprep.subr.bf16.mxu0 0
    %2098 = vmatpush2.bf16.msra.mxu0 0
    %2099 = vmatprep.subr.bf16.mxu0 0
    %2100 = vmatpush2.bf16.msra.mxu0 0
    %2101 = vmatprep.subr.bf16.mxu0 0
    %2102 = vmatpush2.bf16.msra.mxu0 0
    %2103 = vmatprep.subr.bf16.mxu0 0
    %2104 = vmatpush2.bf16.msra.mxu0 0
    %2105 = vmatprep.subr.bf16.mxu0 0
    %2106 = vmatpush2.bf16.msra.mxu0 0
    %2107 = vmatprep.subr.bf16.mxu0 0
    %2108 = vmatpush2.bf16.msra.mxu0 0
    %2109 = vmatprep.mubr.bf16.mxu0 0
    %2110 = vmatmul.mubr.bf16.gmra.mxu0 %v1929
    %v2111 = vpop.f32.mrf.mxu0
    %v2112 = vadd.f32 0.0, %v2111
    %v2113 = vpop.f32.mrf.mxu0
    %v2114 = vadd.f32 0.0, %v2113
    %v2115 = vpop.f32.mrf.mxu0
    %v2116 = vpop.f32.mrf.mxu0
    %2117 = vdwg.mxu0
    %v2118 = vadd.f32 %v2030, %v2071
    %v2119 = vadd.f32 %v2118, %v267
    %v2120 = vsel %vm640, %v2119, -inf
    %2121 = vmax.xlane.f32.xlu0 %v2120
    %v2122 = vpop.xlane.xlu0 %2121
    %v2123 = vsub.f32 %v2119, %v2122
    %v2124 = vmul.f32 %v2123, 1.442695
    %v2125 = vpow.pop %v2124
    %v2126 = vsel %vm640, %v2125, 0.0
    %2127 = vadd.xlane.f32.xlu0 %v2126
    %v2128 = vpop.xlane.xlu0 %2127
    %v2129 = vrcp.pop %v2128
    %v2130 = vmul.f32 %v2125, %v2129
    %v2131 = vpack.c.bf16 %v2130, %v2130
    %2132 = vmatprep.subr.bf16.mxu0 0
    %2133 = vmatpush1.bf16.msra.mxu0 %v692
    %2134 = vmatprep.subr.bf16.mxu0 0
    %2135 = vmatpush1.bf16.msra.mxu0 %v691
    %2136 = vmatprep.subr.bf16.mxu0 0
    %2137 = vmatpush1.bf16.msra.mxu0 %v690
    %2138 = vmatprep.subr.bf16.mxu0 0
    %2139 = vmatpush1.bf16.msra.mxu0 %v689
    %2140 = vmatprep.subr.bf16.mxu0 0
    %2141 = vmatpush1.bf16.msra.mxu0 %v688
    %2142 = vmatprep.subr.bf16.mxu0 0
    %2143 = vmatpush1.bf16.msra.mxu0 %v687
    %2144 = vmatprep.subr.bf16.mxu0 0
    %2145 = vmatpush1.bf16.msra.mxu0 %v686
    %2146 = vmatprep.subr.bf16.mxu0 0
    %2147 = vmatpush1.bf16.msra.mxu0 %v685
    %2148 = vmatprep.subr.bf16.mxu0 0
    %2149 = vmatpush2.bf16.msra.mxu0 0
    %2150 = vmatprep.subr.bf16.mxu0 0
    %2151 = vmatpush2.bf16.msra.mxu0 0
    %2152 = vmatprep.subr.bf16.mxu0 0
    %2153 = vmatpush2.bf16.msra.mxu0 0
    %2154 = vmatprep.subr.bf16.mxu0 0
    %2155 = vmatpush2.bf16.msra.mxu0 0
    %2156 = vmatprep.subr.bf16.mxu0 0
    %2157 = vmatpush2.bf16.msra.mxu0 0
    %2158 = vmatprep.subr.bf16.mxu0 0
    %2159 = vmatpush2.bf16.msra.mxu0 0
    %2160 = vmatprep.subr.bf16.mxu0 0
    %2161 = vmatpush2.bf16.msra.mxu0 0
    %2162 = vmatprep.subr.bf16.mxu0 0
    %2163 = vmatpush2.bf16.msra.mxu0 0
    %2164 = vmatprep.mubr.bf16.mxu0 0
    %2165 = vmatmul.mubr.bf16.gmra.mxu0 %v2131
    %v2166 = vpop.f32.mrf.mxu0
    %v2167 = vadd.f32 0.0, %v2166
    %v2168 = vpop.f32.mrf.mxu0
    %v2169 = vpop.f32.mrf.mxu0
    %v2170 = vpop.f32.mrf.mxu0
    %2171 = vdwg.mxu0
    %v2172 = vpack.c.bf16 %v2167, %v2167
    %2173 = vmatprep.subr.bf16.mxu0 0
    %2174 = vmatpush1.bf16.msra.mxu0 %v781
    %2175 = vmatprep.subr.bf16.mxu0 0
    %2176 = vmatpush1.bf16.msra.mxu0 %v780
    %2177 = vmatprep.subr.bf16.mxu0 0
    %2178 = vmatpush1.bf16.msra.mxu0 %v779
    %2179 = vmatprep.subr.bf16.mxu0 0
    %2180 = vmatpush1.bf16.msra.mxu0 %v778
    %2181 = vmatprep.subr.bf16.mxu0 0
    %2182 = vmatpush1.bf16.msra.mxu0 %v777
    %2183 = vmatprep.subr.bf16.mxu0 0
    %2184 = vmatpush1.bf16.msra.mxu0 %v776
    %2185 = vmatprep.subr.bf16.mxu0 0
    %2186 = vmatpush1.bf16.msra.mxu0 %v775
    %2187 = vmatprep.subr.bf16.mxu0 0
    %2188 = vmatpush1.bf16.msra.mxu0 %v774
    %2189 = vmatprep.subr.bf16.mxu0 0
    %2190 = vmatpush2.bf16.msra.mxu0 0
    %2191 = vmatprep.subr.bf16.mxu0 0
    %2192 = vmatpush2.bf16.msra.mxu0 0
    %2193 = vmatprep.subr.bf16.mxu0 0
    %2194 = vmatpush2.bf16.msra.mxu0 0
    %2195 = vmatprep.subr.bf16.mxu0 0
    %2196 = vmatpush2.bf16.msra.mxu0 0
    %2197 = vmatprep.subr.bf16.mxu0 0
    %2198 = vmatpush2.bf16.msra.mxu0 0
    %2199 = vmatprep.subr.bf16.mxu0 0
    %2200 = vmatpush2.bf16.msra.mxu0 0
    %2201 = vmatprep.subr.bf16.mxu0 0
    %2202 = vmatpush2.bf16.msra.mxu0 0
    %2203 = vmatprep.subr.bf16.mxu0 0
    %2204 = vmatpush2.bf16.msra.mxu0 0
    %2205 = vmatprep.mubr.bf16.mxu0 0
    %2206 = vmatmul.mubr.bf16.gmra.mxu0 %v2172
    %v2207 = vpop.f32.mrf.mxu0
    %v2208 = vadd.f32 0.0, %v2207
    %v2209 = vpop.f32.mrf.mxu0
    %v2210 = vpop.f32.mrf.mxu0
    %v2211 = vpop.f32.mrf.mxu0
    %2212 = vdwg.mxu0
    %v2213 = vadd.f32 %v2032, %v2208
    %v2214 = vadd.f32 %v2213, %v268
    %v2215 = vmax.f32 %v2214, 0.0
    %v2216 = vpack.c.bf16 %v2215, %v2215
    %2217 = vmatprep.subr.bf16.mxu0 %v936
    %2218 = vmatpush1.bf16.msra.mxu0 %v935
    %2219 = vmatprep.subr.bf16.mxu0 %v933
    %2220 = vmatpush1.bf16.msra.mxu0 %v932
    %2221 = vmatprep.subr.bf16.mxu0 %v930
    %2222 = vmatpush1.bf16.msra.mxu0 %v929
    %2223 = vmatprep.subr.bf16.mxu0 %v927
    %2224 = vmatpush1.bf16.msra.mxu0 %v926
    %2225 = vmatprep.subr.bf16.mxu0 %v924
    %2226 = vmatpush1.bf16.msra.mxu0 %v923
    %2227 = vmatprep.subr.bf16.mxu0 %v921
    %2228 = vmatpush1.bf16.msra.mxu0 %v920
    %2229 = vmatprep.subr.bf16.mxu0 %v918
    %2230 = vmatpush1.bf16.msra.mxu0 %v917
    %2231 = vmatprep.subr.bf16.mxu0 %v915
    %2232 = vmatpush1.bf16.msra.mxu0 %v914
    %2233 = vmatprep.subr.bf16.mxu0 0
    %2234 = vmatpush2.bf16.msra.mxu0 0
    %2235 = vmatprep.subr.bf16.mxu0 0
    %2236 = vmatpush2.bf16.msra.mxu0 0
    %2237 = vmatprep.subr.bf16.mxu0 0
    %2238 = vmatpush2.bf16.msra.mxu0 0
    %2239 = vmatprep.subr.bf16.mxu0 0
    %2240 = vmatpush2.bf16.msra.mxu0 0
    %2241 = vmatprep.subr.bf16.mxu0 0
    %2242 = vmatpush2.bf16.msra.mxu0 0
    %2243 = vmatprep.subr.bf16.mxu0 0
    %2244 = vmatpush2.bf16.msra.mxu0 0
    %2245 = vmatprep.subr.bf16.mxu0 0
    %2246 = vmatpush2.bf16.msra.mxu0 0
    %2247 = vmatprep.subr.bf16.mxu0 0
    %2248 = vmatpush2.bf16.msra.mxu0 0
    %2249 = vmatprep.mubr.bf16.mxu0 0
    %2250 = vmatmul.mubr.bf16.gmra.mxu0 %v2216
    %v2251 = vpop.f32.mrf.mxu0
    %v2252 = vadd.f32 %v966, %v2251
    %v2253 = vpop.f32.mrf.mxu0
    %v2254 = vadd.f32 %v970, %v2253
    %v2255 = vpop.f32.mrf.mxu0
    %v2256 = vpop.f32.mrf.mxu0
    %2257 = vdwg.mxu0
    %2258 = vmatprep.subr.bf16.mxu0 0
    %2259 = vmatpush1.bf16.msra.mxu0 %v937
    %2260 = vmatprep.subr.bf16.mxu0 0
    %2261 = vmatpush1.bf16.msra.mxu0 %v934
    %2262 = vmatprep.subr.bf16.mxu0 0
    %2263 = vmatpush1.bf16.msra.mxu0 %v931
    %2264 = vmatprep.subr.bf16.mxu0 0
    %2265 = vmatpush1.bf16.msra.mxu0 %v928
    %2266 = vmatprep.subr.bf16.mxu0 0
    %2267 = vmatpush1.bf16.msra.mxu0 %v925
    %2268 = vmatprep.subr.bf16.mxu0 0
    %2269 = vmatpush1.bf16.msra.mxu0 %v922
    %2270 = vmatprep.subr.bf16.mxu0 0
    %2271 = vmatpush1.bf16.msra.mxu0 %v919
    %2272 = vmatprep.subr.bf16.mxu0 0
    %2273 = vmatpush1.bf16.msra.mxu0 %v916
    %2274 = vmatprep.subr.bf16.mxu0 0
    %2275 = vmatpush2.bf16.msra.mxu0 0
    %2276 = vmatprep.subr.bf16.mxu0 0
    %2277 = vmatpush2.bf16.msra.mxu0 0
    %2278 = vmatprep.subr.bf16.mxu0 0
    %2279 = vmatpush2.bf16.msra.mxu0 0
    %2280 = vmatprep.subr.bf16.mxu0 0
    %2281 = vmatpush2.bf16.msra.mxu0 0
    %2282 = vmatprep.subr.bf16.mxu0 0
    %2283 = vmatpush2.bf16.msra.mxu0 0
    %2284 = vmatprep.subr.bf16.mxu0 0
    %2285 = vmatpush2.bf16.msra.mxu0 0
    %2286 = vmatprep.subr.bf16.mxu0 0
    %2287 = vmatpush2.bf16.msra.mxu0 0
    %2288 = vmatprep.subr.bf16.mxu0 0
    %2289 = vmatpush2.bf16.msra.mxu0 0
    %2290 = vmatprep.mubr.bf16.mxu0 0
    %2291 = vmatmul.mubr.bf16.gmra.mxu0 %v2216
    %v2292 = vpop.f32.mrf.mxu0
    %v2293 = vadd.f32 %v974, %v2292
    %v2294 = vpop.f32.mrf.mxu0
    %v2295 = vpop.f32.mrf.mxu0
    %v2296 = vpop.f32.mrf.mxu0
    %2297 = vdwg.mxu0
    %v2298 = vadd.f32 %v2073, %v1063
    %v2299 = vadd.f32 %v2112, %v1067
    %v2300 = vadd.f32 %v2114, %v1071
    %v2301 = vadd.f32 %v2252, %v2298
    %v2302 = vxor.u32 %v2301, 2147483648
    %v2303 = vmul.f32 %v2302, 1.442695
    %v2304 = vpow.pop %v2303
    %v2305 = vadd.f32 %v2304, 1.0
    %v2306 = vrcp.pop %v2305
    %v2307 = vmul.f32 1.0, %v2306
    %v2308 = vadd.f32 %v2254, %v2299
    %v2309 = vxor.u32 %v2308, 2147483648
    %v2310 = vmul.f32 %v2309, 1.442695
    %v2311 = vpow.pop %v2310
    %v2312 = vadd.f32 %v2311, 1.0
    %v2313 = vrcp.pop %v2312
    %v2314 = vmul.f32 1.0, %v2313
    %v2315 = vmul.f32 %v2307, %v2300
    %v2316 = vadd.f32 %v2293, %v2315
    %v2317 = vtanh.pop %v2316
    %v2318 = vsub.f32 1.0, %v2314
    %v2319 = vmul.f32 %v2318, %v2317
    %v2320 = vmul.f32 %v2314, %v1928
    %v2321 = vadd.f32 %v2319, %v2320
    %v2322 = vpack.c.bf16 %v2321, %v2321
    %2323 = vmatprep.subr.bf16.mxu0 0
    %2324 = vmatpush1.bf16.msra.mxu0 %v1139
    %2325 = vmatprep.subr.bf16.mxu0 0
    %2326 = vmatpush1.bf16.msra.mxu0 %v1138
    %2327 = vmatprep.subr.bf16.mxu0 0
    %2328 = vmatpush1.bf16.msra.mxu0 %v1137
    %2329 = vmatprep.subr.bf16.mxu0 0
    %2330 = vmatpush1.bf16.msra.mxu0 %v1136
    %2331 = vmatprep.subr.bf16.mxu0 0
    %2332 = vmatpush1.bf16.msra.mxu0 %v1135
    %2333 = vmatprep.subr.bf16.mxu0 0
    %2334 = vmatpush1.bf16.msra.mxu0 %v1134
    %2335 = vmatprep.subr.bf16.mxu0 0
    %2336 = vmatpush1.bf16.msra.mxu0 %v1133
    %2337 = vmatprep.subr.bf16.mxu0 0
    %2338 = vmatpush1.bf16.msra.mxu0 %v1132
    %2339 = vmatprep.subr.bf16.mxu0 0
    %2340 = vmatpush2.bf16.msra.mxu0 0
    %2341 = vmatprep.subr.bf16.mxu0 0
    %2342 = vmatpush2.bf16.msra.mxu0 0
    %2343 = vmatprep.subr.bf16.mxu0 0
    %2344 = vmatpush2.bf16.msra.mxu0 0
    %2345 = vmatprep.subr.bf16.mxu0 0
    %2346 = vmatpush2.bf16.msra.mxu0 0
    %2347 = vmatprep.subr.bf16.mxu0 0
    %2348 = vmatpush2.bf16.msra.mxu0 0
    %2349 = vmatprep.subr.bf16.mxu0 0
    %2350 = vmatpush2.bf16.msra.mxu0 0
    %2351 = vmatprep.subr.bf16.mxu0 0
    %2352 = vmatpush2.bf16.msra.mxu0 0
    %2353 = vmatprep.subr.bf16.mxu0 0
    %2354 = vmatpush2.bf16.msra.mxu0 0
    %2355 = vmatprep.mubr.bf16.mxu0 0
    %2356 = vmatmul.mubr.bf16.gmra.mxu0 %v2322
    %v2357 = vpop.f32.mrf.mxu0
    %v2358 = vadd.f32 %v271, %v2357
    %v2359 = vpop.f32.mrf.mxu0
    %v2360 = vpop.f32.mrf.mxu0
    %v2361 = vpop.f32.mrf.mxu0
    %2362 = vdwg.mxu0
    %v2363 = vsel %vm640, %v2358, -inf
    %2364 = vmax.xlane.f32.xlu0 %v2363
    %v2365 = vpop.xlane.xlu0 %2364
    %v2366 = vsub.f32 %v2358, %v2365
    %v2367 = vmul.f32 %v2366, 1.442695
    %v2368 = vpow.pop %v2367
    %v2369 = vsel %vm640, %v2368, 0.0
    %2370 = vadd.xlane.f32.xlu0 %v2369
    %v2371 = vpop.xlane.xlu0 %2370
    %v2372 = vlog2.pop %v2371
    %v2373 = vmul.f32 %v2372, 0.6931472
    %v2374 = vadd.f32 %v2365, %v2373
    %v2375 = vsub.f32 %v2358, %v2374
    %2376 = vst [vmem:[#allocation14 + $0x3] sm:$0x1] %v2375
    %2377 = vst [vmem:[#allocation14 + $0xb] sm:$0x1] %v2321
    %2378 = vst [vmem:[#allocation14 + $0x13] sm:$0x1] %v2130
    %v2379 = vld [vmem:[#allocation2] sm:$0x4]
    %v2381 = vunpack.c.l.b16 %v2379
    %v2382 = vpack.c.b16 %v2381, %v2381
    %v2383 = vrot.slane %v2382, 2
    %2385 = vmatprep.subr.bf16.mxu0 %v338
    %2386 = vmatpush1.bf16.msra.mxu0 %v337
    %2387 = vmatprep.subr.bf16.mxu0 %v336
    %2388 = vmatpush1.bf16.msra.mxu0 %v335
    %2389 = vmatprep.subr.bf16.mxu0 %v334
    %2390 = vmatpush1.bf16.msra.mxu0 %v333
    %2391 = vmatprep.subr.bf16.mxu0 %v332
    %2392 = vmatpush1.bf16.msra.mxu0 %v331
    %2393 = vmatprep.subr.bf16.mxu0 %v330
    %2394 = vmatpush1.bf16.msra.mxu0 %v329
    %2395 = vmatprep.subr.bf16.mxu0 %v328
    %2396 = vmatpush1.bf16.msra.mxu0 %v327
    %2397 = vmatprep.subr.bf16.mxu0 %v326
    %2398 = vmatpush1.bf16.msra.mxu0 %v325
    %2399 = vmatprep.subr.bf16.mxu0 %v324
    %2400 = vmatpush1.bf16.msra.mxu0 %v323
    %2401 = vmatprep.subr.bf16.mxu0 0
    %2402 = vmatpush2.bf16.msra.mxu0 0
    %2403 = vmatprep.subr.bf16.mxu0 0
    %2404 = vmatpush2.bf16.msra.mxu0 0
    %2405 = vmatprep.subr.bf16.mxu0 0
    %2406 = vmatpush2.bf16.msra.mxu0 0
    %2407 = vmatprep.subr.bf16.mxu0 0
    %2408 = vmatpush2.bf16.msra.mxu0 0
    %2409 = vmatprep.subr.bf16.mxu0 0
    %2410 = vmatpush2.bf16.msra.mxu0 0
    %2411 = vmatprep.subr.bf16.mxu0 0
    %2412 = vmatpush2.bf16.msra.mxu0 0
    %2413 = vmatprep.subr.bf16.mxu0 0
    %2414 = vmatpush2.bf16.msra.mxu0 0
    %2415 = vmatprep.subr.bf16.mxu0 0
    %2416 = vmatpush2.bf16.msra.mxu0 0
    %2417 = vmatprep.mubr.bf16.mxu0 0
    %2418 = vmatmul.mubr.bf16.gmra.mxu0 %v2383
    %v2419 = vpop.f32.mrf.mxu0
    %v2420 = vadd.f32 0.0, %v2419
    %v2421 = vpop.f32.mrf.mxu0
    %v2422 = vadd.f32 0.0, %v2421
    %v2423 = vpop.f32.mrf.mxu0
    %v2424 = vpop.f32.mrf.mxu0
    %2425 = vdwg.mxu0
    %2426 = vmatprep.subr.bf16.mxu0 %v521
    %2427 = vmatpush1.bf16.msra.mxu0 %v520
    %2428 = vmatprep.subr.bf16.mxu0 %v517
    %2429 = vmatpush1.bf16.msra.mxu0 %v516
    %2430 = vmatprep.subr.bf16.mxu0 %v513
    %2431 = vmatpush1.bf16.msra.mxu0 %v512
    %2432 = vmatprep.subr.bf16.mxu0 %v509
    %2433 = vmatpush1.bf16.msra.mxu0 %v508
    %2434 = vmatprep.subr.bf16.mxu0 %v505
    %2435 = vmatpush1.bf16.msra.mxu0 %v504
    %2436 = vmatprep.subr.bf16.mxu0 %v501
    %2437 = vmatpush1.bf16.msra.mxu0 %v500
    %2438 = vmatprep.subr.bf16.mxu0 %v497
    %2439 = vmatpush1.bf16.msra.mxu0 %v496
    %2440 = vmatprep.subr.bf16.mxu0 %v493
    %2441 = vmatpush1.bf16.msra.mxu0 %v492
    %2442 = vmatprep.subr.bf16.mxu0 0
    %2443 = vmatpush2.bf16.msra.mxu0 0
    %2444 = vmatprep.subr.bf16.mxu0 0
    %2445 = vmatpush2.bf16.msra.mxu0 0
    %2446 = vmatprep.subr.bf16.mxu0 0
    %2447 = vmatpush2.bf16.msra.mxu0 0
    %2448 = vmatprep.subr.bf16.mxu0 0
    %2449 = vmatpush2.bf16.msra.mxu0 0
    %2450 = vmatprep.subr.bf16.mxu0 0
    %2451 = vmatpush2.bf16.msra.mxu0 0
    %2452 = vmatprep.subr.bf16.mxu0 0
    %2453 = vmatpush2.bf16.msra.mxu0 0
    %2454 = vmatprep.subr.bf16.mxu0 0
    %2455 = vmatpush2.bf16.msra.mxu0 0
    %2456 = vmatprep.subr.bf16.mxu0 0
    %2457 = vmatpush2.bf16.msra.mxu0 0
    %2458 = vmatprep.mubr.bf16.mxu0 0
    %2459 = vmatmul.mubr.bf16.gmra.mxu0 %v2322
    %v2460 = vpop.f32.mrf.mxu0
    %v2461 = vadd.f32 0.0, %v2460
    %v2462 = vpop.f32.mrf.mxu0
    %v2463 = vadd.f32 0.0, %v2462
    %v2464 = vpop.f32.mrf.mxu0
    %v2465 = vpop.f32.mrf.mxu0
    %2466 = vdwg.mxu0
    %2467 = vmatprep.subr.bf16.mxu0 %v523
    %2468 = vmatpush1.bf16.msra.mxu0 %v522
    %2469 = vmatprep.subr.bf16.mxu0 %v519
    %2470 = vmatpush1.bf16.msra.mxu0 %v518
    %2471 = vmatprep.subr.bf16.mxu0 %v515
    %2472 = vmatpush1.bf16.msra.mxu0 %v514
    %2473 = vmatprep.subr.bf16.mxu0 %v511
    %2474 = vmatpush1.bf16.msra.mxu0 %v510
    %2475 = vmatprep.subr.bf16.mxu0 %v507
    %2476 = vmatpush1.bf16.msra.mxu0 %v506
    %2477 = vmatprep.subr.bf16.mxu0 %v503
    %2478 = vmatpush1.bf16.msra.mxu0 %v502
    %2479 = vmatprep.subr.bf16.mxu0 %v499
    %2480 = vmatpush1.bf16.msra.mxu0 %v498
    %2481 = vmatprep.subr.bf16.mxu0 %v495
    %2482 = vmatpush1.bf16.msra.mxu0 %v494
    %2483 = vmatprep.subr.bf16.mxu0 0
    %2484 = vmatpush2.bf16.msra.mxu0 0
    %2485 = vmatprep.subr.bf16.mxu0 0
    %2486 = vmatpush2.bf16.msra.mxu0 0
    %2487 = vmatprep.subr.bf16.mxu0 0
    %2488 = vmatpush2.bf16.msra.mxu0 0
    %2489 = vmatprep.subr.bf16.mxu0 0
    %2490 = vmatpush2.bf16.msra.mxu0 0
    %2491 = vmatprep.subr.bf16.mxu0 0
    %2492 = vmatpush2.bf16.msra.mxu0 0
    %2493 = vmatprep.subr.bf16.mxu0 0
    %2494 = vmatpush2.bf16.msra.mxu0 0
    %2495 = vmatprep.subr.bf16.mxu0 0
    %2496 = vmatpush2.bf16.msra.mxu0 0
    %2497 = vmatprep.subr.bf16.mxu0 0
    %2498 = vmatpush2.bf16.msra.mxu0 0
    %2499 = vmatprep.mubr.bf16.mxu0 0
    %2500 = vmatmul.mubr.bf16.gmra.mxu0 %v2322
    %v2501 = vpop.f32.mrf.mxu0
    %v2502 = vadd.f32 0.0, %v2501
    %v2503 = vpop.f32.mrf.mxu0
    %v2504 = vadd.f32 0.0, %v2503
    %v2505 = vpop.f32.mrf.mxu0
    %v2506 = vpop.f32.mrf.mxu0
    %2507 = vdwg.mxu0
    %v2508 = vadd.f32 %v2420, %v2461
    %v2509 = vadd.f32 %v2508, %v267
    %v2510 = vsel %vm640, %v2509, -inf
    %2511 = vmax.xlane.f32.xlu0 %v2510
    %v2512 = vpop.xlane.xlu0 %2511
    %v2513 = vsub.f32 %v2509, %v2512
    %v2514 = vmul.f32 %v2513, 1.442695
    %v2515 = vpow.pop %v2514
    %v2516 = vsel %vm640, %v2515, 0.0
    %2517 = vadd.xlane.f32.xlu0 %v2516
    %v2518 = vpop.xlane.xlu0 %2517
    %v2519 = vrcp.pop %v2518
    %v2520 = vmul.f32 %v2515, %v2519
    %v2521 = vpack.c.bf16 %v2520, %v2520
    %2522 = vmatprep.subr.bf16.mxu0 0
    %2523 = vmatpush1.bf16.msra.mxu0 %v692
    %2524 = vmatprep.subr.bf16.mxu0 0
    %2525 = vmatpush1.bf16.msra.mxu0 %v691
    %2526 = vmatprep.subr.bf16.mxu0 0
    %2527 = vmatpush1.bf16.msra.mxu0 %v690
    %2528 = vmatprep.subr.bf16.mxu0 0
    %2529 = vmatpush1.bf16.msra.mxu0 %v689
    %2530 = vmatprep.subr.bf16.mxu0 0
    %2531 = vmatpush1.bf16.msra.mxu0 %v688
    %2532 = vmatprep.subr.bf16.mxu0 0
    %2533 = vmatpush1.bf16.msra.mxu0 %v687
    %2534 = vmatprep.subr.bf16.mxu0 0
    %2535 = vmatpush1.bf16.msra.mxu0 %v686
    %2536 = vmatprep.subr.bf16.mxu0 0
    %2537 = vmatpush1.bf16.msra.mxu0 %v685
    %2538 = vmatprep.subr.bf16.mxu0 0
    %2539 = vmatpush2.bf16.msra.mxu0 0
    %2540 = vmatprep.subr.bf16.mxu0 0
    %2541 = vmatpush2.bf16.msra.mxu0 0
    %2542 = vmatprep.subr.bf16.mxu0 0
    %2543 = vmatpush2.bf16.msra.mxu0 0
    %2544 = vmatprep.subr.bf16.mxu0 0
    %2545 = vmatpush2.bf16.msra.mxu0 0
    %2546 = vmatprep.subr.bf16.mxu0 0
    %2547 = vmatpush2.bf16.msra.mxu0 0
    %2548 = vmatprep.subr.bf16.mxu0 0
    %2549 = vmatpush2.bf16.msra.mxu0 0
    %2550 = vmatprep.subr.bf16.mxu0 0
    %2551 = vmatpush2.bf16.msra.mxu0 0
    %2552 = vmatprep.subr.bf16.mxu0 0
    %2553 = vmatpush2.bf16.msra.mxu0 0
    %2554 = vmatprep.mubr.bf16.mxu0 0
    %2555 = vmatmul.mubr.bf16.gmra.mxu0 %v2521
    %v2556 = vpop.f32.mrf.mxu0
    %v2557 = vadd.f32 0.0, %v2556
    %v2558 = vpop.f32.mrf.mxu0
    %v2559 = vpop.f32.mrf.mxu0
    %v2560 = vpop.f32.mrf.mxu0
    %2561 = vdwg.mxu0
    %v2562 = vpack.c.bf16 %v2557, %v2557
    %2563 = vmatprep.subr.bf16.mxu0 0
    %2564 = vmatpush1.bf16.msra.mxu0 %v781
    %2565 = vmatprep.subr.bf16.mxu0 0
    %2566 = vmatpush1.bf16.msra.mxu0 %v780
    %2567 = vmatprep.subr.bf16.mxu0 0
    %2568 = vmatpush1.bf16.msra.mxu0 %v779
    %2569 = vmatprep.subr.bf16.mxu0 0
    %2570 = vmatpush1.bf16.msra.mxu0 %v778
    %2571 = vmatprep.subr.bf16.mxu0 0
    %2572 = vmatpush1.bf16.msra.mxu0 %v777
    %2573 = vmatprep.subr.bf16.mxu0 0
    %2574 = vmatpush1.bf16.msra.mxu0 %v776
    %2575 = vmatprep.subr.bf16.mxu0 0
    %2576 = vmatpush1.bf16.msra.mxu0 %v775
    %2577 = vmatprep.subr.bf16.mxu0 0
    %2578 = vmatpush1.bf16.msra.mxu0 %v774
    %2579 = vmatprep.subr.bf16.mxu0 0
    %2580 = vmatpush2.bf16.msra.mxu0 0
    %2581 = vmatprep.subr.bf16.mxu0 0
    %2582 = vmatpush2.bf16.msra.mxu0 0
    %2583 = vmatprep.subr.bf16.mxu0 0
    %2584 = vmatpush2.bf16.msra.mxu0 0
    %2585 = vmatprep.subr.bf16.mxu0 0
    %2586 = vmatpush2.bf16.msra.mxu0 0
    %2587 = vmatprep.subr.bf16.mxu0 0
    %2588 = vmatpush2.bf16.msra.mxu0 0
    %2589 = vmatprep.subr.bf16.mxu0 0
    %2590 = vmatpush2.bf16.msra.mxu0 0
    %2591 = vmatprep.subr.bf16.mxu0 0
    %2592 = vmatpush2.bf16.msra.mxu0 0
    %2593 = vmatprep.subr.bf16.mxu0 0
    %2594 = vmatpush2.bf16.msra.mxu0 0
    %2595 = vmatprep.mubr.bf16.mxu0 0
    %2596 = vmatmul.mubr.bf16.gmra.mxu0 %v2562
    %v2597 = vpop.f32.mrf.mxu0
    %v2598 = vadd.f32 0.0, %v2597
    %v2599 = vpop.f32.mrf.mxu0
    %v2600 = vpop.f32.mrf.mxu0
    %v2601 = vpop.f32.mrf.mxu0
    %2602 = vdwg.mxu0
    %v2603 = vadd.f32 %v2422, %v2598
    %v2604 = vadd.f32 %v2603, %v268
    %v2605 = vmax.f32 %v2604, 0.0
    %v2606 = vpack.c.bf16 %v2605, %v2605
    %2607 = vmatprep.subr.bf16.mxu0 %v936
    %2608 = vmatpush1.bf16.msra.mxu0 %v935
    %2609 = vmatprep.subr.bf16.mxu0 %v933
    %2610 = vmatpush1.bf16.msra.mxu0 %v932
    %2611 = vmatprep.subr.bf16.mxu0 %v930
    %2612 = vmatpush1.bf16.msra.mxu0 %v929
    %2613 = vmatprep.subr.bf16.mxu0 %v927
    %2614 = vmatpush1.bf16.msra.mxu0 %v926
    %2615 = vmatprep.subr.bf16.mxu0 %v924
    %2616 = vmatpush1.bf16.msra.mxu0 %v923
    %2617 = vmatprep.subr.bf16.mxu0 %v921
    %2618 = vmatpush1.bf16.msra.mxu0 %v920
    %2619 = vmatprep.subr.bf16.mxu0 %v918
    %2620 = vmatpush1.bf16.msra.mxu0 %v917
    %2621 = vmatprep.subr.bf16.mxu0 %v915
    %2622 = vmatpush1.bf16.msra.mxu0 %v914
    %2623 = vmatprep.subr.bf16.mxu0 0
    %2624 = vmatpush2.bf16.msra.mxu0 0
    %2625 = vmatprep.subr.bf16.mxu0 0
    %2626 = vmatpush2.bf16.msra.mxu0 0
    %2627 = vmatprep.subr.bf16.mxu0 0
    %2628 = vmatpush2.bf16.msra.mxu0 0
    %2629 = vmatprep.subr.bf16.mxu0 0
    %2630 = vmatpush2.bf16.msra.mxu0 0
    %2631 = vmatprep.subr.bf16.mxu0 0
    %2632 = vmatpush2.bf16.msra.mxu0 0
    %2633 = vmatprep.subr.bf16.mxu0 0
    %2634 = vmatpush2.bf16.msra.mxu0 0
    %2635 = vmatprep.subr.bf16.mxu0 0
    %2636 = vmatpush2.bf16.msra.mxu0 0
    %2637 = vmatprep.subr.bf16.mxu0 0
    %2638 = vmatpush2.bf16.msra.mxu0 0
    %2639 = vmatprep.mubr.bf16.mxu0 0
    %2640 = vmatmul.mubr.bf16.gmra.mxu0 %v2606
    %v2641 = vpop.f32.mrf.mxu0
    %v2642 = vadd.f32 %v966, %v2641
    %v2643 = vpop.f32.mrf.mxu0
    %v2644 = vadd.f32 %v970, %v2643
    %v2645 = vpop.f32.mrf.mxu0
    %v2646 = vpop.f32.mrf.mxu0
    %2647 = vdwg.mxu0
    %2648 = vmatprep.subr.bf16.mxu0 0
    %2649 = vmatpush1.bf16.msra.mxu0 %v937
    %2650 = vmatprep.subr.bf16.mxu0 0
    %2651 = vmatpush1.bf16.msra.mxu0 %v934
    %2652 = vmatprep.subr.bf16.mxu0 0
    %2653 = vmatpush1.bf16.msra.mxu0 %v931
    %2654 = vmatprep.subr.bf16.mxu0 0
    %2655 = vmatpush1.bf16.msra.mxu0 %v928
    %2656 = vmatprep.subr.bf16.mxu0 0
    %2657 = vmatpush1.bf16.msra.mxu0 %v925
    %2658 = vmatprep.subr.bf16.mxu0 0
    %2659 = vmatpush1.bf16.msra.mxu0 %v922
    %2660 = vmatprep.subr.bf16.mxu0 0
    %2661 = vmatpush1.bf16.msra.mxu0 %v919
    %2662 = vmatprep.subr.bf16.mxu0 0
    %2663 = vmatpush1.bf16.msra.mxu0 %v916
    %2664 = vmatprep.subr.bf16.mxu0 0
    %2665 = vmatpush2.bf16.msra.mxu0 0
    %2666 = vmatprep.subr.bf16.mxu0 0
    %2667 = vmatpush2.bf16.msra.mxu0 0
    %2668 = vmatprep.subr.bf16.mxu0 0
    %2669 = vmatpush2.bf16.msra.mxu0 0
    %2670 = vmatprep.subr.bf16.mxu0 0
    %2671 = vmatpush2.bf16.msra.mxu0 0
    %2672 = vmatprep.subr.bf16.mxu0 0
    %2673 = vmatpush2.bf16.msra.mxu0 0
    %2674 = vmatprep.subr.bf16.mxu0 0
    %2675 = vmatpush2.bf16.msra.mxu0 0
    %2676 = vmatprep.subr.bf16.mxu0 0
    %2677 = vmatpush2.bf16.msra.mxu0 0
    %2678 = vmatprep.subr.bf16.mxu0 0
    %2679 = vmatpush2.bf16.msra.mxu0 0
    %2680 = vmatprep.mubr.bf16.mxu0 0
    %2681 = vmatmul.mubr.bf16.gmra.mxu0 %v2606
    %v2682 = vpop.f32.mrf.mxu0
    %v2683 = vadd.f32 %v974, %v2682
    %v2684 = vpop.f32.mrf.mxu0
    %v2685 = vpop.f32.mrf.mxu0
    %v2686 = vpop.f32.mrf.mxu0
    %2687 = vdwg.mxu0
    %v2688 = vadd.f32 %v2463, %v1063
    %v2689 = vadd.f32 %v2502, %v1067
    %v2690 = vadd.f32 %v2504, %v1071
    %v2691 = vadd.f32 %v2642, %v2688
    %v2692 = vxor.u32 %v2691, 2147483648
    %v2693 = vmul.f32 %v2692, 1.442695
    %v2694 = vpow.pop %v2693
    %v2695 = vadd.f32 %v2694, 1.0
    %v2696 = vrcp.pop %v2695
    %v2697 = vmul.f32 1.0, %v2696
    %v2698 = vadd.f32 %v2644, %v2689
    %v2699 = vxor.u32 %v2698, 2147483648
    %v2700 = vmul.f32 %v2699, 1.442695
    %v2701 = vpow.pop %v2700
    %v2702 = vadd.f32 %v2701, 1.0
    %v2703 = vrcp.pop %v2702
    %v2704 = vmul.f32 1.0, %v2703
    %v2705 = vmul.f32 %v2697, %v2690
    %v2706 = vadd.f32 %v2683, %v2705
    %v2707 = vtanh.pop %v2706
    %v2708 = vsub.f32 1.0, %v2704
    %v2709 = vmul.f32 %v2708, %v2707
    %v2710 = vmul.f32 %v2704, %v2321
    %v2711 = vadd.f32 %v2709, %v2710
    %v2712 = vpack.c.bf16 %v2711, %v2711
    %2713 = vmatprep.subr.bf16.mxu0 0
    %2714 = vmatpush1.bf16.msra.mxu0 %v1139
    %2715 = vmatprep.subr.bf16.mxu0 0
    %2716 = vmatpush1.bf16.msra.mxu0 %v1138
    %2717 = vmatprep.subr.bf16.mxu0 0
    %2718 = vmatpush1.bf16.msra.mxu0 %v1137
    %2719 = vmatprep.subr.bf16.mxu0 0
    %2720 = vmatpush1.bf16.msra.mxu0 %v1136
    %2721 = vmatprep.subr.bf16.mxu0 0
    %2722 = vmatpush1.bf16.msra.mxu0 %v1135
    %2723 = vmatprep.subr.bf16.mxu0 0
    %2724 = vmatpush1.bf16.msra.mxu0 %v1134
    %2725 = vmatprep.subr.bf16.mxu0 0
    %2726 = vmatpush1.bf16.msra.mxu0 %v1133
    %2727 = vmatprep.subr.bf16.mxu0 0
    %2728 = vmatpush1.bf16.msra.mxu0 %v1132
    %2729 = vmatprep.subr.bf16.mxu0 0
    %2730 = vmatpush2.bf16.msra.mxu0 0
    %2731 = vmatprep.subr.bf16.mxu0 0
    %2732 = vmatpush2.bf16.msra.mxu0 0
    %2733 = vmatprep.subr.bf16.mxu0 0
    %2734 = vmatpush2.bf16.msra.mxu0 0
    %2735 = vmatprep.subr.bf16.mxu0 0
    %2736 = vmatpush2.bf16.msra.mxu0 0
    %2737 = vmatprep.subr.bf16.mxu0 0
    %2738 = vmatpush2.bf16.msra.mxu0 0
    %2739 = vmatprep.subr.bf16.mxu0 0
    %2740 = vmatpush2.bf16.msra.mxu0 0
    %2741 = vmatprep.subr.bf16.mxu0 0
    %2742 = vmatpush2.bf16.msra.mxu0 0
    %2743 = vmatprep.subr.bf16.mxu0 0
    %2744 = vmatpush2.bf16.msra.mxu0 0
    %2745 = vmatprep.mubr.bf16.mxu0 0
    %2746 = vmatmul.mubr.bf16.gmra.mxu0 %v2712
    %v2747 = vpop.f32.mrf.mxu0
    %v2748 = vadd.f32 %v271, %v2747
    %v2749 = vpop.f32.mrf.mxu0
    %v2750 = vpop.f32.mrf.mxu0
    %v2751 = vpop.f32.mrf.mxu0
    %2752 = vdwg.mxu0
    %v2753 = vsel %vm640, %v2748, -inf
    %2754 = vmax.xlane.f32.xlu0 %v2753
    %v2755 = vpop.xlane.xlu0 %2754
    %v2756 = vsub.f32 %v2748, %v2755
    %v2757 = vmul.f32 %v2756, 1.442695
    %v2758 = vpow.pop %v2757
    %v2759 = vsel %vm640, %v2758, 0.0
    %2760 = vadd.xlane.f32.xlu0 %v2759
    %v2761 = vpop.xlane.xlu0 %2760
    %v2762 = vlog2.pop %v2761
    %v2763 = vmul.f32 %v2762, 0.6931472
    %v2764 = vadd.f32 %v2755, %v2763
    %v2765 = vsub.f32 %v2748, %v2764
    %2766 = vst [vmem:[#allocation14 + $0x4] sm:$0x1] %v2765
    %2767 = vst [vmem:[#allocation14 + $0xc] sm:$0x1] %v2711
    %2768 = vst [vmem:[#allocation14 + $0x14] sm:$0x1] %v2520
    %v2769 = vld [vmem:[#allocation2] sm:$0x4]
    %v2771 = vunpack.c.l.b16 %v2769
    %v2772 = vpack.c.b16 %v2771, %v2771
    %v2774 = vshrl.u32 %v2772, 16
    %v2776 = vrot.slane %v2774, 2
    %2778 = vmatprep.subr.bf16.mxu0 %v338
    %2779 = vmatpush1.bf16.msra.mxu0 %v337
    %2780 = vmatprep.subr.bf16.mxu0 %v336
    %2781 = vmatpush1.bf16.msra.mxu0 %v335
    %2782 = vmatprep.subr.bf16.mxu0 %v334
    %2783 = vmatpush1.bf16.msra.mxu0 %v333
    %2784 = vmatprep.subr.bf16.mxu0 %v332
    %2785 = vmatpush1.bf16.msra.mxu0 %v331
    %2786 = vmatprep.subr.bf16.mxu0 %v330
    %2787 = vmatpush1.bf16.msra.mxu0 %v329
    %2788 = vmatprep.subr.bf16.mxu0 %v328
    %2789 = vmatpush1.bf16.msra.mxu0 %v327
    %2790 = vmatprep.subr.bf16.mxu0 %v326
    %2791 = vmatpush1.bf16.msra.mxu0 %v325
    %2792 = vmatprep.subr.bf16.mxu0 %v324
    %2793 = vmatpush1.bf16.msra.mxu0 %v323
    %2794 = vmatprep.subr.bf16.mxu0 0
    %2795 = vmatpush2.bf16.msra.mxu0 0
    %2796 = vmatprep.subr.bf16.mxu0 0
    %2797 = vmatpush2.bf16.msra.mxu0 0
    %2798 = vmatprep.subr.bf16.mxu0 0
    %2799 = vmatpush2.bf16.msra.mxu0 0
    %2800 = vmatprep.subr.bf16.mxu0 0
    %2801 = vmatpush2.bf16.msra.mxu0 0
    %2802 = vmatprep.subr.bf16.mxu0 0
    %2803 = vmatpush2.bf16.msra.mxu0 0
    %2804 = vmatprep.subr.bf16.mxu0 0
    %2805 = vmatpush2.bf16.msra.mxu0 0
    %2806 = vmatprep.subr.bf16.mxu0 0
    %2807 = vmatpush2.bf16.msra.mxu0 0
    %2808 = vmatprep.subr.bf16.mxu0 0
    %2809 = vmatpush2.bf16.msra.mxu0 0
    %2810 = vmatprep.mubr.bf16.mxu0 0
    %2811 = vmatmul.mubr.bf16.gmra.mxu0 %v2776
    %v2812 = vpop.f32.mrf.mxu0
    %v2813 = vadd.f32 0.0, %v2812
    %v2814 = vpop.f32.mrf.mxu0
    %v2815 = vadd.f32 0.0, %v2814
    %v2816 = vpop.f32.mrf.mxu0
    %v2817 = vpop.f32.mrf.mxu0
    %2818 = vdwg.mxu0
    %2819 = vmatprep.subr.bf16.mxu0 %v521
    %2820 = vmatpush1.bf16.msra.mxu0 %v520
    %2821 = vmatprep.subr.bf16.mxu0 %v517
    %2822 = vmatpush1.bf16.msra.mxu0 %v516
    %2823 = vmatprep.subr.bf16.mxu0 %v513
    %2824 = vmatpush1.bf16.msra.mxu0 %v512
    %2825 = vmatprep.subr.bf16.mxu0 %v509
    %2826 = vmatpush1.bf16.msra.mxu0 %v508
    %2827 = vmatprep.subr.bf16.mxu0 %v505
    %2828 = vmatpush1.bf16.msra.mxu0 %v504
    %2829 = vmatprep.subr.bf16.mxu0 %v501
    %2830 = vmatpush1.bf16.msra.mxu0 %v500
    %2831 = vmatprep.subr.bf16.mxu0 %v497
    %2832 = vmatpush1.bf16.msra.mxu0 %v496
    %2833 = vmatprep.subr.bf16.mxu0 %v493
    %2834 = vmatpush1.bf16.msra.mxu0 %v492
    %2835 = vmatprep.subr.bf16.mxu0 0
    %2836 = vmatpush2.bf16.msra.mxu0 0
    %2837 = vmatprep.subr.bf16.mxu0 0
    %2838 = vmatpush2.bf16.msra.mxu0 0
    %2839 = vmatprep.subr.bf16.mxu0 0
    %2840 = vmatpush2.bf16.msra.mxu0 0
    %2841 = vmatprep.subr.bf16.mxu0 0
    %2842 = vmatpush2.bf16.msra.mxu0 0
    %2843 = vmatprep.subr.bf16.mxu0 0
    %2844 = vmatpush2.bf16.msra.mxu0 0
    %2845 = vmatprep.subr.bf16.mxu0 0
    %2846 = vmatpush2.bf16.msra.mxu0 0
    %2847 = vmatprep.subr.bf16.mxu0 0
    %2848 = vmatpush2.bf16.msra.mxu0 0
    %2849 = vmatprep.subr.bf16.mxu0 0
    %2850 = vmatpush2.bf16.msra.mxu0 0
    %2851 = vmatprep.mubr.bf16.mxu0 0
    %2852 = vmatmul.mubr.bf16.gmra.mxu0 %v2712
    %v2853 = vpop.f32.mrf.mxu0
    %v2854 = vadd.f32 0.0, %v2853
    %v2855 = vpop.f32.mrf.mxu0
    %v2856 = vadd.f32 0.0, %v2855
    %v2857 = vpop.f32.mrf.mxu0
    %v2858 = vpop.f32.mrf.mxu0
    %2859 = vdwg.mxu0
    %2860 = vmatprep.subr.bf16.mxu0 %v523
    %2861 = vmatpush1.bf16.msra.mxu0 %v522
    %2862 = vmatprep.subr.bf16.mxu0 %v519
    %2863 = vmatpush1.bf16.msra.mxu0 %v518
    %2864 = vmatprep.subr.bf16.mxu0 %v515
    %2865 = vmatpush1.bf16.msra.mxu0 %v514
    %2866 = vmatprep.subr.bf16.mxu0 %v511
    %2867 = vmatpush1.bf16.msra.mxu0 %v510
    %2868 = vmatprep.subr.bf16.mxu0 %v507
    %2869 = vmatpush1.bf16.msra.mxu0 %v506
    %2870 = vmatprep.subr.bf16.mxu0 %v503
    %2871 = vmatpush1.bf16.msra.mxu0 %v502
    %2872 = vmatprep.subr.bf16.mxu0 %v499
    %2873 = vmatpush1.bf16.msra.mxu0 %v498
    %2874 = vmatprep.subr.bf16.mxu0 %v495
    %2875 = vmatpush1.bf16.msra.mxu0 %v494
    %2876 = vmatprep.subr.bf16.mxu0 0
    %2877 = vmatpush2.bf16.msra.mxu0 0
    %2878 = vmatprep.subr.bf16.mxu0 0
    %2879 = vmatpush2.bf16.msra.mxu0 0
    %2880 = vmatprep.subr.bf16.mxu0 0
    %2881 = vmatpush2.bf16.msra.mxu0 0
    %2882 = vmatprep.subr.bf16.mxu0 0
    %2883 = vmatpush2.bf16.msra.mxu0 0
    %2884 = vmatprep.subr.bf16.mxu0 0
    %2885 = vmatpush2.bf16.msra.mxu0 0
    %2886 = vmatprep.subr.bf16.mxu0 0
    %2887 = vmatpush2.bf16.msra.mxu0 0
    %2888 = vmatprep.subr.bf16.mxu0 0
    %2889 = vmatpush2.bf16.msra.mxu0 0
    %2890 = vmatprep.subr.bf16.mxu0 0
    %2891 = vmatpush2.bf16.msra.mxu0 0
    %2892 = vmatprep.mubr.bf16.mxu0 0
    %2893 = vmatmul.mubr.bf16.gmra.mxu0 %v2712
    %v2894 = vpop.f32.mrf.mxu0
    %v2895 = vadd.f32 0.0, %v2894
    %v2896 = vpop.f32.mrf.mxu0
    %v2897 = vadd.f32 0.0, %v2896
    %v2898 = vpop.f32.mrf.mxu0
    %v2899 = vpop.f32.mrf.mxu0
    %2900 = vdwg.mxu0
    %v2901 = vadd.f32 %v2813, %v2854
    %v2902 = vadd.f32 %v2901, %v267
    %v2903 = vsel %vm640, %v2902, -inf
    %2904 = vmax.xlane.f32.xlu0 %v2903
    %v2905 = vpop.xlane.xlu0 %2904
    %v2906 = vsub.f32 %v2902, %v2905
    %v2907 = vmul.f32 %v2906, 1.442695
    %v2908 = vpow.pop %v2907
    %v2909 = vsel %vm640, %v2908, 0.0
    %2910 = vadd.xlane.f32.xlu0 %v2909
    %v2911 = vpop.xlane.xlu0 %2910
    %v2912 = vrcp.pop %v2911
    %v2913 = vmul.f32 %v2908, %v2912
    %v2914 = vpack.c.bf16 %v2913, %v2913
    %2915 = vmatprep.subr.bf16.mxu0 0
    %2916 = vmatpush1.bf16.msra.mxu0 %v692
    %2917 = vmatprep.subr.bf16.mxu0 0
    %2918 = vmatpush1.bf16.msra.mxu0 %v691
    %2919 = vmatprep.subr.bf16.mxu0 0
    %2920 = vmatpush1.bf16.msra.mxu0 %v690
    %2921 = vmatprep.subr.bf16.mxu0 0
    %2922 = vmatpush1.bf16.msra.mxu0 %v689
    %2923 = vmatprep.subr.bf16.mxu0 0
    %2924 = vmatpush1.bf16.msra.mxu0 %v688
    %2925 = vmatprep.subr.bf16.mxu0 0
    %2926 = vmatpush1.bf16.msra.mxu0 %v687
    %2927 = vmatprep.subr.bf16.mxu0 0
    %2928 = vmatpush1.bf16.msra.mxu0 %v686
    %2929 = vmatprep.subr.bf16.mxu0 0
    %2930 = vmatpush1.bf16.msra.mxu0 %v685
    %2931 = vmatprep.subr.bf16.mxu0 0
    %2932 = vmatpush2.bf16.msra.mxu0 0
    %2933 = vmatprep.subr.bf16.mxu0 0
    %2934 = vmatpush2.bf16.msra.mxu0 0
    %2935 = vmatprep.subr.bf16.mxu0 0
    %2936 = vmatpush2.bf16.msra.mxu0 0
    %2937 = vmatprep.subr.bf16.mxu0 0
    %2938 = vmatpush2.bf16.msra.mxu0 0
    %2939 = vmatprep.subr.bf16.mxu0 0
    %2940 = vmatpush2.bf16.msra.mxu0 0
    %2941 = vmatprep.subr.bf16.mxu0 0
    %2942 = vmatpush2.bf16.msra.mxu0 0
    %2943 = vmatprep.subr.bf16.mxu0 0
    %2944 = vmatpush2.bf16.msra.mxu0 0
    %2945 = vmatprep.subr.bf16.mxu0 0
    %2946 = vmatpush2.bf16.msra.mxu0 0
    %2947 = vmatprep.mubr.bf16.mxu0 0
    %2948 = vmatmul.mubr.bf16.gmra.mxu0 %v2914
    %v2949 = vpop.f32.mrf.mxu0
    %v2950 = vadd.f32 0.0, %v2949
    %v2951 = vpop.f32.mrf.mxu0
    %v2952 = vpop.f32.mrf.mxu0
    %v2953 = vpop.f32.mrf.mxu0
    %2954 = vdwg.mxu0
    %v2955 = vpack.c.bf16 %v2950, %v2950
    %2956 = vmatprep.subr.bf16.mxu0 0
    %2957 = vmatpush1.bf16.msra.mxu0 %v781
    %2958 = vmatprep.subr.bf16.mxu0 0
    %2959 = vmatpush1.bf16.msra.mxu0 %v780
    %2960 = vmatprep.subr.bf16.mxu0 0
    %2961 = vmatpush1.bf16.msra.mxu0 %v779
    %2962 = vmatprep.subr.bf16.mxu0 0
    %2963 = vmatpush1.bf16.msra.mxu0 %v778
    %2964 = vmatprep.subr.bf16.mxu0 0
    %2965 = vmatpush1.bf16.msra.mxu0 %v777
    %2966 = vmatprep.subr.bf16.mxu0 0
    %2967 = vmatpush1.bf16.msra.mxu0 %v776
    %2968 = vmatprep.subr.bf16.mxu0 0
    %2969 = vmatpush1.bf16.msra.mxu0 %v775
    %2970 = vmatprep.subr.bf16.mxu0 0
    %2971 = vmatpush1.bf16.msra.mxu0 %v774
    %2972 = vmatprep.subr.bf16.mxu0 0
    %2973 = vmatpush2.bf16.msra.mxu0 0
    %2974 = vmatprep.subr.bf16.mxu0 0
    %2975 = vmatpush2.bf16.msra.mxu0 0
    %2976 = vmatprep.subr.bf16.mxu0 0
    %2977 = vmatpush2.bf16.msra.mxu0 0
    %2978 = vmatprep.subr.bf16.mxu0 0
    %2979 = vmatpush2.bf16.msra.mxu0 0
    %2980 = vmatprep.subr.bf16.mxu0 0
    %2981 = vmatpush2.bf16.msra.mxu0 0
    %2982 = vmatprep.subr.bf16.mxu0 0
    %2983 = vmatpush2.bf16.msra.mxu0 0
    %2984 = vmatprep.subr.bf16.mxu0 0
    %2985 = vmatpush2.bf16.msra.mxu0 0
    %2986 = vmatprep.subr.bf16.mxu0 0
    %2987 = vmatpush2.bf16.msra.mxu0 0
    %2988 = vmatprep.mubr.bf16.mxu0 0
    %2989 = vmatmul.mubr.bf16.gmra.mxu0 %v2955
    %v2990 = vpop.f32.mrf.mxu0
    %v2991 = vadd.f32 0.0, %v2990
    %v2992 = vpop.f32.mrf.mxu0
    %v2993 = vpop.f32.mrf.mxu0
    %v2994 = vpop.f32.mrf.mxu0
    %2995 = vdwg.mxu0
    %v2996 = vadd.f32 %v2815, %v2991
    %v2997 = vadd.f32 %v2996, %v268
    %v2998 = vmax.f32 %v2997, 0.0
    %v2999 = vpack.c.bf16 %v2998, %v2998
    %3000 = vmatprep.subr.bf16.mxu0 %v936
    %3001 = vmatpush1.bf16.msra.mxu0 %v935
    %3002 = vmatprep.subr.bf16.mxu0 %v933
    %3003 = vmatpush1.bf16.msra.mxu0 %v932
    %3004 = vmatprep.subr.bf16.mxu0 %v930
    %3005 = vmatpush1.bf16.msra.mxu0 %v929
    %3006 = vmatprep.subr.bf16.mxu0 %v927
    %3007 = vmatpush1.bf16.msra.mxu0 %v926
    %3008 = vmatprep.subr.bf16.mxu0 %v924
    %3009 = vmatpush1.bf16.msra.mxu0 %v923
    %3010 = vmatprep.subr.bf16.mxu0 %v921
    %3011 = vmatpush1.bf16.msra.mxu0 %v920
    %3012 = vmatprep.subr.bf16.mxu0 %v918
    %3013 = vmatpush1.bf16.msra.mxu0 %v917
    %3014 = vmatprep.subr.bf16.mxu0 %v915
    %3015 = vmatpush1.bf16.msra.mxu0 %v914
    %3016 = vmatprep.subr.bf16.mxu0 0
    %3017 = vmatpush2.bf16.msra.mxu0 0
    %3018 = vmatprep.subr.bf16.mxu0 0
    %3019 = vmatpush2.bf16.msra.mxu0 0
    %3020 = vmatprep.subr.bf16.mxu0 0
    %3021 = vmatpush2.bf16.msra.mxu0 0
    %3022 = vmatprep.subr.bf16.mxu0 0
    %3023 = vmatpush2.bf16.msra.mxu0 0
    %3024 = vmatprep.subr.bf16.mxu0 0
    %3025 = vmatpush2.bf16.msra.mxu0 0
    %3026 = vmatprep.subr.bf16.mxu0 0
    %3027 = vmatpush2.bf16.msra.mxu0 0
    %3028 = vmatprep.subr.bf16.mxu0 0
    %3029 = vmatpush2.bf16.msra.mxu0 0
    %3030 = vmatprep.subr.bf16.mxu0 0
    %3031 = vmatpush2.bf16.msra.mxu0 0
    %3032 = vmatprep.mubr.bf16.mxu0 0
    %3033 = vmatmul.mubr.bf16.gmra.mxu0 %v2999
    %v3034 = vpop.f32.mrf.mxu0
    %v3035 = vadd.f32 %v966, %v3034
    %v3036 = vpop.f32.mrf.mxu0
    %v3037 = vadd.f32 %v970, %v3036
    %v3038 = vpop.f32.mrf.mxu0
    %v3039 = vpop.f32.mrf.mxu0
    %3040 = vdwg.mxu0
    %3041 = vmatprep.subr.bf16.mxu0 0
    %3042 = vmatpush1.bf16.msra.mxu0 %v937
    %3043 = vmatprep.subr.bf16.mxu0 0
    %3044 = vmatpush1.bf16.msra.mxu0 %v934
    %3045 = vmatprep.subr.bf16.mxu0 0
    %3046 = vmatpush1.bf16.msra.mxu0 %v931
    %3047 = vmatprep.subr.bf16.mxu0 0
    %3048 = vmatpush1.bf16.msra.mxu0 %v928
    %3049 = vmatprep.subr.bf16.mxu0 0
    %3050 = vmatpush1.bf16.msra.mxu0 %v925
    %3051 = vmatprep.subr.bf16.mxu0 0
    %3052 = vmatpush1.bf16.msra.mxu0 %v922
    %3053 = vmatprep.subr.bf16.mxu0 0
    %3054 = vmatpush1.bf16.msra.mxu0 %v919
    %3055 = vmatprep.subr.bf16.mxu0 0
    %3056 = vmatpush1.bf16.msra.mxu0 %v916
    %3057 = vmatprep.subr.bf16.mxu0 0
    %3058 = vmatpush2.bf16.msra.mxu0 0
    %3059 = vmatprep.subr.bf16.mxu0 0
    %3060 = vmatpush2.bf16.msra.mxu0 0
    %3061 = vmatprep.subr.bf16.mxu0 0
    %3062 = vmatpush2.bf16.msra.mxu0 0
    %3063 = vmatprep.subr.bf16.mxu0 0
    %3064 = vmatpush2.bf16.msra.mxu0 0
    %3065 = vmatprep.subr.bf16.mxu0 0
    %3066 = vmatpush2.bf16.msra.mxu0 0
    %3067 = vmatprep.subr.bf16.mxu0 0
    %3068 = vmatpush2.bf16.msra.mxu0 0
    %3069 = vmatprep.subr.bf16.mxu0 0
    %3070 = vmatpush2.bf16.msra.mxu0 0
    %3071 = vmatprep.subr.bf16.mxu0 0
    %3072 = vmatpush2.bf16.msra.mxu0 0
    %3073 = vmatprep.mubr.bf16.mxu0 0
    %3074 = vmatmul.mubr.bf16.gmra.mxu0 %v2999
    %v3075 = vpop.f32.mrf.mxu0
    %v3076 = vadd.f32 %v974, %v3075
    %v3077 = vpop.f32.mrf.mxu0
    %v3078 = vpop.f32.mrf.mxu0
    %v3079 = vpop.f32.mrf.mxu0
    %3080 = vdwg.mxu0
    %v3081 = vadd.f32 %v2856, %v1063
    %v3082 = vadd.f32 %v2895, %v1067
    %v3083 = vadd.f32 %v2897, %v1071
    %v3084 = vadd.f32 %v3035, %v3081
    %v3085 = vxor.u32 %v3084, 2147483648
    %v3086 = vmul.f32 %v3085, 1.442695
    %v3087 = vpow.pop %v3086
    %v3088 = vadd.f32 %v3087, 1.0
    %v3089 = vrcp.pop %v3088
    %v3090 = vmul.f32 1.0, %v3089
    %v3091 = vadd.f32 %v3037, %v3082
    %v3092 = vxor.u32 %v3091, 2147483648
    %v3093 = vmul.f32 %v3092, 1.442695
    %v3094 = vpow.pop %v3093
    %v3095 = vadd.f32 %v3094, 1.0
    %v3096 = vrcp.pop %v3095
    %v3097 = vmul.f32 1.0, %v3096
    %v3098 = vmul.f32 %v3090, %v3083
    %v3099 = vadd.f32 %v3076, %v3098
    %v3100 = vtanh.pop %v3099
    %v3101 = vsub.f32 1.0, %v3097
    %v3102 = vmul.f32 %v3101, %v3100
    %v3103 = vmul.f32 %v3097, %v2711
    %v3104 = vadd.f32 %v3102, %v3103
    %v3105 = vpack.c.bf16 %v3104, %v3104
    %3106 = vmatprep.subr.bf16.mxu0 0
    %3107 = vmatpush1.bf16.msra.mxu0 %v1139
    %3108 = vmatprep.subr.bf16.mxu0 0
    %3109 = vmatpush1.bf16.msra.mxu0 %v1138
    %3110 = vmatprep.subr.bf16.mxu0 0
    %3111 = vmatpush1.bf16.msra.mxu0 %v1137
    %3112 = vmatprep.subr.bf16.mxu0 0
    %3113 = vmatpush1.bf16.msra.mxu0 %v1136
    %3114 = vmatprep.subr.bf16.mxu0 0
    %3115 = vmatpush1.bf16.msra.mxu0 %v1135
    %3116 = vmatprep.subr.bf16.mxu0 0
    %3117 = vmatpush1.bf16.msra.mxu0 %v1134
    %3118 = vmatprep.subr.bf16.mxu0 0
    %3119 = vmatpush1.bf16.msra.mxu0 %v1133
    %3120 = vmatprep.subr.bf16.mxu0 0
    %3121 = vmatpush1.bf16.msra.mxu0 %v1132
    %3122 = vmatprep.subr.bf16.mxu0 0
    %3123 = vmatpush2.bf16.msra.mxu0 0
    %3124 = vmatprep.subr.bf16.mxu0 0
    %3125 = vmatpush2.bf16.msra.mxu0 0
    %3126 = vmatprep.subr.bf16.mxu0 0
    %3127 = vmatpush2.bf16.msra.mxu0 0
    %3128 = vmatprep.subr.bf16.mxu0 0
    %3129 = vmatpush2.bf16.msra.mxu0 0
    %3130 = vmatprep.subr.bf16.mxu0 0
    %3131 = vmatpush2.bf16.msra.mxu0 0
    %3132 = vmatprep.subr.bf16.mxu0 0
    %3133 = vmatpush2.bf16.msra.mxu0 0
    %3134 = vmatprep.subr.bf16.mxu0 0
    %3135 = vmatpush2.bf16.msra.mxu0 0
    %3136 = vmatprep.subr.bf16.mxu0 0
    %3137 = vmatpush2.bf16.msra.mxu0 0
    %3138 = vmatprep.mubr.bf16.mxu0 0
    %3139 = vmatmul.mubr.bf16.gmra.mxu0 %v3105
    %v3140 = vpop.f32.mrf.mxu0
    %v3141 = vadd.f32 %v271, %v3140
    %v3142 = vpop.f32.mrf.mxu0
    %v3143 = vpop.f32.mrf.mxu0
    %v3144 = vpop.f32.mrf.mxu0
    %3145 = vdwg.mxu0
    %v3146 = vsel %vm640, %v3141, -inf
    %3147 = vmax.xlane.f32.xlu0 %v3146
    %v3148 = vpop.xlane.xlu0 %3147
    %v3149 = vsub.f32 %v3141, %v3148
    %v3150 = vmul.f32 %v3149, 1.442695
    %v3151 = vpow.pop %v3150
    %v3152 = vsel %vm640, %v3151, 0.0
    %3153 = vadd.xlane.f32.xlu0 %v3152
    %v3154 = vpop.xlane.xlu0 %3153
    %v3155 = vlog2.pop %v3154
    %v3156 = vmul.f32 %v3155, 0.6931472
    %v3157 = vadd.f32 %v3148, %v3156
    %v3158 = vsub.f32 %v3141, %v3157
    %3159 = vst [vmem:[#allocation14 + $0x5] sm:$0x1] %v3158
    %3160 = vst [vmem:[#allocation14 + $0xd] sm:$0x1] %v3104
    %3161 = vst [vmem:[#allocation14 + $0x15] sm:$0x1] %v2913
    // Predicated region
    $region82: #{tpu_custom_call.1} parent=1 // pred_check
      _
    $region83: #{tpu_custom_call.1} parent=1 // pred_check_branch
      %3163 = sbr.rel (0) target = $region85
    $region84: #{tpu_custom_call.1} parent=1 // pred_region
      %s3165 = ssub.s32 384, 384
      %3166 = vsyncadd [#allocation4], %s3165
      %s3168 = sshll.u32 [#allocation14], 4
      %s3169 = int_to_ptr.vmem [resolvable:$true] %s3168
      %3171 = dma.vmem_to_hbm [thread:$0]  %s3169, 384, %s13, [#allocation4]
    $region85: #{tpu_custom_call.1} parent=1 // pred_fallthru
      _
    // Predicated region
    $region86: #{tpu_custom_call.1} parent=1 // pred_check
      _
    $region87: #{tpu_custom_call.1} parent=1 // pred_check_branch
      %3173 = sbr.rel (0) target = $region89
    $region88: #{tpu_custom_call.1} parent=1 // pred_region
      %3174 = dma.done [#allocation4], 384
    $region89: #{tpu_custom_call.1} parent=1 // pred_fallthru
      _
    %3175 = vsyncpa [#allocation3], 1
    %3176 = vsyncpa [#allocation6], 1
    %3177 = vsyncpa [#allocation9], 1
    %3178 = vsyncpa [#allocation12], 1
    %3179 = vsyncpa [#allocation4], 1

</llo_original>
